<compile_context>
chip_gen: v5e
topology: v5e:2x2
jax: 0.10.0
libtpu: 0.0.40
codegen_flags: <defaults>
</compile_context>

<pallas_src>
import math

import jax
import jax.numpy as jnp
from jax.experimental import pallas as pl
from jax.experimental.pallas import tpu as pltpu


# ----------------------------------------------------------------------------
# Model config
# ----------------------------------------------------------------------------
VOCAB = 100
MAX_POS = 16
HIDDEN = 128
HEADS = 2
HEAD_DIM = HIDDEN // HEADS
FFN = 256
LAYERS = 2
ROBERTA_OUT = 1024       # roberta classifier num_labels=1024 (per the module)
FC1_OUT = 512
NUM_LABELS = 6
NUM_LABELS_PAD = 128     # lane-dense padded output width (zero-padded fc2)
W_DTYPE = jnp.bfloat16   # dense-weight storage dtype (f32 accumulation in-kernel)


# ----------------------------------------------------------------------------
# Fused forward kernel (everything after the embedding gather)
# ----------------------------------------------------------------------------
def _fused_forward_kernel(
    x_ref, mask_ref,
    emb_ln_g_ref, emb_ln_b_ref,
    qkv_w_ref, qkv_b_ref, o_w_ref, o_b_ref,
    ln1_g_ref, ln1_b_ref,
    i_w_ref, i_b_ref, f_w_ref, f_b_ref,
    ln2_g_ref, ln2_b_ref,
    cls_dense_w_ref, cls_dense_b_ref,
    cls_out_w_ref, cls_out_b_ref,
    fc1_w_ref, fc1_b_ref, fc2_w_ref, fc2_b_ref,
    out_ref,
):
    def mm(x, w, b):
        # bf16 MXU matmul with f32 accumulation; bias add in f32.
        return jnp.dot(x.astype(w.dtype), w,
                       preferred_element_type=jnp.float32) + b

    def layernorm(x, g, b):
        mu = jnp.mean(x, axis=-1, keepdims=True)
        var = jnp.mean(jnp.square(x - mu), axis=-1, keepdims=True)
        return (x - mu) * jax.lax.rsqrt(var + 1e-5) * g + b

    def leaky(x):
        return jnp.where(x >= 0, x, 0.1 * x)   # negative_slope=0.1 (per module)

    def gelu(x):
        # TODO(synk): HF RoBERTa uses exact erf-GELU; tanh approximation here.
        c = math.sqrt(2.0 / math.pi)
        return 0.5 * x * (1.0 + jnp.tanh(c * (x + 0.044715 * x * x * x)))

    x = x_ref[0].astype(jnp.float32)            # (S, HIDDEN)
    mask_add = mask_ref[0].astype(jnp.float32)  # (1, S) additive mask

    # Embedding layernorm
    x = layernorm(x, emb_ln_g_ref[...], emb_ln_b_ref[...])

    scale = 1.0 / math.sqrt(HEAD_DIM)
    for l in range(LAYERS):
        # ---- fused QKV projection: one (S,H) x (H,3H) matmul ----
        qkv = mm(x, qkv_w_ref[l], qkv_b_ref[l])              # (S, 3H) f32

        # ---- multi-head attention, fused with the output projection ----
        attn_out = o_b_ref[l]                                 # (1, H) f32
        for h in range(HEADS):
            qs = qkv[:, h * HEAD_DIM:(h + 1) * HEAD_DIM]                      # (S, Dh)
            ks = qkv[:, HIDDEN + h * HEAD_DIM:HIDDEN + (h + 1) * HEAD_DIM]    # (S, Dh)
            vs = qkv[:, 2 * HIDDEN + h * HEAD_DIM:2 * HIDDEN + (h + 1) * HEAD_DIM]
            s = jax.lax.dot_general(qs, ks, (((1,), (1,)), ((), ())),
                                    preferred_element_type=jnp.float32)       # (S, S)
            s = s * scale + mask_add
            s = s - jnp.max(s, axis=-1, keepdims=True)
            p = jnp.exp(s)
            p = p * pl.reciprocal(jnp.sum(p, axis=-1, keepdims=True), approx=True)
            ctx = jnp.dot(p, vs, preferred_element_type=jnp.float32)          # (S, Dh)
            # fold the head's context directly into the output projection
            ow_h = o_w_ref[l, h * HEAD_DIM:(h + 1) * HEAD_DIM, :]             # (Dh, H)
            attn_out = attn_out + jnp.dot(ctx.astype(ow_h.dtype), ow_h,
                                          preferred_element_type=jnp.float32)
        x = layernorm(x + attn_out, ln1_g_ref[l], ln1_b_ref[l])

        # ---- fused FFN + residual + layernorm ----
        ffn = gelu(mm(x, i_w_ref[l], i_b_ref[l]))
        ffn = mm(ffn, f_w_ref[l], f_b_ref[l])
        x = layernorm(x + ffn, ln2_g_ref[l], ln2_b_ref[l])

    # ---- fused classification heads on the <s> (first) token ----
    cls = x[0:1, :]                                            # (1, HIDDEN)
    h = jnp.tanh(mm(cls, cls_dense_w_ref[...], cls_dense_b_ref[...]))
    roberta_logits = mm(h, cls_out_w_ref[...], cls_out_b_ref[...])   # (1, 1024)
    y = leaky(roberta_logits)                                  # leaky_relu(outputs)
    y = leaky(mm(y, fc1_w_ref[...], fc1_b_ref[...]))           # (1, 512)
    y = mm(y, fc2_w_ref[...], fc2_b_ref[...])                  # (1, 128) zero-padded
    out_ref[0] = y.astype(out_ref.dtype)                       # full-lane unmasked store


# index-map helpers (weights are grid-invariant; activations index by batch)
def _rep2(b):
    return (0, 0)


def _rep3(b):
    return (0, 0, 0)


def _per_batch(b):
    return (b, 0, 0)


# ----------------------------------------------------------------------------
# Deterministic parameter init (stacked per-layer weights, bf16 dense weights)
# ----------------------------------------------------------------------------
def init_params(key):
    keys = iter(jax.random.split(key, 32))

    def dense(k, fan_in, fan_out):
        w = (jax.random.normal(k, (fan_in, fan_out), jnp.float32) * 0.02).astype(W_DTYPE)
        b = jnp.zeros((1, fan_out), jnp.float32)
        return w, b

    p = {}
    p["word_emb"] = jax.random.normal(next(keys), (VOCAB, HIDDEN), jnp.float32) * 0.02
    p["pos_emb"] = jax.random.normal(next(keys), (MAX_POS, HIDDEN), jnp.float32) * 0.02
    p["type_emb"] = jax.random.normal(next(keys), (1, HIDDEN), jnp.float32) * 0.02
    p["emb_ln_g"] = jnp.ones((1, HIDDEN), jnp.float32)
    p["emb_ln_b"] = jnp.zeros((1, HIDDEN), jnp.float32)

    qkv_w, qkv_b, o_w, o_b = [], [], [], []
    ln1_g, ln1_b, i_w, i_b, f_w, f_b, ln2_g, ln2_b = [], [], [], [], [], [], [], []
    for _ in range(LAYERS):
        qw, qb = dense(next(keys), HIDDEN, HIDDEN)
        kw, kb = dense(next(keys), HIDDEN, HIDDEN)
        vw, vb = dense(next(keys), HIDDEN, HIDDEN)
        qkv_w.append(jnp.concatenate([qw, kw, vw], axis=1))    # (H, 3H)
        qkv_b.append(jnp.concatenate([qb, kb, vb], axis=1))    # (1, 3H)
        ow, ob = dense(next(keys), HIDDEN, HIDDEN)
        o_w.append(ow); o_b.append(ob)
        ln1_g.append(jnp.ones((1, HIDDEN), jnp.float32))
        ln1_b.append(jnp.zeros((1, HIDDEN), jnp.float32))
        iw, ib = dense(next(keys), HIDDEN, FFN)
        i_w.append(iw); i_b.append(ib)
        fw, fb = dense(next(keys), FFN, HIDDEN)
        f_w.append(fw); f_b.append(fb)
        ln2_g.append(jnp.ones((1, HIDDEN), jnp.float32))
        ln2_b.append(jnp.zeros((1, HIDDEN), jnp.float32))

    p["qkv_w"] = jnp.stack(qkv_w); p["qkv_b"] = jnp.stack(qkv_b)
    p["o_w"] = jnp.stack(o_w);     p["o_b"] = jnp.stack(o_b)
    p["ln1_g"] = jnp.stack(ln1_g); p["ln1_b"] = jnp.stack(ln1_b)
    p["i_w"] = jnp.stack(i_w);     p["i_b"] = jnp.stack(i_b)
    p["f_w"] = jnp.stack(f_w);     p["f_b"] = jnp.stack(f_b)
    p["ln2_g"] = jnp.stack(ln2_g); p["ln2_b"] = jnp.stack(ln2_b)

    # RobertaClassificationHead: dense(H->H)+tanh, out_proj(H->1024)
    p["cls_dense_w"], p["cls_dense_b"] = dense(next(keys), HIDDEN, HIDDEN)
    p["cls_out_w"], p["cls_out_b"] = dense(next(keys), HIDDEN, ROBERTA_OUT)
    # Custom head
    p["fc1_w"], p["fc1_b"] = dense(next(keys), ROBERTA_OUT, FC1_OUT)
    fc2_w, fc2_b = dense(next(keys), FC1_OUT, NUM_LABELS)
    # Zero-pad fc2 to 128 output columns so the kernel's final store is a full,
    # unmasked 128-lane vst; padded columns are never observed (sliced off).
    p["fc2_w"] = jnp.concatenate(
        [fc2_w, jnp.zeros((FC1_OUT, NUM_LABELS_PAD - NUM_LABELS), W_DTYPE)], axis=1)
    p["fc2_b"] = jnp.concatenate(
        [fc2_b, jnp.zeros((1, NUM_LABELS_PAD - NUM_LABELS), jnp.float32)], axis=1)
    return p


# ----------------------------------------------------------------------------
# Forward pass: embedding gather (JAX glue) + one fused Pallas kernel
# ----------------------------------------------------------------------------
def forward(params, input_ids, attention_mask):
    B, S = input_ids.shape

    mask_i = attention_mask.astype(jnp.int32)
    mask_f = attention_mask.astype(jnp.float32)
    # RoBERTa position ids: padding_idx=1, valid tokens start at 2.
    pos_ids = jnp.cumsum(mask_i, axis=1) * mask_i + 1

    x_emb = (jnp.take(params["word_emb"], input_ids, axis=0)
             + jnp.take(params["pos_emb"], pos_ids, axis=0)
             + params["type_emb"][None, :, :])                  # (B, S, H) f32
    mask_add = ((1.0 - mask_f) * -1e9).reshape(B, 1, S)         # (B, 1, S) f32

    out = pl.pallas_call(
        _fused_forward_kernel,
        out_shape=jax.ShapeDtypeStruct((B, 1, NUM_LABELS_PAD), jnp.float32),
        grid=(B,),
        in_specs=[
            pl.BlockSpec((1, S, HIDDEN), _per_batch),            # x_emb
            pl.BlockSpec((1, 1, S), _per_batch),                 # mask_add
            pl.BlockSpec((1, HIDDEN), _rep2),                    # emb_ln_g
            pl.BlockSpec((1, HIDDEN), _rep2),                    # emb_ln_b
            pl.BlockSpec((LAYERS, HIDDEN, 3 * HIDDEN), _rep3),   # qkv_w
            pl.BlockSpec((LAYERS, 1, 3 * HIDDEN), _rep3),        # qkv_b
            pl.BlockSpec((LAYERS, HIDDEN, HIDDEN), _rep3),       # o_w
            pl.BlockSpec((LAYERS, 1, HIDDEN), _rep3),            # o_b
            pl.BlockSpec((LAYERS, 1, HIDDEN), _rep3),            # ln1_g
            pl.BlockSpec((LAYERS, 1, HIDDEN), _rep3),            # ln1_b
            pl.BlockSpec((LAYERS, HIDDEN, FFN), _rep3),          # i_w
            pl.BlockSpec((LAYERS, 1, FFN), _rep3),               # i_b
            pl.BlockSpec((LAYERS, FFN, HIDDEN), _rep3),          # f_w
            pl.BlockSpec((LAYERS, 1, HIDDEN), _rep3),            # f_b
            pl.BlockSpec((LAYERS, 1, HIDDEN), _rep3),            # ln2_g
            pl.BlockSpec((LAYERS, 1, HIDDEN), _rep3),            # ln2_b
            pl.BlockSpec((HIDDEN, HIDDEN), _rep2),               # cls_dense_w
            pl.BlockSpec((1, HIDDEN), _rep2),                    # cls_dense_b
            pl.BlockSpec((HIDDEN, ROBERTA_OUT), _rep2),          # cls_out_w
            pl.BlockSpec((1, ROBERTA_OUT), _rep2),               # cls_out_b
            pl.BlockSpec((ROBERTA_OUT, FC1_OUT), _rep2),         # fc1_w
            pl.BlockSpec((1, FC1_OUT), _rep2),                   # fc1_b
            pl.BlockSpec((FC1_OUT, NUM_LABELS_PAD), _rep2),      # fc2_w (padded)
            pl.BlockSpec((1, NUM_LABELS_PAD), _rep2),            # fc2_b (padded)
        ],
        out_specs=pl.BlockSpec((1, 1, NUM_LABELS_PAD), _per_batch),
        compiler_params=pltpu.CompilerParams(
            dimension_semantics=("parallel",),
            vmem_limit_bytes=32 * 1024 * 1024),
    )(
        x_emb, mask_add,
        params["emb_ln_g"], params["emb_ln_b"],
        params["qkv_w"], params["qkv_b"], params["o_w"], params["o_b"],
        params["ln1_g"], params["ln1_b"],
        params["i_w"], params["i_b"], params["f_w"], params["f_b"],
        params["ln2_g"], params["ln2_b"],
        params["cls_dense_w"], params["cls_dense_b"],
        params["cls_out_w"], params["cls_out_b"],
        params["fc1_w"], params["fc1_b"], params["fc2_w"], params["fc2_b"],
    )
    return out.reshape(B, NUM_LABELS_PAD)[:, :NUM_LABELS]


# ----------------------------------------------------------------------------
# Main
# ----------------------------------------------------------------------------
if __name__ == "__main__":
    key = jax.random.PRNGKey(0)
    k_ids, k_params = jax.random.split(key)

    B, S = 2, 8
    input_ids = jax.random.randint(k_ids, (B, S), 0, VOCAB, dtype=jnp.int32)
    attention_mask = jnp.ones((B, S), dtype=jnp.int32)
    attention_mask = attention_mask.at[1, 6:].set(0)   # pad tail of 2nd example

    params = init_params(k_params)

    out = jax.jit(forward)(params, input_ids, attention_mask)
    out = jax.block_until_ready(out)
    assert out.shape == (B, NUM_LABELS) and out.dtype == jnp.float32
    assert bool(jnp.all(jnp.isfinite(out)))
    print("KERNEL_OK")
</pallas_src>

<mosaic_0001>
module attributes {stable_mosaic.version = 11 : i64} {
  func.func @_fused_forward_kernel(%arg0: i32, %arg1: memref<1x8x128xf32, #tpu.memory_space<vmem>>, %arg2: memref<1x1x8xf32, #tpu.memory_space<vmem>>, %arg3: memref<1x128xf32, #tpu.memory_space<vmem>>, %arg4: memref<1x128xf32, #tpu.memory_space<vmem>>, %arg5: memref<2x128x384xbf16, #tpu.memory_space<vmem>>, %arg6: memref<2x1x384xf32, #tpu.memory_space<vmem>>, %arg7: memref<2x128x128xbf16, #tpu.memory_space<vmem>>, %arg8: memref<2x1x128xf32, #tpu.memory_space<vmem>>, %arg9: memref<2x1x128xf32, #tpu.memory_space<vmem>>, %arg10: memref<2x1x128xf32, #tpu.memory_space<vmem>>, %arg11: memref<2x128x256xbf16, #tpu.memory_space<vmem>>, %arg12: memref<2x1x256xf32, #tpu.memory_space<vmem>>, %arg13: memref<2x256x128xbf16, #tpu.memory_space<vmem>>, %arg14: memref<2x1x128xf32, #tpu.memory_space<vmem>>, %arg15: memref<2x1x128xf32, #tpu.memory_space<vmem>>, %arg16: memref<2x1x128xf32, #tpu.memory_space<vmem>>, %arg17: memref<128x128xbf16, #tpu.memory_space<vmem>>, %arg18: memref<1x128xf32, #tpu.memory_space<vmem>>, %arg19: memref<128x1024xbf16, #tpu.memory_space<vmem>>, %arg20: memref<1x1024xf32, #tpu.memory_space<vmem>>, %arg21: memref<1024x512xbf16, #tpu.memory_space<vmem>>, %arg22: memref<1x512xf32, #tpu.memory_space<vmem>>, %arg23: memref<512x128xbf16, #tpu.memory_space<vmem>>, %arg24: memref<1x128xf32, #tpu.memory_space<vmem>>, %arg25: memref<1x1x128xf32, #tpu.memory_space<vmem>>) attributes {dimension_semantics = [#tpu.dimension_semantics<parallel>], iteration_bounds = array<i64: 2>, scalar_prefetch = 0 : i64, scratch_operands = 0 : i64, tpu.core_type = #tpu.core_type<tc>, window_params = [{transform_indices = @transform_0, window_bounds = array<i64: 1, 8, 128>}, {transform_indices = @transform_1, window_bounds = array<i64: 1, 1, 8>}, {pipeline_mode = #tpu.pipeline_mode<synchronous>, transform_indices = @transform_2, window_bounds = array<i64: 1, 128>}, {pipeline_mode = #tpu.pipeline_mode<synchronous>, transform_indices = @transform_3, window_bounds = array<i64: 1, 128>}, {pipeline_mode = #tpu.pipeline_mode<synchronous>, transform_indices = @transform_4, window_bounds = array<i64: 2, 128, 384>}, {pipeline_mode = #tpu.pipeline_mode<synchronous>, transform_indices = @transform_5, window_bounds = array<i64: 2, 1, 384>}, {pipeline_mode = #tpu.pipeline_mode<synchronous>, transform_indices = @transform_6, window_bounds = array<i64: 2, 128, 128>}, {pipeline_mode = #tpu.pipeline_mode<synchronous>, transform_indices = @transform_7, window_bounds = array<i64: 2, 1, 128>}, {pipeline_mode = #tpu.pipeline_mode<synchronous>, transform_indices = @transform_8, window_bounds = array<i64: 2, 1, 128>}, {pipeline_mode = #tpu.pipeline_mode<synchronous>, transform_indices = @transform_9, window_bounds = array<i64: 2, 1, 128>}, {pipeline_mode = #tpu.pipeline_mode<synchronous>, transform_indices = @transform_10, window_bounds = array<i64: 2, 128, 256>}, {pipeline_mode = #tpu.pipeline_mode<synchronous>, transform_indices = @transform_11, window_bounds = array<i64: 2, 1, 256>}, {pipeline_mode = #tpu.pipeline_mode<synchronous>, transform_indices = @transform_12, window_bounds = array<i64: 2, 256, 128>}, {pipeline_mode = #tpu.pipeline_mode<synchronous>, transform_indices = @transform_13, window_bounds = array<i64: 2, 1, 128>}, {pipeline_mode = #tpu.pipeline_mode<synchronous>, transform_indices = @transform_14, window_bounds = array<i64: 2, 1, 128>}, {pipeline_mode = #tpu.pipeline_mode<synchronous>, transform_indices = @transform_15, window_bounds = array<i64: 2, 1, 128>}, {pipeline_mode = #tpu.pipeline_mode<synchronous>, transform_indices = @transform_16, window_bounds = array<i64: 128, 128>}, {pipeline_mode = #tpu.pipeline_mode<synchronous>, transform_indices = @transform_17, window_bounds = array<i64: 1, 128>}, {pipeline_mode = #tpu.pipeline_mode<synchronous>, transform_indices = @transform_18, window_bounds = array<i64: 128, 1024>}, {pipeline_mode = #tpu.pipeline_mode<synchronous>, transform_indices = @transform_19, window_bounds = array<i64: 1, 1024>}, {pipeline_mode = #tpu.pipeline_mode<synchronous>, transform_indices = @transform_20, window_bounds = array<i64: 1024, 512>}, {pipeline_mode = #tpu.pipeline_mode<synchronous>, transform_indices = @transform_21, window_bounds = array<i64: 1, 512>}, {pipeline_mode = #tpu.pipeline_mode<synchronous>, transform_indices = @transform_22, window_bounds = array<i64: 512, 128>}, {pipeline_mode = #tpu.pipeline_mode<synchronous>, transform_indices = @transform_23, window_bounds = array<i64: 1, 128>}, {transform_indices = @transform_24, window_bounds = array<i64: 1, 1, 128>}]} {
    %c0 = arith.constant 0 : index
    %c0_0 = arith.constant 0 : index
    %c0_1 = arith.constant 0 : index
    %0 = vector.load %arg1[%c0, %c0_0, %c0_1] : memref<1x8x128xf32, #tpu.memory_space<vmem>>, vector<1x8x128xf32>
    %1 = vector.shape_cast %0 : vector<1x8x128xf32> to vector<8x128xf32>
    %c0_2 = arith.constant 0 : index
    %c0_3 = arith.constant 0 : index
    %c0_4 = arith.constant 0 : index
    %2 = vector.load %arg2[%c0_2, %c0_3, %c0_4] : memref<1x1x8xf32, #tpu.memory_space<vmem>>, vector<1x1x8xf32>
    %3 = vector.shape_cast %2 : vector<1x1x8xf32> to vector<1x8xf32>
    %c0_5 = arith.constant 0 : index
    %c0_6 = arith.constant 0 : index
    %4 = vector.load %arg3[%c0_5, %c0_6] : memref<1x128xf32, #tpu.memory_space<vmem>>, vector<1x128xf32>
    %c0_7 = arith.constant 0 : index
    %c0_8 = arith.constant 0 : index
    %5 = vector.load %arg4[%c0_7, %c0_8] : memref<1x128xf32, #tpu.memory_space<vmem>>, vector<1x128xf32>
    %cst = arith.constant dense<0.000000e+00> : vector<8xf32>
    %6 = vector.multi_reduction <add>, %1, %cst [1] : vector<8x128xf32> to vector<8xf32>
    %7 = vector.shape_cast %6 : vector<8xf32> to vector<8x1xf32>
    %cst_9 = arith.constant 1.280000e+02 : f32
    %8 = vector.broadcast %cst_9 : f32 to vector<8x1xf32>
    %9 = arith.divf %7, %8 : vector<8x1xf32>
    %10 = vector.broadcast %9 : vector<8x1xf32> to vector<8x128xf32>
    %11 = arith.subf %1, %10 : vector<8x128xf32>
    %12 = arith.mulf %11, %11 : vector<8x128xf32>
    %cst_10 = arith.constant dense<0.000000e+00> : vector<8xf32>
    %13 = vector.multi_reduction <add>, %12, %cst_10 [1] : vector<8x128xf32> to vector<8xf32>
    %14 = vector.shape_cast %13 : vector<8xf32> to vector<8x1xf32>
    %cst_11 = arith.constant 1.280000e+02 : f32
    %15 = vector.broadcast %cst_11 : f32 to vector<8x1xf32>
    %16 = arith.divf %14, %15 : vector<8x1xf32>
    %17 = vector.broadcast %9 : vector<8x1xf32> to vector<8x128xf32>
    %18 = arith.subf %1, %17 : vector<8x128xf32>
    %cst_12 = arith.constant 9.99999974E-6 : f32
    %19 = vector.broadcast %cst_12 : f32 to vector<8x1xf32>
    %20 = arith.addf %16, %19 : vector<8x1xf32>
    %21 = math.rsqrt %20 : vector<8x1xf32>
    %22 = vector.broadcast %21 : vector<8x1xf32> to vector<8x128xf32>
    %23 = arith.mulf %18, %22 : vector<8x128xf32>
    %24 = vector.broadcast %4 : vector<1x128xf32> to vector<8x128xf32>
    %25 = arith.mulf %23, %24 : vector<8x128xf32>
    %26 = vector.broadcast %5 : vector<1x128xf32> to vector<8x128xf32>
    %27 = arith.addf %25, %26 : vector<8x128xf32>
    %c0_13 = arith.constant 0 : index
    %c0_14 = arith.constant 0 : index
    %c0_15 = arith.constant 0 : index
    %28 = vector.load %arg5[%c0_13, %c0_14, %c0_15] : memref<2x128x384xbf16, #tpu.memory_space<vmem>>, vector<1x128x384xbf16>
    %29 = vector.shape_cast %28 : vector<1x128x384xbf16> to vector<128x384xbf16>
    %c0_16 = arith.constant 0 : index
    %c0_17 = arith.constant 0 : index
    %c0_18 = arith.constant 0 : index
    %30 = vector.load %arg6[%c0_16, %c0_17, %c0_18] : memref<2x1x384xf32, #tpu.memory_space<vmem>>, vector<1x1x384xf32>
    %31 = vector.shape_cast %30 : vector<1x1x384xf32> to vector<1x384xf32>
    %32 = arith.truncf %27 : vector<8x128xf32> to vector<8x128xbf16>
    %cst_19 = arith.constant dense<0.000000e+00> : vector<8x384xf32>
    %33 = tpu.matmul %32, %29, %cst_19 {dimension_numbers = #tpu.dot_dimension_numbers<[1], [0], [0], [1], [0, 0, 1, 1], [], []>} : vector<8x128xbf16>, vector<128x384xbf16>, vector<8x384xf32> -> vector<8x384xf32>
    %34 = vector.broadcast %31 : vector<1x384xf32> to vector<8x384xf32>
    %35 = arith.addf %33, %34 : vector<8x384xf32>
    %c0_20 = arith.constant 0 : index
    %c0_21 = arith.constant 0 : index
    %c0_22 = arith.constant 0 : index
    %36 = vector.load %arg8[%c0_20, %c0_21, %c0_22] : memref<2x1x128xf32, #tpu.memory_space<vmem>>, vector<1x1x128xf32>
    %37 = vector.shape_cast %36 : vector<1x1x128xf32> to vector<1x128xf32>
    %38 = vector.extract_strided_slice %35 {offsets = [0, 0], sizes = [8, 64], strides = [1, 1]} : vector<8x384xf32> to vector<8x64xf32>
    %39 = vector.extract_strided_slice %35 {offsets = [0, 128], sizes = [8, 64], strides = [1, 1]} : vector<8x384xf32> to vector<8x64xf32>
    %40 = vector.extract_strided_slice %35 {offsets = [0, 256], sizes = [8, 64], strides = [1, 1]} : vector<8x384xf32> to vector<8x64xf32>
    %cst_23 = arith.constant dense<0.000000e+00> : vector<8x8xf32>
    %41 = tpu.matmul %38, %39, %cst_23 {dimension_numbers = #tpu.dot_dimension_numbers<[1], [1], [0], [0], [0, 0, 1, 0], [], []>} : vector<8x64xf32>, vector<8x64xf32>, vector<8x8xf32> -> vector<8x8xf32>
    %cst_24 = arith.constant 1.250000e-01 : f32
    %42 = vector.broadcast %cst_24 : f32 to vector<8x8xf32>
    %43 = arith.mulf %41, %42 : vector<8x8xf32>
    %44 = vector.broadcast %3 : vector<1x8xf32> to vector<8x8xf32>
    %45 = arith.addf %43, %44 : vector<8x8xf32>
    %cst_25 = arith.constant dense<0xFF800000> : vector<8xf32>
    %46 = vector.multi_reduction <maximumf>, %45, %cst_25 [1] : vector<8x8xf32> to vector<8xf32>
    %47 = vector.shape_cast %46 : vector<8xf32> to vector<8x1xf32>
    %48 = vector.broadcast %47 : vector<8x1xf32> to vector<8x8xf32>
    %49 = arith.subf %45, %48 : vector<8x8xf32>
    %50 = math.exp %49 : vector<8x8xf32>
    %cst_26 = arith.constant dense<0.000000e+00> : vector<8xf32>
    %51 = vector.multi_reduction <add>, %50, %cst_26 [1] : vector<8x8xf32> to vector<8xf32>
    %52 = vector.shape_cast %51 : vector<8xf32> to vector<8x1xf32>
    %53 = tpu.reciprocal %52 {approx = true} : vector<8x1xf32> -> vector<8x1xf32>
    %54 = vector.broadcast %53 : vector<8x1xf32> to vector<8x8xf32>
    %55 = arith.mulf %50, %54 : vector<8x8xf32>
    %cst_27 = arith.constant dense<0.000000e+00> : vector<8x64xf32>
    %56 = tpu.matmul %55, %40, %cst_27 {dimension_numbers = #tpu.dot_dimension_numbers<[1], [0], [0], [1], [0, 0, 1, 1], [], []>} : vector<8x8xf32>, vector<8x64xf32>, vector<8x64xf32> -> vector<8x64xf32>
    %c0_28 = arith.constant 0 : index
    %c0_29 = arith.constant 0 : index
    %c0_30 = arith.constant 0 : index
    %57 = vector.load %arg7[%c0_28, %c0_29, %c0_30] : memref<2x128x128xbf16, #tpu.memory_space<vmem>>, vector<1x64x128xbf16>
    %58 = vector.shape_cast %57 : vector<1x64x128xbf16> to vector<64x128xbf16>
    %59 = arith.truncf %56 : vector<8x64xf32> to vector<8x64xbf16>
    %cst_31 = arith.constant dense<0.000000e+00> : vector<8x128xf32>
    %60 = tpu.matmul %59, %58, %cst_31 {dimension_numbers = #tpu.dot_dimension_numbers<[1], [0], [0], [1], [0, 0, 1, 1], [], []>} : vector<8x64xbf16>, vector<64x128xbf16>, vector<8x128xf32> -> vector<8x128xf32>
    %61 = vector.broadcast %37 : vector<1x128xf32> to vector<8x128xf32>
    %62 = arith.addf %61, %60 : vector<8x128xf32>
    %63 = vector.extract_strided_slice %35 {offsets = [0, 64], sizes = [8, 64], strides = [1, 1]} : vector<8x384xf32> to vector<8x64xf32>
    %64 = vector.extract_strided_slice %35 {offsets = [0, 192], sizes = [8, 64], strides = [1, 1]} : vector<8x384xf32> to vector<8x64xf32>
    %65 = vector.extract_strided_slice %35 {offsets = [0, 320], sizes = [8, 64], strides = [1, 1]} : vector<8x384xf32> to vector<8x64xf32>
    %cst_32 = arith.constant dense<0.000000e+00> : vector<8x8xf32>
    %66 = tpu.matmul %63, %64, %cst_32 {dimension_numbers = #tpu.dot_dimension_numbers<[1], [1], [0], [0], [0, 0, 1, 0], [], []>} : vector<8x64xf32>, vector<8x64xf32>, vector<8x8xf32> -> vector<8x8xf32>
    %cst_33 = arith.constant 1.250000e-01 : f32
    %67 = vector.broadcast %cst_33 : f32 to vector<8x8xf32>
    %68 = arith.mulf %66, %67 : vector<8x8xf32>
    %69 = vector.broadcast %3 : vector<1x8xf32> to vector<8x8xf32>
    %70 = arith.addf %68, %69 : vector<8x8xf32>
    %cst_34 = arith.constant dense<0xFF800000> : vector<8xf32>
    %71 = vector.multi_reduction <maximumf>, %70, %cst_34 [1] : vector<8x8xf32> to vector<8xf32>
    %72 = vector.shape_cast %71 : vector<8xf32> to vector<8x1xf32>
    %73 = vector.broadcast %72 : vector<8x1xf32> to vector<8x8xf32>
    %74 = arith.subf %70, %73 : vector<8x8xf32>
    %75 = math.exp %74 : vector<8x8xf32>
    %cst_35 = arith.constant dense<0.000000e+00> : vector<8xf32>
    %76 = vector.multi_reduction <add>, %75, %cst_35 [1] : vector<8x8xf32> to vector<8xf32>
    %77 = vector.shape_cast %76 : vector<8xf32> to vector<8x1xf32>
    %78 = tpu.reciprocal %77 {approx = true} : vector<8x1xf32> -> vector<8x1xf32>
    %79 = vector.broadcast %78 : vector<8x1xf32> to vector<8x8xf32>
    %80 = arith.mulf %75, %79 : vector<8x8xf32>
    %cst_36 = arith.constant dense<0.000000e+00> : vector<8x64xf32>
    %81 = tpu.matmul %80, %65, %cst_36 {dimension_numbers = #tpu.dot_dimension_numbers<[1], [0], [0], [1], [0, 0, 1, 1], [], []>} : vector<8x8xf32>, vector<8x64xf32>, vector<8x64xf32> -> vector<8x64xf32>
    %c0_37 = arith.constant 0 : index
    %c64 = arith.constant 64 : index
    %c0_38 = arith.constant 0 : index
    %82 = vector.load %arg7[%c0_37, %c64, %c0_38] : memref<2x128x128xbf16, #tpu.memory_space<vmem>>, vector<1x64x128xbf16>
    %83 = vector.shape_cast %82 : vector<1x64x128xbf16> to vector<64x128xbf16>
    %84 = arith.truncf %81 : vector<8x64xf32> to vector<8x64xbf16>
    %cst_39 = arith.constant dense<0.000000e+00> : vector<8x128xf32>
    %85 = tpu.matmul %84, %83, %cst_39 {dimension_numbers = #tpu.dot_dimension_numbers<[1], [0], [0], [1], [0, 0, 1, 1], [], []>} : vector<8x64xbf16>, vector<64x128xbf16>, vector<8x128xf32> -> vector<8x128xf32>
    %86 = arith.addf %62, %85 : vector<8x128xf32>
    %87 = arith.addf %27, %86 : vector<8x128xf32>
    %c0_40 = arith.constant 0 : index
    %c0_41 = arith.constant 0 : index
    %c0_42 = arith.constant 0 : index
    %88 = vector.load %arg9[%c0_40, %c0_41, %c0_42] : memref<2x1x128xf32, #tpu.memory_space<vmem>>, vector<1x1x128xf32>
    %89 = vector.shape_cast %88 : vector<1x1x128xf32> to vector<1x128xf32>
    %c0_43 = arith.constant 0 : index
    %c0_44 = arith.constant 0 : index
    %c0_45 = arith.constant 0 : index
    %90 = vector.load %arg10[%c0_43, %c0_44, %c0_45] : memref<2x1x128xf32, #tpu.memory_space<vmem>>, vector<1x1x128xf32>
    %91 = vector.shape_cast %90 : vector<1x1x128xf32> to vector<1x128xf32>
    %cst_46 = arith.constant dense<0.000000e+00> : vector<8xf32>
    %92 = vector.multi_reduction <add>, %87, %cst_46 [1] : vector<8x128xf32> to vector<8xf32>
    %93 = vector.shape_cast %92 : vector<8xf32> to vector<8x1xf32>
    %cst_47 = arith.constant 1.280000e+02 : f32
    %94 = vector.broadcast %cst_47 : f32 to vector<8x1xf32>
    %95 = arith.divf %93, %94 : vector<8x1xf32>
    %96 = vector.broadcast %95 : vector<8x1xf32> to vector<8x128xf32>
    %97 = arith.subf %87, %96 : vector<8x128xf32>
    %98 = arith.mulf %97, %97 : vector<8x128xf32>
    %cst_48 = arith.constant dense<0.000000e+00> : vector<8xf32>
    %99 = vector.multi_reduction <add>, %98, %cst_48 [1] : vector<8x128xf32> to vector<8xf32>
    %100 = vector.shape_cast %99 : vector<8xf32> to vector<8x1xf32>
    %cst_49 = arith.constant 1.280000e+02 : f32
    %101 = vector.broadcast %cst_49 : f32 to vector<8x1xf32>
    %102 = arith.divf %100, %101 : vector<8x1xf32>
    %103 = vector.broadcast %95 : vector<8x1xf32> to vector<8x128xf32>
    %104 = arith.subf %87, %103 : vector<8x128xf32>
    %cst_50 = arith.constant 9.99999974E-6 : f32
    %105 = vector.broadcast %cst_50 : f32 to vector<8x1xf32>
    %106 = arith.addf %102, %105 : vector<8x1xf32>
    %107 = math.rsqrt %106 : vector<8x1xf32>
    %108 = vector.broadcast %107 : vector<8x1xf32> to vector<8x128xf32>
    %109 = arith.mulf %104, %108 : vector<8x128xf32>
    %110 = vector.broadcast %89 : vector<1x128xf32> to vector<8x128xf32>
    %111 = arith.mulf %109, %110 : vector<8x128xf32>
    %112 = vector.broadcast %91 : vector<1x128xf32> to vector<8x128xf32>
    %113 = arith.addf %111, %112 : vector<8x128xf32>
    %c0_51 = arith.constant 0 : index
    %c0_52 = arith.constant 0 : index
    %c0_53 = arith.constant 0 : index
    %114 = vector.load %arg11[%c0_51, %c0_52, %c0_53] : memref<2x128x256xbf16, #tpu.memory_space<vmem>>, vector<1x128x256xbf16>
    %115 = vector.shape_cast %114 : vector<1x128x256xbf16> to vector<128x256xbf16>
    %c0_54 = arith.constant 0 : index
    %c0_55 = arith.constant 0 : index
    %c0_56 = arith.constant 0 : index
    %116 = vector.load %arg12[%c0_54, %c0_55, %c0_56] : memref<2x1x256xf32, #tpu.memory_space<vmem>>, vector<1x1x256xf32>
    %117 = vector.shape_cast %116 : vector<1x1x256xf32> to vector<1x256xf32>
    %118 = arith.truncf %113 : vector<8x128xf32> to vector<8x128xbf16>
    %cst_57 = arith.constant dense<0.000000e+00> : vector<8x256xf32>
    %119 = tpu.matmul %118, %115, %cst_57 {dimension_numbers = #tpu.dot_dimension_numbers<[1], [0], [0], [1], [0, 0, 1, 1], [], []>} : vector<8x128xbf16>, vector<128x256xbf16>, vector<8x256xf32> -> vector<8x256xf32>
    %120 = vector.broadcast %117 : vector<1x256xf32> to vector<8x256xf32>
    %121 = arith.addf %119, %120 : vector<8x256xf32>
    %cst_58 = arith.constant 5.000000e-01 : f32
    %122 = vector.broadcast %cst_58 : f32 to vector<8x256xf32>
    %123 = arith.mulf %122, %121 : vector<8x256xf32>
    %cst_59 = arith.constant 4.471500e-02 : f32
    %124 = vector.broadcast %cst_59 : f32 to vector<8x256xf32>
    %125 = arith.mulf %124, %121 : vector<8x256xf32>
    %126 = arith.mulf %125, %121 : vector<8x256xf32>
    %127 = arith.mulf %126, %121 : vector<8x256xf32>
    %128 = arith.addf %121, %127 : vector<8x256xf32>
    %cst_60 = arith.constant 0.797884583 : f32
    %129 = vector.broadcast %cst_60 : f32 to vector<8x256xf32>
    %130 = arith.mulf %129, %128 : vector<8x256xf32>
    %131 = math.tanh %130 : vector<8x256xf32>
    %cst_61 = arith.constant 1.000000e+00 : f32
    %132 = vector.broadcast %cst_61 : f32 to vector<8x256xf32>
    %133 = arith.addf %132, %131 : vector<8x256xf32>
    %134 = arith.mulf %123, %133 : vector<8x256xf32>
    %c0_62 = arith.constant 0 : index
    %c0_63 = arith.constant 0 : index
    %c0_64 = arith.constant 0 : index
    %135 = vector.load %arg13[%c0_62, %c0_63, %c0_64] : memref<2x256x128xbf16, #tpu.memory_space<vmem>>, vector<1x256x128xbf16>
    %136 = vector.shape_cast %135 : vector<1x256x128xbf16> to vector<256x128xbf16>
    %c0_65 = arith.constant 0 : index
    %c0_66 = arith.constant 0 : index
    %c0_67 = arith.constant 0 : index
    %137 = vector.load %arg14[%c0_65, %c0_66, %c0_67] : memref<2x1x128xf32, #tpu.memory_space<vmem>>, vector<1x1x128xf32>
    %138 = vector.shape_cast %137 : vector<1x1x128xf32> to vector<1x128xf32>
    %139 = arith.truncf %134 : vector<8x256xf32> to vector<8x256xbf16>
    %cst_68 = arith.constant dense<0.000000e+00> : vector<8x128xf32>
    %140 = tpu.matmul %139, %136, %cst_68 {dimension_numbers = #tpu.dot_dimension_numbers<[1], [0], [0], [1], [0, 0, 1, 1], [], []>} : vector<8x256xbf16>, vector<256x128xbf16>, vector<8x128xf32> -> vector<8x128xf32>
    %141 = vector.broadcast %138 : vector<1x128xf32> to vector<8x128xf32>
    %142 = arith.addf %140, %141 : vector<8x128xf32>
    %143 = arith.addf %113, %142 : vector<8x128xf32>
    %c0_69 = arith.constant 0 : index
    %c0_70 = arith.constant 0 : index
    %c0_71 = arith.constant 0 : index
    %144 = vector.load %arg15[%c0_69, %c0_70, %c0_71] : memref<2x1x128xf32, #tpu.memory_space<vmem>>, vector<1x1x128xf32>
    %145 = vector.shape_cast %144 : vector<1x1x128xf32> to vector<1x128xf32>
    %c0_72 = arith.constant 0 : index
    %c0_73 = arith.constant 0 : index
    %c0_74 = arith.constant 0 : index
    %146 = vector.load %arg16[%c0_72, %c0_73, %c0_74] : memref<2x1x128xf32, #tpu.memory_space<vmem>>, vector<1x1x128xf32>
    %147 = vector.shape_cast %146 : vector<1x1x128xf32> to vector<1x128xf32>
    %cst_75 = arith.constant dense<0.000000e+00> : vector<8xf32>
    %148 = vector.multi_reduction <add>, %143, %cst_75 [1] : vector<8x128xf32> to vector<8xf32>
    %149 = vector.shape_cast %148 : vector<8xf32> to vector<8x1xf32>
    %cst_76 = arith.constant 1.280000e+02 : f32
    %150 = vector.broadcast %cst_76 : f32 to vector<8x1xf32>
    %151 = arith.divf %149, %150 : vector<8x1xf32>
    %152 = vector.broadcast %151 : vector<8x1xf32> to vector<8x128xf32>
    %153 = arith.subf %143, %152 : vector<8x128xf32>
    %154 = arith.mulf %153, %153 : vector<8x128xf32>
    %cst_77 = arith.constant dense<0.000000e+00> : vector<8xf32>
    %155 = vector.multi_reduction <add>, %154, %cst_77 [1] : vector<8x128xf32> to vector<8xf32>
    %156 = vector.shape_cast %155 : vector<8xf32> to vector<8x1xf32>
    %cst_78 = arith.constant 1.280000e+02 : f32
    %157 = vector.broadcast %cst_78 : f32 to vector<8x1xf32>
    %158 = arith.divf %156, %157 : vector<8x1xf32>
    %159 = vector.broadcast %151 : vector<8x1xf32> to vector<8x128xf32>
    %160 = arith.subf %143, %159 : vector<8x128xf32>
    %cst_79 = arith.constant 9.99999974E-6 : f32
    %161 = vector.broadcast %cst_79 : f32 to vector<8x1xf32>
    %162 = arith.addf %158, %161 : vector<8x1xf32>
    %163 = math.rsqrt %162 : vector<8x1xf32>
    %164 = vector.broadcast %163 : vector<8x1xf32> to vector<8x128xf32>
    %165 = arith.mulf %160, %164 : vector<8x128xf32>
    %166 = vector.broadcast %145 : vector<1x128xf32> to vector<8x128xf32>
    %167 = arith.mulf %165, %166 : vector<8x128xf32>
    %168 = vector.broadcast %147 : vector<1x128xf32> to vector<8x128xf32>
    %169 = arith.addf %167, %168 : vector<8x128xf32>
    %c1 = arith.constant 1 : index
    %c0_80 = arith.constant 0 : index
    %c0_81 = arith.constant 0 : index
    %170 = vector.load %arg5[%c1, %c0_80, %c0_81] : memref<2x128x384xbf16, #tpu.memory_space<vmem>>, vector<1x128x384xbf16>
    %171 = vector.shape_cast %170 : vector<1x128x384xbf16> to vector<128x384xbf16>
    %c1_82 = arith.constant 1 : index
    %c0_83 = arith.constant 0 : index
    %c0_84 = arith.constant 0 : index
    %172 = vector.load %arg6[%c1_82, %c0_83, %c0_84] : memref<2x1x384xf32, #tpu.memory_space<vmem>>, vector<1x1x384xf32>
    %173 = vector.shape_cast %172 : vector<1x1x384xf32> to vector<1x384xf32>
    %174 = arith.truncf %169 : vector<8x128xf32> to vector<8x128xbf16>
    %cst_85 = arith.constant dense<0.000000e+00> : vector<8x384xf32>
    %175 = tpu.matmul %174, %171, %cst_85 {dimension_numbers = #tpu.dot_dimension_numbers<[1], [0], [0], [1], [0, 0, 1, 1], [], []>} : vector<8x128xbf16>, vector<128x384xbf16>, vector<8x384xf32> -> vector<8x384xf32>
    %176 = vector.broadcast %173 : vector<1x384xf32> to vector<8x384xf32>
    %177 = arith.addf %175, %176 : vector<8x384xf32>
    %c1_86 = arith.constant 1 : index
    %c0_87 = arith.constant 0 : index
    %c0_88 = arith.constant 0 : index
    %178 = vector.load %arg8[%c1_86, %c0_87, %c0_88] : memref<2x1x128xf32, #tpu.memory_space<vmem>>, vector<1x1x128xf32>
    %179 = vector.shape_cast %178 : vector<1x1x128xf32> to vector<1x128xf32>
    %180 = vector.extract_strided_slice %177 {offsets = [0, 0], sizes = [8, 64], strides = [1, 1]} : vector<8x384xf32> to vector<8x64xf32>
    %181 = vector.extract_strided_slice %177 {offsets = [0, 128], sizes = [8, 64], strides = [1, 1]} : vector<8x384xf32> to vector<8x64xf32>
    %182 = vector.extract_strided_slice %177 {offsets = [0, 256], sizes = [8, 64], strides = [1, 1]} : vector<8x384xf32> to vector<8x64xf32>
    %cst_89 = arith.constant dense<0.000000e+00> : vector<8x8xf32>
    %183 = tpu.matmul %180, %181, %cst_89 {dimension_numbers = #tpu.dot_dimension_numbers<[1], [1], [0], [0], [0, 0, 1, 0], [], []>} : vector<8x64xf32>, vector<8x64xf32>, vector<8x8xf32> -> vector<8x8xf32>
    %cst_90 = arith.constant 1.250000e-01 : f32
    %184 = vector.broadcast %cst_90 : f32 to vector<8x8xf32>
    %185 = arith.mulf %183, %184 : vector<8x8xf32>
    %186 = vector.broadcast %3 : vector<1x8xf32> to vector<8x8xf32>
    %187 = arith.addf %185, %186 : vector<8x8xf32>
    %cst_91 = arith.constant dense<0xFF800000> : vector<8xf32>
    %188 = vector.multi_reduction <maximumf>, %187, %cst_91 [1] : vector<8x8xf32> to vector<8xf32>
    %189 = vector.shape_cast %188 : vector<8xf32> to vector<8x1xf32>
    %190 = vector.broadcast %189 : vector<8x1xf32> to vector<8x8xf32>
    %191 = arith.subf %187, %190 : vector<8x8xf32>
    %192 = math.exp %191 : vector<8x8xf32>
    %cst_92 = arith.constant dense<0.000000e+00> : vector<8xf32>
    %193 = vector.multi_reduction <add>, %192, %cst_92 [1] : vector<8x8xf32> to vector<8xf32>
    %194 = vector.shape_cast %193 : vector<8xf32> to vector<8x1xf32>
    %195 = tpu.reciprocal %194 {approx = true} : vector<8x1xf32> -> vector<8x1xf32>
    %196 = vector.broadcast %195 : vector<8x1xf32> to vector<8x8xf32>
    %197 = arith.mulf %192, %196 : vector<8x8xf32>
    %cst_93 = arith.constant dense<0.000000e+00> : vector<8x64xf32>
    %198 = tpu.matmul %197, %182, %cst_93 {dimension_numbers = #tpu.dot_dimension_numbers<[1], [0], [0], [1], [0, 0, 1, 1], [], []>} : vector<8x8xf32>, vector<8x64xf32>, vector<8x64xf32> -> vector<8x64xf32>
    %c1_94 = arith.constant 1 : index
    %c0_95 = arith.constant 0 : index
    %c0_96 = arith.constant 0 : index
    %199 = vector.load %arg7[%c1_94, %c0_95, %c0_96] : memref<2x128x128xbf16, #tpu.memory_space<vmem>>, vector<1x64x128xbf16>
    %200 = vector.shape_cast %199 : vector<1x64x128xbf16> to vector<64x128xbf16>
    %201 = arith.truncf %198 : vector<8x64xf32> to vector<8x64xbf16>
    %cst_97 = arith.constant dense<0.000000e+00> : vector<8x128xf32>
    %202 = tpu.matmul %201, %200, %cst_97 {dimension_numbers = #tpu.dot_dimension_numbers<[1], [0], [0], [1], [0, 0, 1, 1], [], []>} : vector<8x64xbf16>, vector<64x128xbf16>, vector<8x128xf32> -> vector<8x128xf32>
    %203 = vector.broadcast %179 : vector<1x128xf32> to vector<8x128xf32>
    %204 = arith.addf %203, %202 : vector<8x128xf32>
    %205 = vector.extract_strided_slice %177 {offsets = [0, 64], sizes = [8, 64], strides = [1, 1]} : vector<8x384xf32> to vector<8x64xf32>
    %206 = vector.extract_strided_slice %177 {offsets = [0, 192], sizes = [8, 64], strides = [1, 1]} : vector<8x384xf32> to vector<8x64xf32>
    %207 = vector.extract_strided_slice %177 {offsets = [0, 320], sizes = [8, 64], strides = [1, 1]} : vector<8x384xf32> to vector<8x64xf32>
    %cst_98 = arith.constant dense<0.000000e+00> : vector<8x8xf32>
    %208 = tpu.matmul %205, %206, %cst_98 {dimension_numbers = #tpu.dot_dimension_numbers<[1], [1], [0], [0], [0, 0, 1, 0], [], []>} : vector<8x64xf32>, vector<8x64xf32>, vector<8x8xf32> -> vector<8x8xf32>
    %cst_99 = arith.constant 1.250000e-01 : f32
    %209 = vector.broadcast %cst_99 : f32 to vector<8x8xf32>
    %210 = arith.mulf %208, %209 : vector<8x8xf32>
    %211 = vector.broadcast %3 : vector<1x8xf32> to vector<8x8xf32>
    %212 = arith.addf %210, %211 : vector<8x8xf32>
    %cst_100 = arith.constant dense<0xFF800000> : vector<8xf32>
    %213 = vector.multi_reduction <maximumf>, %212, %cst_100 [1] : vector<8x8xf32> to vector<8xf32>
    %214 = vector.shape_cast %213 : vector<8xf32> to vector<8x1xf32>
    %215 = vector.broadcast %214 : vector<8x1xf32> to vector<8x8xf32>
    %216 = arith.subf %212, %215 : vector<8x8xf32>
    %217 = math.exp %216 : vector<8x8xf32>
    %cst_101 = arith.constant dense<0.000000e+00> : vector<8xf32>
    %218 = vector.multi_reduction <add>, %217, %cst_101 [1] : vector<8x8xf32> to vector<8xf32>
    %219 = vector.shape_cast %218 : vector<8xf32> to vector<8x1xf32>
    %220 = tpu.reciprocal %219 {approx = true} : vector<8x1xf32> -> vector<8x1xf32>
    %221 = vector.broadcast %220 : vector<8x1xf32> to vector<8x8xf32>
    %222 = arith.mulf %217, %221 : vector<8x8xf32>
    %cst_102 = arith.constant dense<0.000000e+00> : vector<8x64xf32>
    %223 = tpu.matmul %222, %207, %cst_102 {dimension_numbers = #tpu.dot_dimension_numbers<[1], [0], [0], [1], [0, 0, 1, 1], [], []>} : vector<8x8xf32>, vector<8x64xf32>, vector<8x64xf32> -> vector<8x64xf32>
    %c1_103 = arith.constant 1 : index
    %c64_104 = arith.constant 64 : index
    %c0_105 = arith.constant 0 : index
    %224 = vector.load %arg7[%c1_103, %c64_104, %c0_105] : memref<2x128x128xbf16, #tpu.memory_space<vmem>>, vector<1x64x128xbf16>
    %225 = vector.shape_cast %224 : vector<1x64x128xbf16> to vector<64x128xbf16>
    %226 = arith.truncf %223 : vector<8x64xf32> to vector<8x64xbf16>
    %cst_106 = arith.constant dense<0.000000e+00> : vector<8x128xf32>
    %227 = tpu.matmul %226, %225, %cst_106 {dimension_numbers = #tpu.dot_dimension_numbers<[1], [0], [0], [1], [0, 0, 1, 1], [], []>} : vector<8x64xbf16>, vector<64x128xbf16>, vector<8x128xf32> -> vector<8x128xf32>
    %228 = arith.addf %204, %227 : vector<8x128xf32>
    %229 = arith.addf %169, %228 : vector<8x128xf32>
    %c1_107 = arith.constant 1 : index
    %c0_108 = arith.constant 0 : index
    %c0_109 = arith.constant 0 : index
    %230 = vector.load %arg9[%c1_107, %c0_108, %c0_109] : memref<2x1x128xf32, #tpu.memory_space<vmem>>, vector<1x1x128xf32>
    %231 = vector.shape_cast %230 : vector<1x1x128xf32> to vector<1x128xf32>
    %c1_110 = arith.constant 1 : index
    %c0_111 = arith.constant 0 : index
    %c0_112 = arith.constant 0 : index
    %232 = vector.load %arg10[%c1_110, %c0_111, %c0_112] : memref<2x1x128xf32, #tpu.memory_space<vmem>>, vector<1x1x128xf32>
    %233 = vector.shape_cast %232 : vector<1x1x128xf32> to vector<1x128xf32>
    %cst_113 = arith.constant dense<0.000000e+00> : vector<8xf32>
    %234 = vector.multi_reduction <add>, %229, %cst_113 [1] : vector<8x128xf32> to vector<8xf32>
    %235 = vector.shape_cast %234 : vector<8xf32> to vector<8x1xf32>
    %cst_114 = arith.constant 1.280000e+02 : f32
    %236 = vector.broadcast %cst_114 : f32 to vector<8x1xf32>
    %237 = arith.divf %235, %236 : vector<8x1xf32>
    %238 = vector.broadcast %237 : vector<8x1xf32> to vector<8x128xf32>
    %239 = arith.subf %229, %238 : vector<8x128xf32>
    %240 = arith.mulf %239, %239 : vector<8x128xf32>
    %cst_115 = arith.constant dense<0.000000e+00> : vector<8xf32>
    %241 = vector.multi_reduction <add>, %240, %cst_115 [1] : vector<8x128xf32> to vector<8xf32>
    %242 = vector.shape_cast %241 : vector<8xf32> to vector<8x1xf32>
    %cst_116 = arith.constant 1.280000e+02 : f32
    %243 = vector.broadcast %cst_116 : f32 to vector<8x1xf32>
    %244 = arith.divf %242, %243 : vector<8x1xf32>
    %245 = vector.broadcast %237 : vector<8x1xf32> to vector<8x128xf32>
    %246 = arith.subf %229, %245 : vector<8x128xf32>
    %cst_117 = arith.constant 9.99999974E-6 : f32
    %247 = vector.broadcast %cst_117 : f32 to vector<8x1xf32>
    %248 = arith.addf %244, %247 : vector<8x1xf32>
    %249 = math.rsqrt %248 : vector<8x1xf32>
    %250 = vector.broadcast %249 : vector<8x1xf32> to vector<8x128xf32>
    %251 = arith.mulf %246, %250 : vector<8x128xf32>
    %252 = vector.broadcast %231 : vector<1x128xf32> to vector<8x128xf32>
    %253 = arith.mulf %251, %252 : vector<8x128xf32>
    %254 = vector.broadcast %233 : vector<1x128xf32> to vector<8x128xf32>
    %255 = arith.addf %253, %254 : vector<8x128xf32>
    %c1_118 = arith.constant 1 : index
    %c0_119 = arith.constant 0 : index
    %c0_120 = arith.constant 0 : index
    %256 = vector.load %arg11[%c1_118, %c0_119, %c0_120] : memref<2x128x256xbf16, #tpu.memory_space<vmem>>, vector<1x128x256xbf16>
    %257 = vector.shape_cast %256 : vector<1x128x256xbf16> to vector<128x256xbf16>
    %c1_121 = arith.constant 1 : index
    %c0_122 = arith.constant 0 : index
    %c0_123 = arith.constant 0 : index
    %258 = vector.load %arg12[%c1_121, %c0_122, %c0_123] : memref<2x1x256xf32, #tpu.memory_space<vmem>>, vector<1x1x256xf32>
    %259 = vector.shape_cast %258 : vector<1x1x256xf32> to vector<1x256xf32>
    %260 = arith.truncf %255 : vector<8x128xf32> to vector<8x128xbf16>
    %cst_124 = arith.constant dense<0.000000e+00> : vector<8x256xf32>
    %261 = tpu.matmul %260, %257, %cst_124 {dimension_numbers = #tpu.dot_dimension_numbers<[1], [0], [0], [1], [0, 0, 1, 1], [], []>} : vector<8x128xbf16>, vector<128x256xbf16>, vector<8x256xf32> -> vector<8x256xf32>
    %262 = vector.broadcast %259 : vector<1x256xf32> to vector<8x256xf32>
    %263 = arith.addf %261, %262 : vector<8x256xf32>
    %cst_125 = arith.constant 5.000000e-01 : f32
    %264 = vector.broadcast %cst_125 : f32 to vector<8x256xf32>
    %265 = arith.mulf %264, %263 : vector<8x256xf32>
    %cst_126 = arith.constant 4.471500e-02 : f32
    %266 = vector.broadcast %cst_126 : f32 to vector<8x256xf32>
    %267 = arith.mulf %266, %263 : vector<8x256xf32>
    %268 = arith.mulf %267, %263 : vector<8x256xf32>
    %269 = arith.mulf %268, %263 : vector<8x256xf32>
    %270 = arith.addf %263, %269 : vector<8x256xf32>
    %cst_127 = arith.constant 0.797884583 : f32
    %271 = vector.broadcast %cst_127 : f32 to vector<8x256xf32>
    %272 = arith.mulf %271, %270 : vector<8x256xf32>
    %273 = math.tanh %272 : vector<8x256xf32>
    %cst_128 = arith.constant 1.000000e+00 : f32
    %274 = vector.broadcast %cst_128 : f32 to vector<8x256xf32>
    %275 = arith.addf %274, %273 : vector<8x256xf32>
    %276 = arith.mulf %265, %275 : vector<8x256xf32>
    %c1_129 = arith.constant 1 : index
    %c0_130 = arith.constant 0 : index
    %c0_131 = arith.constant 0 : index
    %277 = vector.load %arg13[%c1_129, %c0_130, %c0_131] : memref<2x256x128xbf16, #tpu.memory_space<vmem>>, vector<1x256x128xbf16>
    %278 = vector.shape_cast %277 : vector<1x256x128xbf16> to vector<256x128xbf16>
    %c1_132 = arith.constant 1 : index
    %c0_133 = arith.constant 0 : index
    %c0_134 = arith.constant 0 : index
    %279 = vector.load %arg14[%c1_132, %c0_133, %c0_134] : memref<2x1x128xf32, #tpu.memory_space<vmem>>, vector<1x1x128xf32>
    %280 = vector.shape_cast %279 : vector<1x1x128xf32> to vector<1x128xf32>
    %281 = arith.truncf %276 : vector<8x256xf32> to vector<8x256xbf16>
    %cst_135 = arith.constant dense<0.000000e+00> : vector<8x128xf32>
    %282 = tpu.matmul %281, %278, %cst_135 {dimension_numbers = #tpu.dot_dimension_numbers<[1], [0], [0], [1], [0, 0, 1, 1], [], []>} : vector<8x256xbf16>, vector<256x128xbf16>, vector<8x128xf32> -> vector<8x128xf32>
    %283 = vector.broadcast %280 : vector<1x128xf32> to vector<8x128xf32>
    %284 = arith.addf %282, %283 : vector<8x128xf32>
    %285 = arith.addf %255, %284 : vector<8x128xf32>
    %c1_136 = arith.constant 1 : index
    %c0_137 = arith.constant 0 : index
    %c0_138 = arith.constant 0 : index
    %286 = vector.load %arg15[%c1_136, %c0_137, %c0_138] : memref<2x1x128xf32, #tpu.memory_space<vmem>>, vector<1x1x128xf32>
    %287 = vector.shape_cast %286 : vector<1x1x128xf32> to vector<1x128xf32>
    %c1_139 = arith.constant 1 : index
    %c0_140 = arith.constant 0 : index
    %c0_141 = arith.constant 0 : index
    %288 = vector.load %arg16[%c1_139, %c0_140, %c0_141] : memref<2x1x128xf32, #tpu.memory_space<vmem>>, vector<1x1x128xf32>
    %289 = vector.shape_cast %288 : vector<1x1x128xf32> to vector<1x128xf32>
    %cst_142 = arith.constant dense<0.000000e+00> : vector<8xf32>
    %290 = vector.multi_reduction <add>, %285, %cst_142 [1] : vector<8x128xf32> to vector<8xf32>
    %291 = vector.shape_cast %290 : vector<8xf32> to vector<8x1xf32>
    %cst_143 = arith.constant 1.280000e+02 : f32
    %292 = vector.broadcast %cst_143 : f32 to vector<8x1xf32>
    %293 = arith.divf %291, %292 : vector<8x1xf32>
    %294 = vector.broadcast %293 : vector<8x1xf32> to vector<8x128xf32>
    %295 = arith.subf %285, %294 : vector<8x128xf32>
    %296 = arith.mulf %295, %295 : vector<8x128xf32>
    %cst_144 = arith.constant dense<0.000000e+00> : vector<8xf32>
    %297 = vector.multi_reduction <add>, %296, %cst_144 [1] : vector<8x128xf32> to vector<8xf32>
    %298 = vector.shape_cast %297 : vector<8xf32> to vector<8x1xf32>
    %cst_145 = arith.constant 1.280000e+02 : f32
    %299 = vector.broadcast %cst_145 : f32 to vector<8x1xf32>
    %300 = arith.divf %298, %299 : vector<8x1xf32>
    %301 = vector.broadcast %293 : vector<8x1xf32> to vector<8x128xf32>
    %302 = arith.subf %285, %301 : vector<8x128xf32>
    %cst_146 = arith.constant 9.99999974E-6 : f32
    %303 = vector.broadcast %cst_146 : f32 to vector<8x1xf32>
    %304 = arith.addf %300, %303 : vector<8x1xf32>
    %305 = math.rsqrt %304 : vector<8x1xf32>
    %306 = vector.broadcast %305 : vector<8x1xf32> to vector<8x128xf32>
    %307 = arith.mulf %302, %306 : vector<8x128xf32>
    %308 = vector.broadcast %287 : vector<1x128xf32> to vector<8x128xf32>
    %309 = arith.mulf %307, %308 : vector<8x128xf32>
    %310 = vector.broadcast %289 : vector<1x128xf32> to vector<8x128xf32>
    %311 = arith.addf %309, %310 : vector<8x128xf32>
    %312 = vector.extract_strided_slice %311 {offsets = [0, 0], sizes = [1, 128], strides = [1, 1]} : vector<8x128xf32> to vector<1x128xf32>
    %c0_147 = arith.constant 0 : index
    %c0_148 = arith.constant 0 : index
    %313 = vector.load %arg17[%c0_147, %c0_148] : memref<128x128xbf16, #tpu.memory_space<vmem>>, vector<128x128xbf16>
    %c0_149 = arith.constant 0 : index
    %c0_150 = arith.constant 0 : index
    %314 = vector.load %arg18[%c0_149, %c0_150] : memref<1x128xf32, #tpu.memory_space<vmem>>, vector<1x128xf32>
    %315 = arith.truncf %312 : vector<1x128xf32> to vector<1x128xbf16>
    %cst_151 = arith.constant dense<0.000000e+00> : vector<1x128xf32>
    %316 = tpu.matmul %315, %313, %cst_151 {dimension_numbers = #tpu.dot_dimension_numbers<[1], [0], [0], [1], [0, 0, 1, 1], [], []>} : vector<1x128xbf16>, vector<128x128xbf16>, vector<1x128xf32> -> vector<1x128xf32>
    %317 = arith.addf %316, %314 : vector<1x128xf32>
    %318 = math.tanh %317 : vector<1x128xf32>
    %c0_152 = arith.constant 0 : index
    %c0_153 = arith.constant 0 : index
    %319 = vector.load %arg19[%c0_152, %c0_153] : memref<128x1024xbf16, #tpu.memory_space<vmem>>, vector<128x1024xbf16>
    %c0_154 = arith.constant 0 : index
    %c0_155 = arith.constant 0 : index
    %320 = vector.load %arg20[%c0_154, %c0_155] : memref<1x1024xf32, #tpu.memory_space<vmem>>, vector<1x1024xf32>
    %321 = arith.truncf %318 : vector<1x128xf32> to vector<1x128xbf16>
    %cst_156 = arith.constant dense<0.000000e+00> : vector<1x1024xf32>
    %322 = tpu.matmul %321, %319, %cst_156 {dimension_numbers = #tpu.dot_dimension_numbers<[1], [0], [0], [1], [0, 0, 1, 1], [], []>} : vector<1x128xbf16>, vector<128x1024xbf16>, vector<1x1024xf32> -> vector<1x1024xf32>
    %323 = arith.addf %322, %320 : vector<1x1024xf32>
    %cst_157 = arith.constant 0.000000e+00 : f32
    %324 = vector.broadcast %cst_157 : f32 to vector<1x1024xf32>
    %325 = arith.cmpf oge, %323, %324 : vector<1x1024xf32>
    %cst_158 = arith.constant 1.000000e-01 : f32
    %326 = vector.broadcast %cst_158 : f32 to vector<1x1024xf32>
    %327 = arith.mulf %326, %323 : vector<1x1024xf32>
    %328 = arith.select %325, %323, %327 : vector<1x1024xi1>, vector<1x1024xf32>
    %c0_159 = arith.constant 0 : index
    %c0_160 = arith.constant 0 : index
    %329 = vector.load %arg21[%c0_159, %c0_160] : memref<1024x512xbf16, #tpu.memory_space<vmem>>, vector<1024x512xbf16>
    %c0_161 = arith.constant 0 : index
    %c0_162 = arith.constant 0 : index
    %330 = vector.load %arg22[%c0_161, %c0_162] : memref<1x512xf32, #tpu.memory_space<vmem>>, vector<1x512xf32>
    %331 = arith.truncf %328 : vector<1x1024xf32> to vector<1x1024xbf16>
    %cst_163 = arith.constant dense<0.000000e+00> : vector<1x512xf32>
    %332 = tpu.matmul %331, %329, %cst_163 {dimension_numbers = #tpu.dot_dimension_numbers<[1], [0], [0], [1], [0, 0, 1, 1], [], []>} : vector<1x1024xbf16>, vector<1024x512xbf16>, vector<1x512xf32> -> vector<1x512xf32>
    %333 = arith.addf %332, %330 : vector<1x512xf32>
    %cst_164 = arith.constant 0.000000e+00 : f32
    %334 = vector.broadcast %cst_164 : f32 to vector<1x512xf32>
    %335 = arith.cmpf oge, %333, %334 : vector<1x512xf32>
    %cst_165 = arith.constant 1.000000e-01 : f32
    %336 = vector.broadcast %cst_165 : f32 to vector<1x512xf32>
    %337 = arith.mulf %336, %333 : vector<1x512xf32>
    %338 = arith.select %335, %333, %337 : vector<1x512xi1>, vector<1x512xf32>
    %c0_166 = arith.constant 0 : index
    %c0_167 = arith.constant 0 : index
    %339 = vector.load %arg23[%c0_166, %c0_167] : memref<512x128xbf16, #tpu.memory_space<vmem>>, vector<512x128xbf16>
    %c0_168 = arith.constant 0 : index
    %c0_169 = arith.constant 0 : index
    %340 = vector.load %arg24[%c0_168, %c0_169] : memref<1x128xf32, #tpu.memory_space<vmem>>, vector<1x128xf32>
    %341 = arith.truncf %338 : vector<1x512xf32> to vector<1x512xbf16>
    %cst_170 = arith.constant dense<0.000000e+00> : vector<1x128xf32>
    %342 = tpu.matmul %341, %339, %cst_170 {dimension_numbers = #tpu.dot_dimension_numbers<[1], [0], [0], [1], [0, 0, 1, 1], [], []>} : vector<1x512xbf16>, vector<512x128xbf16>, vector<1x128xf32> -> vector<1x128xf32>
    %343 = arith.addf %342, %340 : vector<1x128xf32>
    %c0_171 = arith.constant 0 : index
    %c0_172 = arith.constant 0 : index
    %c0_173 = arith.constant 0 : index
    %344 = vector.load %arg25[%c0_171, %c0_172, %c0_173] : memref<1x1x128xf32, #tpu.memory_space<vmem>>, vector<1x1x128xf32>
    %345 = vector.shape_cast %344 : vector<1x1x128xf32> to vector<1x128xf32>
    %346 = vector.shape_cast %343 : vector<1x128xf32> to vector<1x1x128xf32>
    tpu.vector_store %arg25[%c0_171, %c0_172, %c0_173], %346 {strides = array<i32>} : memref<1x1x128xf32, #tpu.memory_space<vmem>>, vector<1x1x128xf32>,
    return
  }
  func.func @transform_0(%arg0: i32) -> (i32, i32, i32) {
    %c0_i32 = arith.constant 0 : i32
    %c0_i32_0 = arith.constant 0 : i32
    %c0_i32_1 = arith.constant 0 : i32
    return %arg0, %c0_i32, %c0_i32_0 : i32, i32, i32
  }
  func.func @transform_1(%arg0: i32) -> (i32, i32, i32) {
    %c0_i32 = arith.constant 0 : i32
    %c0_i32_0 = arith.constant 0 : i32
    %c0_i32_1 = arith.constant 0 : i32
    return %arg0, %c0_i32, %c0_i32_0 : i32, i32, i32
  }
  func.func @transform_2(%arg0: i32) -> (i32, i32) {
    %c0_i32 = arith.constant 0 : i32
    %c0_i32_0 = arith.constant 0 : i32
    %c0_i32_1 = arith.constant 0 : i32
    return %c0_i32, %c0_i32_0 : i32, i32
  }
  func.func @transform_3(%arg0: i32) -> (i32, i32) {
    %c0_i32 = arith.constant 0 : i32
    %c0_i32_0 = arith.constant 0 : i32
    %c0_i32_1 = arith.constant 0 : i32
    return %c0_i32, %c0_i32_0 : i32, i32
  }
  func.func @transform_4(%arg0: i32) -> (i32, i32, i32) {
    %c0_i32 = arith.constant 0 : i32
    %c0_i32_0 = arith.constant 0 : i32
    %c0_i32_1 = arith.constant 0 : i32
    %c0_i32_2 = arith.constant 0 : i32
    return %c0_i32, %c0_i32_0, %c0_i32_1 : i32, i32, i32
  }
  func.func @transform_5(%arg0: i32) -> (i32, i32, i32) {
    %c0_i32 = arith.constant 0 : i32
    %c0_i32_0 = arith.constant 0 : i32
    %c0_i32_1 = arith.constant 0 : i32
    %c0_i32_2 = arith.constant 0 : i32
    return %c0_i32, %c0_i32_0, %c0_i32_1 : i32, i32, i32
  }
  func.func @transform_6(%arg0: i32) -> (i32, i32, i32) {
    %c0_i32 = arith.constant 0 : i32
    %c0_i32_0 = arith.constant 0 : i32
    %c0_i32_1 = arith.constant 0 : i32
    %c0_i32_2 = arith.constant 0 : i32
    return %c0_i32, %c0_i32_0, %c0_i32_1 : i32, i32, i32
  }
  func.func @transform_7(%arg0: i32) -> (i32, i32, i32) {
    %c0_i32 = arith.constant 0 : i32
    %c0_i32_0 = arith.constant 0 : i32
    %c0_i32_1 = arith.constant 0 : i32
    %c0_i32_2 = arith.constant 0 : i32
    return %c0_i32, %c0_i32_0, %c0_i32_1 : i32, i32, i32
  }
  func.func @transform_8(%arg0: i32) -> (i32, i32, i32) {
    %c0_i32 = arith.constant 0 : i32
    %c0_i32_0 = arith.constant 0 : i32
    %c0_i32_1 = arith.constant 0 : i32
    %c0_i32_2 = arith.constant 0 : i32
    return %c0_i32, %c0_i32_0, %c0_i32_1 : i32, i32, i32
  }
  func.func @transform_9(%arg0: i32) -> (i32, i32, i32) {
    %c0_i32 = arith.constant 0 : i32
    %c0_i32_0 = arith.constant 0 : i32
    %c0_i32_1 = arith.constant 0 : i32
    %c0_i32_2 = arith.constant 0 : i32
    return %c0_i32, %c0_i32_0, %c0_i32_1 : i32, i32, i32
  }
  func.func @transform_10(%arg0: i32) -> (i32, i32, i32) {
    %c0_i32 = arith.constant 0 : i32
    %c0_i32_0 = arith.constant 0 : i32
    %c0_i32_1 = arith.constant 0 : i32
    %c0_i32_2 = arith.constant 0 : i32
    return %c0_i32, %c0_i32_0, %c0_i32_1 : i32, i32, i32
  }
  func.func @transform_11(%arg0: i32) -> (i32, i32, i32) {
    %c0_i32 = arith.constant 0 : i32
    %c0_i32_0 = arith.constant 0 : i32
    %c0_i32_1 = arith.constant 0 : i32
    %c0_i32_2 = arith.constant 0 : i32
    return %c0_i32, %c0_i32_0, %c0_i32_1 : i32, i32, i32
  }
  func.func @transform_12(%arg0: i32) -> (i32, i32, i32) {
    %c0_i32 = arith.constant 0 : i32
    %c0_i32_0 = arith.constant 0 : i32
    %c0_i32_1 = arith.constant 0 : i32
    %c0_i32_2 = arith.constant 0 : i32
    return %c0_i32, %c0_i32_0, %c0_i32_1 : i32, i32, i32
  }
  func.func @transform_13(%arg0: i32) -> (i32, i32, i32) {
    %c0_i32 = arith.constant 0 : i32
    %c0_i32_0 = arith.constant 0 : i32
    %c0_i32_1 = arith.constant 0 : i32
    %c0_i32_2 = arith.constant 0 : i32
    return %c0_i32, %c0_i32_0, %c0_i32_1 : i32, i32, i32
  }
  func.func @transform_14(%arg0: i32) -> (i32, i32, i32) {
    %c0_i32 = arith.constant 0 : i32
    %c0_i32_0 = arith.constant 0 : i32
    %c0_i32_1 = arith.constant 0 : i32
    %c0_i32_2 = arith.constant 0 : i32
    return %c0_i32, %c0_i32_0, %c0_i32_1 : i32, i32, i32
  }
  func.func @transform_15(%arg0: i32) -> (i32, i32, i32) {
    %c0_i32 = arith.constant 0 : i32
    %c0_i32_0 = arith.constant 0 : i32
    %c0_i32_1 = arith.constant 0 : i32
    %c0_i32_2 = arith.constant 0 : i32
    return %c0_i32, %c0_i32_0, %c0_i32_1 : i32, i32, i32
  }
  func.func @transform_16(%arg0: i32) -> (i32, i32) {
    %c0_i32 = arith.constant 0 : i32
    %c0_i32_0 = arith.constant 0 : i32
    %c0_i32_1 = arith.constant 0 : i32
    return %c0_i32, %c0_i32_0 : i32, i32
  }
  func.func @transform_17(%arg0: i32) -> (i32, i32) {
    %c0_i32 = arith.constant 0 : i32
    %c0_i32_0 = arith.constant 0 : i32
    %c0_i32_1 = arith.constant 0 : i32
    return %c0_i32, %c0_i32_0 : i32, i32
  }
  func.func @transform_18(%arg0: i32) -> (i32, i32) {
    %c0_i32 = arith.constant 0 : i32
    %c0_i32_0 = arith.constant 0 : i32
    %c0_i32_1 = arith.constant 0 : i32
    return %c0_i32, %c0_i32_0 : i32, i32
  }
  func.func @transform_19(%arg0: i32) -> (i32, i32) {
    %c0_i32 = arith.constant 0 : i32
    %c0_i32_0 = arith.constant 0 : i32
    %c0_i32_1 = arith.constant 0 : i32
    return %c0_i32, %c0_i32_0 : i32, i32
  }
  func.func @transform_20(%arg0: i32) -> (i32, i32) {
    %c0_i32 = arith.constant 0 : i32
    %c0_i32_0 = arith.constant 0 : i32
    %c0_i32_1 = arith.constant 0 : i32
    return %c0_i32, %c0_i32_0 : i32, i32
  }
  func.func @transform_21(%arg0: i32) -> (i32, i32) {
    %c0_i32 = arith.constant 0 : i32
    %c0_i32_0 = arith.constant 0 : i32
    %c0_i32_1 = arith.constant 0 : i32
    return %c0_i32, %c0_i32_0 : i32, i32
  }
  func.func @transform_22(%arg0: i32) -> (i32, i32) {
    %c0_i32 = arith.constant 0 : i32
    %c0_i32_0 = arith.constant 0 : i32
    %c0_i32_1 = arith.constant 0 : i32
    return %c0_i32, %c0_i32_0 : i32, i32
  }
  func.func @transform_23(%arg0: i32) -> (i32, i32) {
    %c0_i32 = arith.constant 0 : i32
    %c0_i32_0 = arith.constant 0 : i32
    %c0_i32_1 = arith.constant 0 : i32
    return %c0_i32, %c0_i32_0 : i32, i32
  }
  func.func @transform_24(%arg0: i32) -> (i32, i32, i32) {
    %c0_i32 = arith.constant 0 : i32
    %c0_i32_0 = arith.constant 0 : i32
    %c0_i32_1 = arith.constant 0 : i32
    return %arg0, %c0_i32, %c0_i32_0 : i32, i32, i32
  }
}

</mosaic_0001>

<llo_original>
// kernel: forward.1
$region0: #{forward.1}
  #allocation0 [shape = 'u32[]', space=smem, size = 0x4, offset = 0x4, fixed_abs, tag = 'smem constant byte address 0x4 - core index']
  #allocation1 [shape = 'u32[72,128]{1,0:T(1,128)}', space=vmem, size = 0x9000, scoped, tag = 'internal scratch']
  %s0 = inlined_call_operand.vmem [shape: f32[2,8,128], index: 0, kind: input, shape index: {}]
  %s1 = inlined_call_operand.vmem [shape: f32[2,1,8], index: 1, kind: input, shape index: {}]
  %s2 = inlined_call_operand.vmem [shape: f32[1,128], index: 2, kind: input, shape index: {}]
  %s3 = inlined_call_operand.vmem [shape: f32[1,128], index: 3, kind: input, shape index: {}]
  %s4 = inlined_call_operand.hbm [shape: bf16[2,128,384], index: 4, kind: input, shape index: {}]
  %s5 = inlined_call_operand.vmem [shape: f32[2,1,384], index: 5, kind: input, shape index: {}]
  %s6 = inlined_call_operand.hbm [shape: bf16[2,128,128], index: 6, kind: input, shape index: {}]
  %s7 = inlined_call_operand.vmem [shape: f32[2,1,128], index: 7, kind: input, shape index: {}]
  %s8 = inlined_call_operand.vmem [shape: f32[2,1,128], index: 8, kind: input, shape index: {}]
  %s9 = inlined_call_operand.vmem [shape: f32[2,1,128], index: 9, kind: input, shape index: {}]
  %s10 = inlined_call_operand.vmem [shape: bf16[2,128,256], index: 10, kind: input, shape index: {}]
  %s11 = inlined_call_operand.vmem [shape: f32[2,1,256], index: 11, kind: input, shape index: {}]
  %s12 = inlined_call_operand.hbm [shape: bf16[2,256,128], index: 12, kind: input, shape index: {}]
  %s13 = inlined_call_operand.vmem [shape: f32[2,1,128], index: 13, kind: input, shape index: {}]
  %s14 = inlined_call_operand.vmem [shape: f32[2,1,128], index: 14, kind: input, shape index: {}]
  %s15 = inlined_call_operand.vmem [shape: f32[2,1,128], index: 15, kind: input, shape index: {}]
  %s16 = inlined_call_operand.vmem [shape: bf16[128,128], index: 16, kind: input, shape index: {}]
  %s17 = inlined_call_operand.vmem [shape: f32[1,128], index: 17, kind: input, shape index: {}]
  %s18 = inlined_call_operand.hbm [shape: bf16[128,1024], index: 18, kind: input, shape index: {}]
  %s19 = inlined_call_operand.vmem [shape: f32[1,1024], index: 19, kind: input, shape index: {}]
  %s20 = inlined_call_operand.hbm [shape: bf16[1024,512], index: 20, kind: input, shape index: {}]
  %s21 = inlined_call_operand.vmem [shape: f32[1,512], index: 21, kind: input, shape index: {}]
  %s22 = inlined_call_operand.hbm [shape: bf16[512,128], index: 22, kind: input, shape index: {}]
  %s23 = inlined_call_operand.vmem [shape: f32[1,128], index: 23, kind: input, shape index: {}]
  %s24 = inlined_call_operand.hbm [shape: f32[2,1,128], index: 24, kind: output, shape index: {}]
  %s25 = sld [smem:[#allocation0]]
  $region153: #{forward.1} parent=0
    _
  %s27 = ssub.s32 1, %s25
  %s28 = scalar_select 0, %s27, %s25
  $region1: #{forward.1} parent=0
    #allocation2 [shape = 'u8[196608]{0}', space=vmem, size = 0x30000, scoped, tag = 'input window, operand 4, single buffered']
    #allocation3 [shape = 's32[2]{0}', space=sflag, size = 0x8, scoped, tag = 'scoped memory for forward.1']
    #allocation4 [shape = 's32[2]{0}', space=sflag, size = 0x8, scoped, tag = 'scoped memory for forward.1']
    #allocation5 [shape = 'u8[65536]{0}', space=vmem, size = 0x10000, scoped, tag = 'input window, operand 6, single buffered']
    #allocation6 [shape = 's32[1]{0}', space=sflag, size = 0x4, scoped, tag = 'scoped memory for forward.1']
    #allocation7 [shape = 'u8[131072]{0}', space=vmem, size = 0x20000, scoped, tag = 'input window, operand 12, single buffered']
    #allocation8 [shape = 'u8[262144]{0}', space=vmem, size = 0x40000, scoped, tag = 'input window, operand 18, single buffered']
    #allocation9 [shape = 's32[1]{0}', space=sflag, size = 0x4, scoped, tag = 'scoped memory for forward.1']
    #allocation10 [shape = 'u8[1048576]{0}', space=vmem, size = 0x100000, scoped, tag = 'input window, operand 20, single buffered']
    #allocation11 [shape = 'u8[131072]{0}', space=vmem, size = 0x20000, scoped, tag = 'input window, operand 22, single buffered']
    #allocation12 [shape = 's32[1]{0}', space=sflag, size = 0x4, scoped, tag = 'scoped memory for forward.1']
    #allocation13 [shape = 'u8[1024]{0}', space=vmem, size = 0x400, scoped, tag = 'output window, operand 0']
    %29 = vsyncpa [#allocation3], 0
    %30 = vsyncpa [#allocation6], 0
    %31 = vsyncpa [#allocation9], 0
    %32 = vsyncpa [#allocation12], 0
    %33 = vsyncpa [#allocation4], 0
    %s34 = scalar_lea.sflag [#allocation4], 1
    %35 = vsyncpa %s34, 0
    loop: start=0, step=1, limit=4
    $region2: #{forward.1} parent=1 // loop_pre_header
      _
    $region3: #{forward.1} parent=1 // loop_header
      %s37 = sphi 0, %s41
      %p38 = scmp.ge.s32.totalorder %s37, 4
      %s47 = sphi 0, %s49
      %s50 = sphi 0, %s47
      %s51 = sphi 0, %s50
      %s67 = sphi 0, %s51
      %s73 = sphi 0, %s75
      %s76 = sphi 0, %s73
      %s77 = sphi 0, %s76
      %s93 = sphi 0, %s77
      %s97 = sphi 0, %s97
      %s99 = sphi 0, %s97
      %s100 = sphi 0, %s99
      %s114 = sphi 0, %s100
      %s118 = sphi 0, %s118
      %s120 = sphi 0, %s118
      %s121 = sphi 0, %s120
      %s135 = sphi 0, %s121
      %s139 = sphi 0, %s139
      %s141 = sphi 0, %s139
      %s142 = sphi 0, %s141
      %s156 = sphi 0, %s142
      %s160 = sphi 0, %s160
      %s162 = sphi 0, %s160
      %s163 = sphi 0, %s162
      %s177 = sphi 0, %s163
      %s181 = sphi 0, %s181
      %s183 = sphi 0, %s181
      %s184 = sphi 0, %s183
      %s198 = sphi 0, %s184
      %s202 = sphi 0, %s202
      %s204 = sphi 0, %s202
      %s205 = sphi 0, %s204
      %s219 = sphi 0, %s205
      %s223 = sphi 0, %s223
      %s225 = sphi 0, %s223
      %s226 = sphi 0, %s225
      %s240 = sphi 0, %s226
      %s244 = sphi 0, %s244
      %s246 = sphi 0, %s244
      %s247 = sphi 0, %s246
      %s261 = sphi 0, %s247
      %s265 = sphi 0, %s265
      %s267 = sphi 0, %s265
      %s268 = sphi 0, %s267
      %s282 = sphi 0, %s268
      %s286 = sphi 0, %s286
      %s288 = sphi 0, %s286
      %s289 = sphi 0, %s288
      %s303 = sphi 0, %s289
      %s307 = sphi 0, %s307
      %s309 = sphi 0, %s307
      %s310 = sphi 0, %s309
      %s324 = sphi 0, %s310
      %s328 = sphi 0, %s328
      %s330 = sphi 0, %s328
      %s331 = sphi 0, %s330
      %s345 = sphi 0, %s331
      %s349 = sphi 0, %s349
      %s351 = sphi 0, %s349
      %s352 = sphi 0, %s351
      %s366 = sphi 0, %s352
      %s370 = sphi 0, %s370
      %s372 = sphi 0, %s370
      %s373 = sphi 0, %s372
      %s387 = sphi 0, %s373
      %s391 = sphi 0, %s391
      %s393 = sphi 0, %s391
      %s394 = sphi 0, %s393
      %s408 = sphi 0, %s394
      %s412 = sphi 0, %s412
      %s414 = sphi 0, %s412
      %s415 = sphi 0, %s414
      %s429 = sphi 0, %s415
      %s433 = sphi 0, %s433
      %s435 = sphi 0, %s433
      %s436 = sphi 0, %s435
      %s450 = sphi 0, %s436
      %s454 = sphi 0, %s454
      %s456 = sphi 0, %s454
      %s457 = sphi 0, %s456
      %s471 = sphi 0, %s457
      %s475 = sphi 0, %s475
      %s477 = sphi 0, %s475
      %s478 = sphi 0, %s477
      %s492 = sphi 0, %s478
      %s496 = sphi 0, %s496
      %s498 = sphi 0, %s496
      %s499 = sphi 0, %s498
      %s513 = sphi 0, %s499
      %s517 = sphi 0, %s517
      %s519 = sphi 0, %s517
      %s520 = sphi 0, %s519
      %s534 = sphi 0, %s520
      %s538 = sphi 0, %s538
      %s540 = sphi 0, %s538
      %s541 = sphi 0, %s540
      %s555 = sphi 0, %s541
      %s561 = sphi 0, %s563
      %s564 = sphi 0, %s561
      %s565 = sphi 0, %s564
      %s581 = sphi 0, %s565
    $region4: #{forward.1} parent=1 // loop_header_branch
      %40 = sbr.rel (%p38) target = $region8
    $region5: #{forward.1} parent=1 // loop_body
      %s42 = ssub.s32 %s37, 1
      %s43 = ssub.s32 %s37, 2
      %s44 = sadd.s32 %s37, 1
      %s45 = ssub.s32 %s37, %s44
      %p46 = scmp.eq.s32.totalorder %s45, 0
      %s48 = sadd.s32 %s47, 1
      %s49 = scalar_select %p46, %s47, %s48
      %p52 = pneg %p46
      %p53 = scmp.eq.s32.totalorder %s37, 1
      %p54 = por %p52, %p53
      %p55 = scmp.ne.s32.totalorder %s47, %s50
      %p56 = scmp.eq.s32.totalorder %s37, 0
      %p57 = por %p55, %p56
      %p58 = scmp.ne.s32.totalorder %s47, %s50
      %p59 = scmp.eq.s32.totalorder %s42, 1
      %p60 = por %p58, %p59
      %p61 = scmp.ne.s32.totalorder %s50, %s51
      %p62 = scmp.eq.s32.totalorder %s42, 0
      %p63 = por %p61, %p62
      %p64 = scmp.ne.s32.totalorder %s50, %s51
      %p65 = scmp.eq.s32.totalorder %s43, 1
      %p66 = por %p64, %p65
      %p68 = scmp.ne.s32.totalorder %s51, %s67
      %p69 = scmp.eq.s32.totalorder %s43, 0
      %p70 = por %p68, %p69
      %s71 = ssub.s32 %s37, %s44
      %p72 = scmp.eq.s32.totalorder %s71, 0
      %s74 = sadd.s32 %s73, 1
      %s75 = scalar_select %p72, %s73, %s74
      %p78 = pneg %p72
      %p79 = scmp.eq.s32.totalorder %s37, 1
      %p80 = por %p78, %p79
      %p81 = scmp.ne.s32.totalorder %s73, %s76
      %p82 = scmp.eq.s32.totalorder %s37, 0
      %p83 = por %p81, %p82
      %p84 = scmp.ne.s32.totalorder %s73, %s76
      %p85 = scmp.eq.s32.totalorder %s42, 1
      %p86 = por %p84, %p85
      %p87 = scmp.ne.s32.totalorder %s76, %s77
      %p88 = scmp.eq.s32.totalorder %s42, 0
      %p89 = por %p87, %p88
      %p90 = scmp.ne.s32.totalorder %s76, %s77
      %p91 = scmp.eq.s32.totalorder %s43, 1
      %p92 = por %p90, %p91
      %p94 = scmp.ne.s32.totalorder %s77, %s93
      %p95 = scmp.eq.s32.totalorder %s43, 0
      %p96 = por %p94, %p95
      %s98 = sadd.s32 %s97, 1
      %p101 = scmp.eq.s32.totalorder %s37, 1
      %p102 = scmp.ne.s32.totalorder %s97, %s99
      %p103 = scmp.eq.s32.totalorder %s37, 0
      %p104 = por %p102, %p103
      %p105 = scmp.ne.s32.totalorder %s97, %s99
      %p106 = scmp.eq.s32.totalorder %s42, 1
      %p107 = por %p105, %p106
      %p108 = scmp.ne.s32.totalorder %s99, %s100
      %p109 = scmp.eq.s32.totalorder %s42, 0
      %p110 = por %p108, %p109
      %p111 = scmp.ne.s32.totalorder %s99, %s100
      %p112 = scmp.eq.s32.totalorder %s43, 1
      %p113 = por %p111, %p112
      %p115 = scmp.ne.s32.totalorder %s100, %s114
      %p116 = scmp.eq.s32.totalorder %s43, 0
      %p117 = por %p115, %p116
      %s119 = sadd.s32 %s118, 1
      %p122 = scmp.eq.s32.totalorder %s37, 1
      %p123 = scmp.ne.s32.totalorder %s118, %s120
      %p124 = scmp.eq.s32.totalorder %s37, 0
      %p125 = por %p123, %p124
      %p126 = scmp.ne.s32.totalorder %s118, %s120
      %p127 = scmp.eq.s32.totalorder %s42, 1
      %p128 = por %p126, %p127
      %p129 = scmp.ne.s32.totalorder %s120, %s121
      %p130 = scmp.eq.s32.totalorder %s42, 0
      %p131 = por %p129, %p130
      %p132 = scmp.ne.s32.totalorder %s120, %s121
      %p133 = scmp.eq.s32.totalorder %s43, 1
      %p134 = por %p132, %p133
      %p136 = scmp.ne.s32.totalorder %s121, %s135
      %p137 = scmp.eq.s32.totalorder %s43, 0
      %p138 = por %p136, %p137
      %s140 = sadd.s32 %s139, 1
      %p143 = scmp.eq.s32.totalorder %s37, 1
      %p144 = scmp.ne.s32.totalorder %s139, %s141
      %p145 = scmp.eq.s32.totalorder %s37, 0
      %p146 = por %p144, %p145
      %p147 = scmp.ne.s32.totalorder %s139, %s141
      %p148 = scmp.eq.s32.totalorder %s42, 1
      %p149 = por %p147, %p148
      %p150 = scmp.ne.s32.totalorder %s141, %s142
      %p151 = scmp.eq.s32.totalorder %s42, 0
      %p152 = por %p150, %p151
      %p153 = scmp.ne.s32.totalorder %s141, %s142
      %p154 = scmp.eq.s32.totalorder %s43, 1
      %p155 = por %p153, %p154
      %p157 = scmp.ne.s32.totalorder %s142, %s156
      %p158 = scmp.eq.s32.totalorder %s43, 0
      %p159 = por %p157, %p158
      %s161 = sadd.s32 %s160, 1
      %p164 = scmp.eq.s32.totalorder %s37, 1
      %p165 = scmp.ne.s32.totalorder %s160, %s162
      %p166 = scmp.eq.s32.totalorder %s37, 0
      %p167 = por %p165, %p166
      %p168 = scmp.ne.s32.totalorder %s160, %s162
      %p169 = scmp.eq.s32.totalorder %s42, 1
      %p170 = por %p168, %p169
      %p171 = scmp.ne.s32.totalorder %s162, %s163
      %p172 = scmp.eq.s32.totalorder %s42, 0
      %p173 = por %p171, %p172
      %p174 = scmp.ne.s32.totalorder %s162, %s163
      %p175 = scmp.eq.s32.totalorder %s43, 1
      %p176 = por %p174, %p175
      %p178 = scmp.ne.s32.totalorder %s163, %s177
      %p179 = scmp.eq.s32.totalorder %s43, 0
      %p180 = por %p178, %p179
      %s182 = sadd.s32 %s181, 1
      %p185 = scmp.eq.s32.totalorder %s37, 1
      %p186 = scmp.ne.s32.totalorder %s181, %s183
      %p187 = scmp.eq.s32.totalorder %s37, 0
      %p188 = por %p186, %p187
      %p189 = scmp.ne.s32.totalorder %s181, %s183
      %p190 = scmp.eq.s32.totalorder %s42, 1
      %p191 = por %p189, %p190
      %p192 = scmp.ne.s32.totalorder %s183, %s184
      %p193 = scmp.eq.s32.totalorder %s42, 0
      %p194 = por %p192, %p193
      %p195 = scmp.ne.s32.totalorder %s183, %s184
      %p196 = scmp.eq.s32.totalorder %s43, 1
      %p197 = por %p195, %p196
      %p199 = scmp.ne.s32.totalorder %s184, %s198
      %p200 = scmp.eq.s32.totalorder %s43, 0
      %p201 = por %p199, %p200
      %s203 = sadd.s32 %s202, 1
      %p206 = scmp.eq.s32.totalorder %s37, 1
      %p207 = scmp.ne.s32.totalorder %s202, %s204
      %p208 = scmp.eq.s32.totalorder %s37, 0
      %p209 = por %p207, %p208
      %p210 = scmp.ne.s32.totalorder %s202, %s204
      %p211 = scmp.eq.s32.totalorder %s42, 1
      %p212 = por %p210, %p211
      %p213 = scmp.ne.s32.totalorder %s204, %s205
      %p214 = scmp.eq.s32.totalorder %s42, 0
      %p215 = por %p213, %p214
      %p216 = scmp.ne.s32.totalorder %s204, %s205
      %p217 = scmp.eq.s32.totalorder %s43, 1
      %p218 = por %p216, %p217
      %p220 = scmp.ne.s32.totalorder %s205, %s219
      %p221 = scmp.eq.s32.totalorder %s43, 0
      %p222 = por %p220, %p221
      %s224 = sadd.s32 %s223, 1
      %p227 = scmp.eq.s32.totalorder %s37, 1
      %p228 = scmp.ne.s32.totalorder %s223, %s225
      %p229 = scmp.eq.s32.totalorder %s37, 0
      %p230 = por %p228, %p229
      %p231 = scmp.ne.s32.totalorder %s223, %s225
      %p232 = scmp.eq.s32.totalorder %s42, 1
      %p233 = por %p231, %p232
      %p234 = scmp.ne.s32.totalorder %s225, %s226
      %p235 = scmp.eq.s32.totalorder %s42, 0
      %p236 = por %p234, %p235
      %p237 = scmp.ne.s32.totalorder %s225, %s226
      %p238 = scmp.eq.s32.totalorder %s43, 1
      %p239 = por %p237, %p238
      %p241 = scmp.ne.s32.totalorder %s226, %s240
      %p242 = scmp.eq.s32.totalorder %s43, 0
      %p243 = por %p241, %p242
      %s245 = sadd.s32 %s244, 1
      %p248 = scmp.eq.s32.totalorder %s37, 1
      %p249 = scmp.ne.s32.totalorder %s244, %s246
      %p250 = scmp.eq.s32.totalorder %s37, 0
      %p251 = por %p249, %p250
      %p252 = scmp.ne.s32.totalorder %s244, %s246
      %p253 = scmp.eq.s32.totalorder %s42, 1
      %p254 = por %p252, %p253
      %p255 = scmp.ne.s32.totalorder %s246, %s247
      %p256 = scmp.eq.s32.totalorder %s42, 0
      %p257 = por %p255, %p256
      %p258 = scmp.ne.s32.totalorder %s246, %s247
      %p259 = scmp.eq.s32.totalorder %s43, 1
      %p260 = por %p258, %p259
      %p262 = scmp.ne.s32.totalorder %s247, %s261
      %p263 = scmp.eq.s32.totalorder %s43, 0
      %p264 = por %p262, %p263
      %s266 = sadd.s32 %s265, 1
      %p269 = scmp.eq.s32.totalorder %s37, 1
      %p270 = scmp.ne.s32.totalorder %s265, %s267
      %p271 = scmp.eq.s32.totalorder %s37, 0
      %p272 = por %p270, %p271
      %p273 = scmp.ne.s32.totalorder %s265, %s267
      %p274 = scmp.eq.s32.totalorder %s42, 1
      %p275 = por %p273, %p274
      %p276 = scmp.ne.s32.totalorder %s267, %s268
      %p277 = scmp.eq.s32.totalorder %s42, 0
      %p278 = por %p276, %p277
      %p279 = scmp.ne.s32.totalorder %s267, %s268
      %p280 = scmp.eq.s32.totalorder %s43, 1
      %p281 = por %p279, %p280
      %p283 = scmp.ne.s32.totalorder %s268, %s282
      %p284 = scmp.eq.s32.totalorder %s43, 0
      %p285 = por %p283, %p284
      %s287 = sadd.s32 %s286, 1
      %p290 = scmp.eq.s32.totalorder %s37, 1
      %p291 = scmp.ne.s32.totalorder %s286, %s288
      %p292 = scmp.eq.s32.totalorder %s37, 0
      %p293 = por %p291, %p292
      %p294 = scmp.ne.s32.totalorder %s286, %s288
      %p295 = scmp.eq.s32.totalorder %s42, 1
      %p296 = por %p294, %p295
      %p297 = scmp.ne.s32.totalorder %s288, %s289
      %p298 = scmp.eq.s32.totalorder %s42, 0
      %p299 = por %p297, %p298
      %p300 = scmp.ne.s32.totalorder %s288, %s289
      %p301 = scmp.eq.s32.totalorder %s43, 1
      %p302 = por %p300, %p301
      %p304 = scmp.ne.s32.totalorder %s289, %s303
      %p305 = scmp.eq.s32.totalorder %s43, 0
      %p306 = por %p304, %p305
      %s308 = sadd.s32 %s307, 1
      %p311 = scmp.eq.s32.totalorder %s37, 1
      %p312 = scmp.ne.s32.totalorder %s307, %s309
      %p313 = scmp.eq.s32.totalorder %s37, 0
      %p314 = por %p312, %p313
      %p315 = scmp.ne.s32.totalorder %s307, %s309
      %p316 = scmp.eq.s32.totalorder %s42, 1
      %p317 = por %p315, %p316
      %p318 = scmp.ne.s32.totalorder %s309, %s310
      %p319 = scmp.eq.s32.totalorder %s42, 0
      %p320 = por %p318, %p319
      %p321 = scmp.ne.s32.totalorder %s309, %s310
      %p322 = scmp.eq.s32.totalorder %s43, 1
      %p323 = por %p321, %p322
      %p325 = scmp.ne.s32.totalorder %s310, %s324
      %p326 = scmp.eq.s32.totalorder %s43, 0
      %p327 = por %p325, %p326
      %s329 = sadd.s32 %s328, 1
      %p332 = scmp.eq.s32.totalorder %s37, 1
      %p333 = scmp.ne.s32.totalorder %s328, %s330
      %p334 = scmp.eq.s32.totalorder %s37, 0
      %p335 = por %p333, %p334
      %p336 = scmp.ne.s32.totalorder %s328, %s330
      %p337 = scmp.eq.s32.totalorder %s42, 1
      %p338 = por %p336, %p337
      %p339 = scmp.ne.s32.totalorder %s330, %s331
      %p340 = scmp.eq.s32.totalorder %s42, 0
      %p341 = por %p339, %p340
      %p342 = scmp.ne.s32.totalorder %s330, %s331
      %p343 = scmp.eq.s32.totalorder %s43, 1
      %p344 = por %p342, %p343
      %p346 = scmp.ne.s32.totalorder %s331, %s345
      %p347 = scmp.eq.s32.totalorder %s43, 0
      %p348 = por %p346, %p347
      %s350 = sadd.s32 %s349, 1
      %p353 = scmp.eq.s32.totalorder %s37, 1
      %p354 = scmp.ne.s32.totalorder %s349, %s351
      %p355 = scmp.eq.s32.totalorder %s37, 0
      %p356 = por %p354, %p355
      %p357 = scmp.ne.s32.totalorder %s349, %s351
      %p358 = scmp.eq.s32.totalorder %s42, 1
      %p359 = por %p357, %p358
      %p360 = scmp.ne.s32.totalorder %s351, %s352
      %p361 = scmp.eq.s32.totalorder %s42, 0
      %p362 = por %p360, %p361
      %p363 = scmp.ne.s32.totalorder %s351, %s352
      %p364 = scmp.eq.s32.totalorder %s43, 1
      %p365 = por %p363, %p364
      %p367 = scmp.ne.s32.totalorder %s352, %s366
      %p368 = scmp.eq.s32.totalorder %s43, 0
      %p369 = por %p367, %p368
      %s371 = sadd.s32 %s370, 1
      %p374 = scmp.eq.s32.totalorder %s37, 1
      %p375 = scmp.ne.s32.totalorder %s370, %s372
      %p376 = scmp.eq.s32.totalorder %s37, 0
      %p377 = por %p375, %p376
      %p378 = scmp.ne.s32.totalorder %s370, %s372
      %p379 = scmp.eq.s32.totalorder %s42, 1
      %p380 = por %p378, %p379
      %p381 = scmp.ne.s32.totalorder %s372, %s373
      %p382 = scmp.eq.s32.totalorder %s42, 0
      %p383 = por %p381, %p382
      %p384 = scmp.ne.s32.totalorder %s372, %s373
      %p385 = scmp.eq.s32.totalorder %s43, 1
      %p386 = por %p384, %p385
      %p388 = scmp.ne.s32.totalorder %s373, %s387
      %p389 = scmp.eq.s32.totalorder %s43, 0
      %p390 = por %p388, %p389
      %s392 = sadd.s32 %s391, 1
      %p395 = scmp.eq.s32.totalorder %s37, 1
      %p396 = scmp.ne.s32.totalorder %s391, %s393
      %p397 = scmp.eq.s32.totalorder %s37, 0
      %p398 = por %p396, %p397
      %p399 = scmp.ne.s32.totalorder %s391, %s393
      %p400 = scmp.eq.s32.totalorder %s42, 1
      %p401 = por %p399, %p400
      %p402 = scmp.ne.s32.totalorder %s393, %s394
      %p403 = scmp.eq.s32.totalorder %s42, 0
      %p404 = por %p402, %p403
      %p405 = scmp.ne.s32.totalorder %s393, %s394
      %p406 = scmp.eq.s32.totalorder %s43, 1
      %p407 = por %p405, %p406
      %p409 = scmp.ne.s32.totalorder %s394, %s408
      %p410 = scmp.eq.s32.totalorder %s43, 0
      %p411 = por %p409, %p410
      %s413 = sadd.s32 %s412, 1
      %p416 = scmp.eq.s32.totalorder %s37, 1
      %p417 = scmp.ne.s32.totalorder %s412, %s414
      %p418 = scmp.eq.s32.totalorder %s37, 0
      %p419 = por %p417, %p418
      %p420 = scmp.ne.s32.totalorder %s412, %s414
      %p421 = scmp.eq.s32.totalorder %s42, 1
      %p422 = por %p420, %p421
      %p423 = scmp.ne.s32.totalorder %s414, %s415
      %p424 = scmp.eq.s32.totalorder %s42, 0
      %p425 = por %p423, %p424
      %p426 = scmp.ne.s32.totalorder %s414, %s415
      %p427 = scmp.eq.s32.totalorder %s43, 1
      %p428 = por %p426, %p427
      %p430 = scmp.ne.s32.totalorder %s415, %s429
      %p431 = scmp.eq.s32.totalorder %s43, 0
      %p432 = por %p430, %p431
      %s434 = sadd.s32 %s433, 1
      %p437 = scmp.eq.s32.totalorder %s37, 1
      %p438 = scmp.ne.s32.totalorder %s433, %s435
      %p439 = scmp.eq.s32.totalorder %s37, 0
      %p440 = por %p438, %p439
      %p441 = scmp.ne.s32.totalorder %s433, %s435
      %p442 = scmp.eq.s32.totalorder %s42, 1
      %p443 = por %p441, %p442
      %p444 = scmp.ne.s32.totalorder %s435, %s436
      %p445 = scmp.eq.s32.totalorder %s42, 0
      %p446 = por %p444, %p445
      %p447 = scmp.ne.s32.totalorder %s435, %s436
      %p448 = scmp.eq.s32.totalorder %s43, 1
      %p449 = por %p447, %p448
      %p451 = scmp.ne.s32.totalorder %s436, %s450
      %p452 = scmp.eq.s32.totalorder %s43, 0
      %p453 = por %p451, %p452
      %s455 = sadd.s32 %s454, 1
      %p458 = scmp.eq.s32.totalorder %s37, 1
      %p459 = scmp.ne.s32.totalorder %s454, %s456
      %p460 = scmp.eq.s32.totalorder %s37, 0
      %p461 = por %p459, %p460
      %p462 = scmp.ne.s32.totalorder %s454, %s456
      %p463 = scmp.eq.s32.totalorder %s42, 1
      %p464 = por %p462, %p463
      %p465 = scmp.ne.s32.totalorder %s456, %s457
      %p466 = scmp.eq.s32.totalorder %s42, 0
      %p467 = por %p465, %p466
      %p468 = scmp.ne.s32.totalorder %s456, %s457
      %p469 = scmp.eq.s32.totalorder %s43, 1
      %p470 = por %p468, %p469
      %p472 = scmp.ne.s32.totalorder %s457, %s471
      %p473 = scmp.eq.s32.totalorder %s43, 0
      %p474 = por %p472, %p473
      %s476 = sadd.s32 %s475, 1
      %p479 = scmp.eq.s32.totalorder %s37, 1
      %p480 = scmp.ne.s32.totalorder %s475, %s477
      %p481 = scmp.eq.s32.totalorder %s37, 0
      %p482 = por %p480, %p481
      %p483 = scmp.ne.s32.totalorder %s475, %s477
      %p484 = scmp.eq.s32.totalorder %s42, 1
      %p485 = por %p483, %p484
      %p486 = scmp.ne.s32.totalorder %s477, %s478
      %p487 = scmp.eq.s32.totalorder %s42, 0
      %p488 = por %p486, %p487
      %p489 = scmp.ne.s32.totalorder %s477, %s478
      %p490 = scmp.eq.s32.totalorder %s43, 1
      %p491 = por %p489, %p490
      %p493 = scmp.ne.s32.totalorder %s478, %s492
      %p494 = scmp.eq.s32.totalorder %s43, 0
      %p495 = por %p493, %p494
      %s497 = sadd.s32 %s496, 1
      %p500 = scmp.eq.s32.totalorder %s37, 1
      %p501 = scmp.ne.s32.totalorder %s496, %s498
      %p502 = scmp.eq.s32.totalorder %s37, 0
      %p503 = por %p501, %p502
      %p504 = scmp.ne.s32.totalorder %s496, %s498
      %p505 = scmp.eq.s32.totalorder %s42, 1
      %p506 = por %p504, %p505
      %p507 = scmp.ne.s32.totalorder %s498, %s499
      %p508 = scmp.eq.s32.totalorder %s42, 0
      %p509 = por %p507, %p508
      %p510 = scmp.ne.s32.totalorder %s498, %s499
      %p511 = scmp.eq.s32.totalorder %s43, 1
      %p512 = por %p510, %p511
      %p514 = scmp.ne.s32.totalorder %s499, %s513
      %p515 = scmp.eq.s32.totalorder %s43, 0
      %p516 = por %p514, %p515
      %s518 = sadd.s32 %s517, 1
      %p521 = scmp.eq.s32.totalorder %s37, 1
      %p522 = scmp.ne.s32.totalorder %s517, %s519
      %p523 = scmp.eq.s32.totalorder %s37, 0
      %p524 = por %p522, %p523
      %p525 = scmp.ne.s32.totalorder %s517, %s519
      %p526 = scmp.eq.s32.totalorder %s42, 1
      %p527 = por %p525, %p526
      %p528 = scmp.ne.s32.totalorder %s519, %s520
      %p529 = scmp.eq.s32.totalorder %s42, 0
      %p530 = por %p528, %p529
      %p531 = scmp.ne.s32.totalorder %s519, %s520
      %p532 = scmp.eq.s32.totalorder %s43, 1
      %p533 = por %p531, %p532
      %p535 = scmp.ne.s32.totalorder %s520, %s534
      %p536 = scmp.eq.s32.totalorder %s43, 0
      %p537 = por %p535, %p536
      %s539 = sadd.s32 %s538, 1
      %p542 = scmp.eq.s32.totalorder %s37, 1
      %p543 = scmp.ne.s32.totalorder %s538, %s540
      %p544 = scmp.eq.s32.totalorder %s37, 0
      %p545 = por %p543, %p544
      %p546 = scmp.ne.s32.totalorder %s538, %s540
      %p547 = scmp.eq.s32.totalorder %s42, 1
      %p548 = por %p546, %p547
      %p549 = scmp.ne.s32.totalorder %s540, %s541
      %p550 = scmp.eq.s32.totalorder %s42, 0
      %p551 = por %p549, %p550
      %p552 = scmp.ne.s32.totalorder %s540, %s541
      %p553 = scmp.eq.s32.totalorder %s43, 1
      %p554 = por %p552, %p553
      %p556 = scmp.ne.s32.totalorder %s541, %s555
      %p557 = scmp.eq.s32.totalorder %s43, 0
      %p558 = por %p556, %p557
      %s559 = ssub.s32 %s37, %s44
      %p560 = scmp.eq.s32.totalorder %s559, 0
      %s562 = sadd.s32 %s561, 1
      %s563 = scalar_select %p560, %s561, %s562
      %p566 = pneg %p560
      %p567 = scmp.eq.s32.totalorder %s37, 1
      %p568 = por %p566, %p567
      %p569 = scmp.ne.s32.totalorder %s561, %s564
      %p570 = scmp.eq.s32.totalorder %s37, 0
      %p571 = por %p569, %p570
      %p572 = scmp.ne.s32.totalorder %s561, %s564
      %p573 = scmp.eq.s32.totalorder %s42, 1
      %p574 = por %p572, %p573
      %p575 = scmp.ne.s32.totalorder %s564, %s565
      %p576 = scmp.eq.s32.totalorder %s42, 0
      %p577 = por %p575, %p576
      %p578 = scmp.ne.s32.totalorder %s564, %s565
      %p579 = scmp.eq.s32.totalorder %s43, 1
      %p580 = por %p578, %p579
      %p582 = scmp.ne.s32.totalorder %s565, %s581
      %p583 = scmp.eq.s32.totalorder %s43, 0
      %p584 = por %p582, %p583
      %p585 = scmp.le.s32.totalorder 1, %s37
      %p586 = scmp.lt.s32.totalorder %s37, 3
      %p587 = pnand %p585, %p586
      %p588 = pneg %p587
      // Predicated region
      $region9: #{forward.1} parent=5 // pred_check
        _
      $region10: #{forward.1} parent=5 // pred_check_branch
        %590 = sbr.rel (%p587) target = $region12
      $region11: #{forward.1} parent=5 // pred_region
        %s591 = ssub.s32 %s37, 1
        // Predicated region
        $region13: #{forward.1} parent=11 // pred_check
          %p592 = pneg %p110
        $region14: #{forward.1} parent=11 // pred_check_branch
          %594 = sbr.rel (%p592) target = $region16
        $region15: #{forward.1} parent=11 // pred_region
          _
        $region16: #{forward.1} parent=11 // pred_fallthru
          _
        // Predicated region
        $region17: #{forward.1} parent=11 // pred_check
          %p595 = pneg %p131
        $region18: #{forward.1} parent=11 // pred_check_branch
          %597 = sbr.rel (%p595) target = $region20
        $region19: #{forward.1} parent=11 // pred_region
          _
        $region20: #{forward.1} parent=11 // pred_fallthru
          _
        // Predicated region
        $region21: #{forward.1} parent=11 // pred_check
          %p598 = pneg %p152
        $region22: #{forward.1} parent=11 // pred_check_branch
          %600 = sbr.rel (%p598) target = $region24
        $region23: #{forward.1} parent=11 // pred_region
          %602 = vsyncadd [#allocation3], 0
          %s603 = sshll.u32 %s4, 4
          %s604 = int_to_ptr.hbm [resolvable:$true] %s603
          %s605 = sshll.u32 [#allocation2], 4
          %s606 = int_to_ptr.vmem [resolvable:$true] %s605
          %611 = dma.hbm_to_vmem [thread:$0]  %s604, 6144, %s606, [#allocation3], 192, 192, 12
        $region24: #{forward.1} parent=11 // pred_fallthru
          _
        // Predicated region
        $region25: #{forward.1} parent=11 // pred_check
          %p612 = pneg %p173
        $region26: #{forward.1} parent=11 // pred_check_branch
          %614 = sbr.rel (%p612) target = $region28
        $region27: #{forward.1} parent=11 // pred_region
          _
        $region28: #{forward.1} parent=11 // pred_fallthru
          _
        // Predicated region
        $region29: #{forward.1} parent=11 // pred_check
          %p615 = pneg %p194
        $region30: #{forward.1} parent=11 // pred_check_branch
          %617 = sbr.rel (%p615) target = $region32
        $region31: #{forward.1} parent=11 // pred_region
          %619 = vsyncadd [#allocation6], 0
          %s620 = sshll.u32 %s6, 4
          %s621 = int_to_ptr.hbm [resolvable:$true] %s620
          %s622 = sshll.u32 [#allocation5], 4
          %s623 = int_to_ptr.vmem [resolvable:$true] %s622
          %628 = dma.hbm_to_vmem [thread:$0]  %s621, 2048, %s623, [#allocation6], 64, 64, 4
        $region32: #{forward.1} parent=11 // pred_fallthru
          _
        // Predicated region
        $region33: #{forward.1} parent=11 // pred_check
          %p629 = pneg %p215
        $region34: #{forward.1} parent=11 // pred_check_branch
          %631 = sbr.rel (%p629) target = $region36
        $region35: #{forward.1} parent=11 // pred_region
          _
        $region36: #{forward.1} parent=11 // pred_fallthru
          _
        // Predicated region
        $region37: #{forward.1} parent=11 // pred_check
          %p632 = pneg %p236
        $region38: #{forward.1} parent=11 // pred_check_branch
          %634 = sbr.rel (%p632) target = $region40
        $region39: #{forward.1} parent=11 // pred_region
          _
        $region40: #{forward.1} parent=11 // pred_fallthru
          _
        // Predicated region
        $region41: #{forward.1} parent=11 // pred_check
          %p635 = pneg %p257
        $region42: #{forward.1} parent=11 // pred_check_branch
          %637 = sbr.rel (%p635) target = $region44
        $region43: #{forward.1} parent=11 // pred_region
          _
        $region44: #{forward.1} parent=11 // pred_fallthru
          _
        // Predicated region
        $region45: #{forward.1} parent=11 // pred_check
          %p638 = pneg %p278
        $region46: #{forward.1} parent=11 // pred_check_branch
          %640 = sbr.rel (%p638) target = $region48
        $region47: #{forward.1} parent=11 // pred_region
          _
        $region48: #{forward.1} parent=11 // pred_fallthru
          _
        // Predicated region
        $region49: #{forward.1} parent=11 // pred_check
          %p641 = pneg %p299
        $region50: #{forward.1} parent=11 // pred_check_branch
          %643 = sbr.rel (%p641) target = $region52
        $region51: #{forward.1} parent=11 // pred_region
          _
        $region52: #{forward.1} parent=11 // pred_fallthru
          _
        // Predicated region
        $region53: #{forward.1} parent=11 // pred_check
          %p644 = pneg %p320
        $region54: #{forward.1} parent=11 // pred_check_branch
          %646 = sbr.rel (%p644) target = $region56
        $region55: #{forward.1} parent=11 // pred_region
          %648 = vsyncadd [#allocation6], 0
          %s649 = sshll.u32 %s12, 4
          %s650 = int_to_ptr.hbm [resolvable:$true] %s649
          %s651 = sshll.u32 [#allocation7], 4
          %s652 = int_to_ptr.vmem [resolvable:$true] %s651
          %657 = dma.hbm_to_vmem [thread:$0]  %s650, 4096, %s652, [#allocation6], 64, 64, 4
        $region56: #{forward.1} parent=11 // pred_fallthru
          _
        // Predicated region
        $region57: #{forward.1} parent=11 // pred_check
          %p658 = pneg %p341
        $region58: #{forward.1} parent=11 // pred_check_branch
          %660 = sbr.rel (%p658) target = $region60
        $region59: #{forward.1} parent=11 // pred_region
          _
        $region60: #{forward.1} parent=11 // pred_fallthru
          _
        // Predicated region
        $region61: #{forward.1} parent=11 // pred_check
          %p661 = pneg %p362
        $region62: #{forward.1} parent=11 // pred_check_branch
          %663 = sbr.rel (%p661) target = $region64
        $region63: #{forward.1} parent=11 // pred_region
          _
        $region64: #{forward.1} parent=11 // pred_fallthru
          _
        // Predicated region
        $region65: #{forward.1} parent=11 // pred_check
          %p664 = pneg %p383
        $region66: #{forward.1} parent=11 // pred_check_branch
          %666 = sbr.rel (%p664) target = $region68
        $region67: #{forward.1} parent=11 // pred_region
          _
        $region68: #{forward.1} parent=11 // pred_fallthru
          _
        // Predicated region
        $region69: #{forward.1} parent=11 // pred_check
          %p667 = pneg %p404
        $region70: #{forward.1} parent=11 // pred_check_branch
          %669 = sbr.rel (%p667) target = $region72
        $region71: #{forward.1} parent=11 // pred_region
          _
        $region72: #{forward.1} parent=11 // pred_fallthru
          _
        // Predicated region
        $region73: #{forward.1} parent=11 // pred_check
          %p670 = pneg %p425
        $region74: #{forward.1} parent=11 // pred_check_branch
          %672 = sbr.rel (%p670) target = $region76
        $region75: #{forward.1} parent=11 // pred_region
          _
        $region76: #{forward.1} parent=11 // pred_fallthru
          _
        // Predicated region
        $region77: #{forward.1} parent=11 // pred_check
          %p673 = pneg %p446
        $region78: #{forward.1} parent=11 // pred_check_branch
          %675 = sbr.rel (%p673) target = $region80
        $region79: #{forward.1} parent=11 // pred_region
          %677 = vsyncadd [#allocation9], 0
          %s678 = sshll.u32 %s18, 4
          %s679 = int_to_ptr.hbm [resolvable:$true] %s678
          %s680 = sshll.u32 [#allocation8], 4
          %s681 = int_to_ptr.vmem [resolvable:$true] %s680
          %686 = dma.hbm_to_vmem [thread:$0]  %s679, 8192, %s681, [#allocation9], 512, 512, 32
        $region80: #{forward.1} parent=11 // pred_fallthru
          _
        // Predicated region
        $region81: #{forward.1} parent=11 // pred_check
          %p687 = pneg %p467
        $region82: #{forward.1} parent=11 // pred_check_branch
          %689 = sbr.rel (%p687) target = $region84
        $region83: #{forward.1} parent=11 // pred_region
          _
        $region84: #{forward.1} parent=11 // pred_fallthru
          _
        // Predicated region
        $region85: #{forward.1} parent=11 // pred_check
          %p690 = pneg %p488
        $region86: #{forward.1} parent=11 // pred_check_branch
          %692 = sbr.rel (%p690) target = $region88
        $region87: #{forward.1} parent=11 // pred_region
          %694 = vsyncadd [#allocation9], 0
          %s695 = sshll.u32 %s20, 4
          %s696 = int_to_ptr.hbm [resolvable:$true] %s695
          %s697 = sshll.u32 [#allocation10], 4
          %s698 = int_to_ptr.vmem [resolvable:$true] %s697
          %703 = dma.hbm_to_vmem [thread:$0]  %s696, 32768, %s698, [#allocation9], 256, 256, 16
        $region88: #{forward.1} parent=11 // pred_fallthru
          _
        // Predicated region
        $region89: #{forward.1} parent=11 // pred_check
          %p704 = pneg %p509
        $region90: #{forward.1} parent=11 // pred_check_branch
          %706 = sbr.rel (%p704) target = $region92
        $region91: #{forward.1} parent=11 // pred_region
          _
        $region92: #{forward.1} parent=11 // pred_fallthru
          _
        // Predicated region
        $region93: #{forward.1} parent=11 // pred_check
          %p707 = pneg %p530
        $region94: #{forward.1} parent=11 // pred_check_branch
          %709 = sbr.rel (%p707) target = $region96
        $region95: #{forward.1} parent=11 // pred_region
          %711 = vsyncadd [#allocation12], 0
          %s712 = sshll.u32 %s22, 4
          %s713 = int_to_ptr.hbm [resolvable:$true] %s712
          %s714 = sshll.u32 [#allocation11], 4
          %s715 = int_to_ptr.vmem [resolvable:$true] %s714
          %720 = dma.hbm_to_vmem [thread:$0]  %s713, 4096, %s715, [#allocation12], 64, 64, 4
        $region96: #{forward.1} parent=11 // pred_fallthru
          _
        // Predicated region
        $region97: #{forward.1} parent=11 // pred_check
          %p721 = pneg %p551
        $region98: #{forward.1} parent=11 // pred_check_branch
          %723 = sbr.rel (%p721) target = $region100
        $region99: #{forward.1} parent=11 // pred_region
          _
        $region100: #{forward.1} parent=11 // pred_fallthru
          _
      $region12: #{forward.1} parent=5 // pred_fallthru
        _
      %p724 = scmp.lt.s32.totalorder %s37, 2
      // Predicated region
      $region101: #{forward.1} parent=5 // pred_check
        %p725 = pneg %p724
      $region102: #{forward.1} parent=5 // pred_check_branch
        %727 = sbr.rel (%p725) target = $region104
      $region103: #{forward.1} parent=5 // pred_region
        // Predicated region
        $region105: #{forward.1} parent=103 // pred_check
          %p728 = pneg %p57
        $region106: #{forward.1} parent=103 // pred_check_branch
          %730 = sbr.rel (%p728) target = $region108
        $region107: #{forward.1} parent=103 // pred_region
          %p731 = scmp.lt.s32.totalorder %s37, 1
          %s732 = scalar_select %p731, %s37, 1
          %s733 = smul.addr %s732, 8
          %s734 = scalar_lea.vmem %s0, %s733
        $region108: #{forward.1} parent=103 // pred_fallthru
          _
        // Predicated region
        $region109: #{forward.1} parent=103 // pred_check
          %p735 = pneg %p83
        $region110: #{forward.1} parent=103 // pred_check_branch
          %737 = sbr.rel (%p735) target = $region112
        $region111: #{forward.1} parent=103 // pred_region
          %p738 = scmp.lt.s32.totalorder %s37, 1
          %s739 = scalar_select %p738, %s37, 1
          %s740 = scalar_lea.vmem %s1, %s739
        $region112: #{forward.1} parent=103 // pred_fallthru
          _
      $region104: #{forward.1} parent=5 // pred_fallthru
        _
      %p741 = scmp.le.s32.totalorder 1, %s37
      %p742 = scmp.lt.s32.totalorder %s37, 3
      %p743 = pnand %p741, %p742
      %p744 = pneg %p743
      // Predicated region
      $region113: #{forward.1} parent=5 // pred_check
        _
      $region114: #{forward.1} parent=5 // pred_check_branch
        %746 = sbr.rel (%p743) target = $region116
      $region115: #{forward.1} parent=5 // pred_region
        %s747 = ssub.s32 %s37, 1
        // Predicated region
        $region117: #{forward.1} parent=115 // pred_check
          %p748 = pneg %p152
        $region118: #{forward.1} parent=115 // pred_check_branch
          %750 = sbr.rel (%p748) target = $region120
        $region119: #{forward.1} parent=115 // pred_region
          %752 = dma.done [#allocation3], 6144
        $region120: #{forward.1} parent=115 // pred_fallthru
          _
        // Predicated region
        $region121: #{forward.1} parent=115 // pred_check
          %p753 = pneg %p194
        $region122: #{forward.1} parent=115 // pred_check_branch
          %755 = sbr.rel (%p753) target = $region124
        $region123: #{forward.1} parent=115 // pred_region
          %757 = dma.done [#allocation6], 2048
        $region124: #{forward.1} parent=115 // pred_fallthru
          _
        // Predicated region
        $region125: #{forward.1} parent=115 // pred_check
          %p758 = pneg %p320
        $region126: #{forward.1} parent=115 // pred_check_branch
          %760 = sbr.rel (%p758) target = $region128
        $region127: #{forward.1} parent=115 // pred_region
          %762 = dma.done [#allocation6], 4096
        $region128: #{forward.1} parent=115 // pred_fallthru
          _
        // Predicated region
        $region129: #{forward.1} parent=115 // pred_check
          %p763 = pneg %p446
        $region130: #{forward.1} parent=115 // pred_check_branch
          %765 = sbr.rel (%p763) target = $region132
        $region131: #{forward.1} parent=115 // pred_region
          %767 = dma.done [#allocation9], 8192
        $region132: #{forward.1} parent=115 // pred_fallthru
          _
        // Predicated region
        $region133: #{forward.1} parent=115 // pred_check
          %p768 = pneg %p488
        $region134: #{forward.1} parent=115 // pred_check_branch
          %770 = sbr.rel (%p768) target = $region136
        $region135: #{forward.1} parent=115 // pred_region
          %772 = dma.done [#allocation9], 32768
        $region136: #{forward.1} parent=115 // pred_fallthru
          _
        // Predicated region
        $region137: #{forward.1} parent=115 // pred_check
          %p773 = pneg %p530
        $region138: #{forward.1} parent=115 // pred_check_branch
          %775 = sbr.rel (%p773) target = $region140
        $region139: #{forward.1} parent=115 // pred_region
          %777 = dma.done [#allocation12], 4096
        $region140: #{forward.1} parent=115 // pred_fallthru
          _
        %p778 = scmp.lt.s32.totalorder %s42, 1
        %s779 = scalar_select %p778, %s42, 1
        %s780 = smul.addr %s779, 8
        %s781 = scalar_lea.vmem %s0, %s780
        %p782 = pneg %p63
        %p783 = pneg %p60
        %p784 = scmp.lt.s32.totalorder %s42, 1
        %s785 = scalar_select %p784, %s42, 1
        %s786 = scalar_lea.vmem %s1, %s785
        %p787 = pneg %p89
        %p788 = pneg %p86
        %p789 = pneg %p110
        %p790 = pneg %p107
        %p791 = pneg %p131
        %p792 = pneg %p128
        %p793 = pneg %p152
        %p794 = pneg %p149
        %p795 = pneg %p173
        %p796 = pneg %p170
        %p797 = pneg %p194
        %p798 = pneg %p191
        %p799 = pneg %p215
        %p800 = pneg %p212
        %p801 = pneg %p236
        %p802 = pneg %p233
        %p803 = pneg %p257
        %p804 = pneg %p254
        %p805 = pneg %p278
        %p806 = pneg %p275
        %p807 = pneg %p299
        %p808 = pneg %p296
        %p809 = pneg %p320
        %p810 = pneg %p317
        %p811 = pneg %p341
        %p812 = pneg %p338
        %p813 = pneg %p362
        %p814 = pneg %p359
        %p815 = pneg %p383
        %p816 = pneg %p380
        %p817 = pneg %p404
        %p818 = pneg %p401
        %p819 = pneg %p425
        %p820 = pneg %p422
        %p821 = pneg %p446
        %p822 = pneg %p443
        %p823 = pneg %p467
        %p824 = pneg %p464
        %p825 = pneg %p488
        %p826 = pneg %p485
        %p827 = pneg %p509
        %p828 = pneg %p506
        %p829 = pneg %p530
        %p830 = pneg %p527
        %p831 = pneg %p551
        %p832 = pneg %p548
        %p833 = pneg %p577
        %p834 = pneg %p574
        %s835 = sand.u32 %s564, 1
        %s836 = scalar_lea.sflag [#allocation4], %s835
        %s837 = sand.u32 %s564, 1
        %s838 = scalar_lea.vmem [#allocation13], %s837
        %p839 = scmp.lt.s32.totalorder %s42, 1
        %s840 = scalar_select %p839, %s42, 1
        %s841 = smul.addr %s840, 8
        %s842 = scalar_lea.vmem %s0, %s841
        %p843 = scmp.lt.s32.totalorder %s42, 1
        %s844 = scalar_select %p843, %s42, 1
        %s845 = scalar_lea.vmem %s1, %s844
        %v847 = vld [vmem:[%s842] sm:$0xff]
        %v848 = vld [vmem:[%s845] sm:$0x1]
        %v849 = vld [vmem:[%s2] sm:$0x1]
        %v850 = vld [vmem:[%s3] sm:$0x1]
        %851 = vadd.xlane.f32.xlu0 %v847
        %v852 = vpop.xlane.xlu0 %851
        %v853 = vrcp.pop 128.0
        %v854 = vmul.f32 128.0, %v853
        %v855 = vsub.f32 1.0, %v854
        %v856 = vmul.f32 %v853, %v855
        %v857 = vadd.f32 %v853, %v856
        %vm858 = vweird.f32 %v853
        %v859 = vsel %vm858, %v853, %v857
        %v860 = vmul.f32 %v852, %v859
        %v861 = vsub.f32 %v847, %v860
        %v862 = vmul.f32 %v861, %v861
        %863 = vadd.xlane.f32.xlu0 %v862
        %v864 = vpop.xlane.xlu0 %863
        %v865 = vmul.f32 %v864, %v859
        %v866 = vadd.f32 %v865, 1e-05
        %v867 = vrsqrt.pop %v866
        %v868 = vmul.f32 %v867, %v866
        %v869 = vmul.f32 %v868, %v867
        %v870 = vmul.f32 0.5, %v869
        %v871 = vsub.f32 1.5, %v870
        %v872 = vmul.f32 %v867, %v871
        %vm873 = vweird.f32 %v866
        %vm874 = vweird.f32 %v867
        %vm875 = vmor %vm873, %vm874
        %v876 = vsel %vm875, %v867, %v872
        %v877 = vmul.f32 %v861, %v876
        %v879 = vperm.slane %v849, 0
        %v881 = vmul.f32 %v877, %v879
        %v883 = vperm.slane %v850, 0
        %v885 = vadd.f32 %v881, %v883
        %v886 = vld [vmem:[#allocation2] sm:$0xff]
        %v887 = vld [vmem:[#allocation2 + $0x8] sm:$0xf]
        %v888 = vld [vmem:[#allocation2 + $0xc] sm:$0xff]
        %v889 = vld [vmem:[#allocation2 + $0x14] sm:$0xf]
        %v890 = vld [vmem:[#allocation2 + $0x18] sm:$0xff]
        %v891 = vld [vmem:[#allocation2 + $0x20] sm:$0xf]
        %v892 = vld [vmem:[#allocation2 + $0x24] sm:$0xff]
        %v893 = vld [vmem:[#allocation2 + $0x2c] sm:$0xf]
        %v894 = vld [vmem:[#allocation2 + $0x30] sm:$0xff]
        %v895 = vld [vmem:[#allocation2 + $0x38] sm:$0xf]
        %v896 = vld [vmem:[#allocation2 + $0x3c] sm:$0xff]
        %v897 = vld [vmem:[#allocation2 + $0x44] sm:$0xf]
        %v898 = vld [vmem:[#allocation2 + $0x48] sm:$0xff]
        %v899 = vld [vmem:[#allocation2 + $0x50] sm:$0xf]
        %v900 = vld [vmem:[#allocation2 + $0x54] sm:$0xff]
        %v901 = vld [vmem:[#allocation2 + $0x5c] sm:$0xf]
        %v902 = vld [vmem:[#allocation2 + $0x60] sm:$0xff]
        %v903 = vld [vmem:[#allocation2 + $0x68] sm:$0xf]
        %v904 = vld [vmem:[#allocation2 + $0x6c] sm:$0xff]
        %v905 = vld [vmem:[#allocation2 + $0x74] sm:$0xf]
        %v906 = vld [vmem:[#allocation2 + $0x78] sm:$0xff]
        %v907 = vld [vmem:[#allocation2 + $0x80] sm:$0xf]
        %v908 = vld [vmem:[#allocation2 + $0x84] sm:$0xff]
        %v909 = vld [vmem:[#allocation2 + $0x8c] sm:$0xf]
        %v910 = vld [vmem:[#allocation2 + $0x90] sm:$0xff]
        %v911 = vld [vmem:[#allocation2 + $0x98] sm:$0xf]
        %v912 = vld [vmem:[#allocation2 + $0x9c] sm:$0xff]
        %v913 = vld [vmem:[#allocation2 + $0xa4] sm:$0xf]
        %v914 = vld [vmem:[#allocation2 + $0xa8] sm:$0xff]
        %v915 = vld [vmem:[#allocation2 + $0xb0] sm:$0xf]
        %v916 = vld [vmem:[#allocation2 + $0xb4] sm:$0xff]
        %v917 = vld [vmem:[#allocation2 + $0xbc] sm:$0xf]
        %v918 = vld [vmem:[%s5] sm:$0x7]
        %v919 = vpack.c.bf16 %v885, %v885
        %v921 = vperm.slane %v918, 0
        %v922 = vperm.slane %v918, 1
        %v923 = vperm.slane %v918, 2
        %v959 = vunpack.c.l.b16 %v886
        %v960 = vunpack.c.h.b16 %v886
        %v961 = vunpack.c.l.b16 %v887
        %v962 = vunpack.c.l.b16 %v888
        %v963 = vunpack.c.h.b16 %v888
        %v964 = vunpack.c.l.b16 %v889
        %v965 = vunpack.c.l.b16 %v890
        %v966 = vunpack.c.h.b16 %v890
        %v967 = vunpack.c.l.b16 %v891
        %v968 = vunpack.c.l.b16 %v892
        %v969 = vunpack.c.h.b16 %v892
        %v970 = vunpack.c.l.b16 %v893
        %v971 = vunpack.c.l.b16 %v894
        %v972 = vunpack.c.h.b16 %v894
        %v973 = vunpack.c.l.b16 %v895
        %v974 = vunpack.c.l.b16 %v896
        %v975 = vunpack.c.h.b16 %v896
        %v976 = vunpack.c.l.b16 %v897
        %v977 = vunpack.c.l.b16 %v898
        %v978 = vunpack.c.h.b16 %v898
        %v979 = vunpack.c.l.b16 %v899
        %v980 = vunpack.c.l.b16 %v900
        %v981 = vunpack.c.h.b16 %v900
        %v982 = vunpack.c.l.b16 %v901
        %v983 = vunpack.c.l.b16 %v902
        %v984 = vunpack.c.h.b16 %v902
        %v985 = vunpack.c.l.b16 %v903
        %v986 = vunpack.c.l.b16 %v904
        %v987 = vunpack.c.h.b16 %v904
        %v988 = vunpack.c.l.b16 %v905
        %v989 = vunpack.c.l.b16 %v906
        %v990 = vunpack.c.h.b16 %v906
        %v991 = vunpack.c.l.b16 %v907
        %v992 = vunpack.c.l.b16 %v908
        %v993 = vunpack.c.h.b16 %v908
        %v994 = vunpack.c.l.b16 %v909
        %v995 = vunpack.c.l.b16 %v910
        %v996 = vunpack.c.h.b16 %v910
        %v997 = vunpack.c.l.b16 %v911
        %v998 = vunpack.c.l.b16 %v912
        %v999 = vunpack.c.h.b16 %v912
        %v1000 = vunpack.c.l.b16 %v913
        %v1001 = vunpack.c.l.b16 %v914
        %v1002 = vunpack.c.h.b16 %v914
        %v1003 = vunpack.c.l.b16 %v915
        %v1004 = vunpack.c.l.b16 %v916
        %v1005 = vunpack.c.h.b16 %v916
        %v1006 = vunpack.c.l.b16 %v917
        %v1007 = vpack.c.b16 %v962, %v959
        %v1008 = vpack.c.b16 %v963, %v960
        %v1009 = vpack.c.b16 %v964, %v961
        %v1010 = vpack.c.b16 %v968, %v965
        %v1011 = vpack.c.b16 %v969, %v966
        %v1012 = vpack.c.b16 %v970, %v967
        %v1013 = vpack.c.b16 %v974, %v971
        %v1014 = vpack.c.b16 %v975, %v972
        %v1015 = vpack.c.b16 %v976, %v973
        %v1016 = vpack.c.b16 %v980, %v977
        %v1017 = vpack.c.b16 %v981, %v978
        %v1018 = vpack.c.b16 %v982, %v979
        %v1019 = vpack.c.b16 %v986, %v983
        %v1020 = vpack.c.b16 %v987, %v984
        %v1021 = vpack.c.b16 %v988, %v985
        %v1022 = vpack.c.b16 %v992, %v989
        %v1023 = vpack.c.b16 %v993, %v990
        %v1024 = vpack.c.b16 %v994, %v991
        %v1025 = vpack.c.b16 %v998, %v995
        %v1026 = vpack.c.b16 %v999, %v996
        %v1027 = vpack.c.b16 %v1000, %v997
        %v1028 = vpack.c.b16 %v1004, %v1001
        %v1029 = vpack.c.b16 %v1005, %v1002
        %v1030 = vpack.c.b16 %v1006, %v1003
        %1055 = vmatpush.bf16.msra.mxu0 %v1028
        %1056 = vmatpush.bf16.msra.mxu0 %v1025
        %1057 = vmatpush.bf16.msra.mxu0 %v1022
        %1058 = vmatpush.bf16.msra.mxu0 %v1019
        %1059 = vmatpush.bf16.msra.mxu0 %v1016
        %1060 = vmatpush.bf16.msra.mxu0 %v1013
        %1061 = vmatpush.bf16.msra.mxu0 %v1010
        %1062 = vmatpush.bf16.msra.mxu0 %v1007
        %1063 = vmatmul.bf16.gmra.mxu0 %v919
        %v1064 = vpop.f32.mrf.mxu0
        %v1065 = vadd.f32 %v921, %v1064
        %v1066 = vpop.f32.mrf.mxu0
        %1067 = vdwg.mxu0
        %1068 = vmatpush.bf16.msra.mxu0 %v1029
        %1069 = vmatpush.bf16.msra.mxu0 %v1026
        %1070 = vmatpush.bf16.msra.mxu0 %v1023
        %1071 = vmatpush.bf16.msra.mxu0 %v1020
        %1072 = vmatpush.bf16.msra.mxu0 %v1017
        %1073 = vmatpush.bf16.msra.mxu0 %v1014
        %1074 = vmatpush.bf16.msra.mxu0 %v1011
        %1075 = vmatpush.bf16.msra.mxu0 %v1008
        %1076 = vmatmul.bf16.gmra.mxu0 %v919
        %v1077 = vpop.f32.mrf.mxu0
        %v1078 = vadd.f32 %v922, %v1077
        %v1079 = vpop.f32.mrf.mxu0
        %1080 = vdwg.mxu0
        %1081 = vmatpush.bf16.msra.mxu0 %v1030
        %1082 = vmatpush.bf16.msra.mxu0 %v1027
        %1083 = vmatpush.bf16.msra.mxu0 %v1024
        %1084 = vmatpush.bf16.msra.mxu0 %v1021
        %1085 = vmatpush.bf16.msra.mxu0 %v1018
        %1086 = vmatpush.bf16.msra.mxu0 %v1015
        %1087 = vmatpush.bf16.msra.mxu0 %v1012
        %1088 = vmatpush.bf16.msra.mxu0 %v1009
        %1089 = vmatmul.bf16.gmra.mxu0 %v919
        %v1090 = vpop.f32.mrf.mxu0
        %v1091 = vadd.f32 %v923, %v1090
        %v1092 = vpop.f32.mrf.mxu0
        %1093 = vdwg.mxu0
        %v1094 = vld [vmem:[%s7] sm:$0x1]
        %vm1095 = vcmask 523264
        %v1097 = vsel %vm1095, %v1065, 0
        %v1100 = vsel %vm1095, %v1078, 0
        %1102 = vmatpush.xpose.msra.mxu0 0.0
        %1103 = vmatpush.xpose.msra.mxu0 0.0
        %1104 = vmatpush.xpose.msra.mxu0 0.0
        %1105 = vmatpush.xpose.msra.mxu0 0.0
        %1106 = vmatpush.xpose.msra.mxu0 0.0
        %1107 = vmatpush.xpose.msra.mxu0 0.0
        %1108 = vmatpush.xpose.msra.mxu0 0.0
        %1109 = vmatpush.xpose.msra.mxu0 0.0
        %1110 = vmatpush.xpose.msra.mxu0 0.0
        %1111 = vmatpush.xpose.msra.mxu0 0.0
        %1112 = vmatpush.xpose.msra.mxu0 0.0
        %1113 = vmatpush.xpose.msra.mxu0 0.0
        %1114 = vmatpush.xpose.msra.mxu0 0.0
        %1115 = vmatpush.xpose.msra.mxu0 0.0
        %1116 = vmatpush.xpose.msra.mxu0 0.0
        %1117 = vmatpush.xpose.msra.mxu0 %v1100
        %1118 = vmatmul.f32.gmra.mxu0 %v1097
        %v1119 = vpop.f32.mrf.mxu0
        %v1120 = vadd.f32 0.0, %v1119
        %1121 = vdwg.mxu0
        %v1122 = vmul.f32 %v1120, 0.125
        %v1124 = vperm.slane %v848, 0
        %v1126 = vadd.f32 %v1122, %v1124
        %vm1127 = vcmask 64512
        %v1128 = vsel %vm1127, %v1126, -inf
        %1129 = vmax.xlane.f32.xlu0 %v1128
        %v1130 = vpop.xlane.xlu0 %1129
        %v1131 = vsub.f32 %v1126, %v1130
        %v1132 = vmul.f32 %v1131, 1.442695
        %v1133 = vpow.pop %v1132
        %v1134 = vsel %vm1127, %v1133, 0.0
        %1135 = vadd.xlane.f32.xlu0 %v1134
        %v1136 = vpop.xlane.xlu0 %1135
        %v1137 = vrcp.pop %v1136
        %v1138 = vmul.f32 %v1133, %v1137
        %v1140 = vsel %vm1127, %v1138, 0
        %1142 = vmatpush.msra.mxu0 0.0
        %1143 = vmatpush.msra.mxu0 0.0
        %1144 = vmatpush.msra.mxu0 0.0
        %1145 = vmatpush.msra.mxu0 0.0
        %1146 = vmatpush.msra.mxu0 0.0
        %1147 = vmatpush.msra.mxu0 0.0
        %1148 = vmatpush.msra.mxu0 0.0
        %1149 = vmatpush.msra.mxu0 0.0
        %1150 = vmatpush.msra.mxu0 0.0
        %1151 = vmatpush.msra.mxu0 0.0
        %1152 = vmatpush.msra.mxu0 0.0
        %1153 = vmatpush.msra.mxu0 0.0
        %1154 = vmatpush.msra.mxu0 0.0
        %1155 = vmatpush.msra.mxu0 0.0
        %1156 = vmatpush.msra.mxu0 0.0
        %1157 = vmatpush.msra.mxu0 %v1091
        %1158 = vmatmul.f32.gmra.mxu0 %v1140
        %v1159 = vpop.f32.mrf.mxu0
        %v1160 = vadd.f32 0.0, %v1159
        %1161 = vdwg.mxu0
        %v1162 = vld [vmem:[#allocation5] sm:$0xf]
        %v1163 = vld [vmem:[#allocation5 + $0x4] sm:$0xf]
        %v1164 = vld [vmem:[#allocation5 + $0x8] sm:$0xf]
        %v1165 = vld [vmem:[#allocation5 + $0xc] sm:$0xf]
        %v1166 = vld [vmem:[#allocation5 + $0x10] sm:$0xf]
        %v1167 = vld [vmem:[#allocation5 + $0x14] sm:$0xf]
        %v1168 = vld [vmem:[#allocation5 + $0x18] sm:$0xf]
        %v1169 = vld [vmem:[#allocation5 + $0x1c] sm:$0xf]
        %v1170 = vpack.c.bf16 %v1160, %v1160
        %v1179 = vunpack.c.l.b16 %v1162
        %v1180 = vunpack.c.l.b16 %v1163
        %v1181 = vunpack.c.l.b16 %v1164
        %v1182 = vunpack.c.l.b16 %v1165
        %v1183 = vunpack.c.l.b16 %v1166
        %v1184 = vunpack.c.l.b16 %v1167
        %v1185 = vunpack.c.l.b16 %v1168
        %v1186 = vunpack.c.l.b16 %v1169
        %v1187 = vpack.c.b16 %v1180, %v1179
        %v1188 = vpack.c.b16 %v1182, %v1181
        %v1189 = vpack.c.b16 %v1184, %v1183
        %v1190 = vpack.c.b16 %v1186, %v1185
        %v1196 = vsel %vm1095, %v1170, 0
        %1198 = vmatpush.bf16.msra.mxu0 0
        %1199 = vmatpush.bf16.msra.mxu0 0
        %1200 = vmatpush.bf16.msra.mxu0 0
        %1201 = vmatpush.bf16.msra.mxu0 0
        %1202 = vmatpush.bf16.msra.mxu0 %v1190
        %1203 = vmatpush.bf16.msra.mxu0 %v1189
        %1204 = vmatpush.bf16.msra.mxu0 %v1188
        %1205 = vmatpush.bf16.msra.mxu0 %v1187
        %1206 = vmatmul.bf16.gmra.mxu0 %v1196
        %v1207 = vpop.f32.mrf.mxu0
        %v1208 = vadd.f32 0.0, %v1207
        %v1209 = vpop.f32.mrf.mxu0
        %1210 = vdwg.mxu0
        %v1212 = vperm.slane %v1094, 0
        %v1214 = vadd.f32 %v1212, %v1208
        %1215 = vrot.lane.b32.xlu0 %v1065, 64
        %v1216 = vpop.permute.xlu0 %1215
        %1217 = vrot.lane.b32.xlu0 %v1078, 64
        %v1218 = vpop.permute.xlu0 %1217
        %v1219 = vsel %vm1095, %v1216, 0
        %v1221 = vsel %vm1095, %v1218, 0
        %1223 = vmatpush.xpose.msra.mxu0 0.0
        %1224 = vmatpush.xpose.msra.mxu0 0.0
        %1225 = vmatpush.xpose.msra.mxu0 0.0
        %1226 = vmatpush.xpose.msra.mxu0 0.0
        %1227 = vmatpush.xpose.msra.mxu0 0.0
        %1228 = vmatpush.xpose.msra.mxu0 0.0
        %1229 = vmatpush.xpose.msra.mxu0 0.0
        %1230 = vmatpush.xpose.msra.mxu0 0.0
        %1231 = vmatpush.xpose.msra.mxu0 0.0
        %1232 = vmatpush.xpose.msra.mxu0 0.0
        %1233 = vmatpush.xpose.msra.mxu0 0.0
        %1234 = vmatpush.xpose.msra.mxu0 0.0
        %1235 = vmatpush.xpose.msra.mxu0 0.0
        %1236 = vmatpush.xpose.msra.mxu0 0.0
        %1237 = vmatpush.xpose.msra.mxu0 0.0
        %1238 = vmatpush.xpose.msra.mxu0 %v1221
        %1239 = vmatmul.f32.gmra.mxu0 %v1219
        %v1240 = vpop.f32.mrf.mxu0
        %v1241 = vadd.f32 0.0, %v1240
        %1242 = vdwg.mxu0
        %v1243 = vmul.f32 %v1241, 0.125
        %v1244 = vadd.f32 %v1243, %v1124
        %v1245 = vsel %vm1127, %v1244, -inf
        %1246 = vmax.xlane.f32.xlu0 %v1245
        %v1247 = vpop.xlane.xlu0 %1246
        %v1248 = vsub.f32 %v1244, %v1247
        %v1249 = vmul.f32 %v1248, 1.442695
        %v1250 = vpow.pop %v1249
        %v1251 = vsel %vm1127, %v1250, 0.0
        %1252 = vadd.xlane.f32.xlu0 %v1251
        %v1253 = vpop.xlane.xlu0 %1252
        %v1254 = vrcp.pop %v1253
        %v1255 = vmul.f32 %v1250, %v1254
        %1257 = vrot.lane.b32.xlu0 %v1091, 64
        %v1258 = vpop.permute.xlu0 %1257
        %v1261 = vsel %vm1127, %v1255, 0
        %1263 = vmatpush.msra.mxu0 0.0
        %1264 = vmatpush.msra.mxu0 0.0
        %1265 = vmatpush.msra.mxu0 0.0
        %1266 = vmatpush.msra.mxu0 0.0
        %1267 = vmatpush.msra.mxu0 0.0
        %1268 = vmatpush.msra.mxu0 0.0
        %1269 = vmatpush.msra.mxu0 0.0
        %1270 = vmatpush.msra.mxu0 0.0
        %1271 = vmatpush.msra.mxu0 0.0
        %1272 = vmatpush.msra.mxu0 0.0
        %1273 = vmatpush.msra.mxu0 0.0
        %1274 = vmatpush.msra.mxu0 0.0
        %1275 = vmatpush.msra.mxu0 0.0
        %1276 = vmatpush.msra.mxu0 0.0
        %1277 = vmatpush.msra.mxu0 0.0
        %1278 = vmatpush.msra.mxu0 %v1258
        %1279 = vmatmul.f32.gmra.mxu0 %v1261
        %v1280 = vpop.f32.mrf.mxu0
        %v1281 = vadd.f32 0.0, %v1280
        %1282 = vdwg.mxu0
        %v1283 = vld [vmem:[#allocation5 + $0x20] sm:$0xf]
        %v1284 = vld [vmem:[#allocation5 + $0x24] sm:$0xf]
        %v1285 = vld [vmem:[#allocation5 + $0x28] sm:$0xf]
        %v1286 = vld [vmem:[#allocation5 + $0x2c] sm:$0xf]
        %v1287 = vld [vmem:[#allocation5 + $0x30] sm:$0xf]
        %v1288 = vld [vmem:[#allocation5 + $0x34] sm:$0xf]
        %v1289 = vld [vmem:[#allocation5 + $0x38] sm:$0xf]
        %v1290 = vld [vmem:[#allocation5 + $0x3c] sm:$0xf]
        %v1291 = vpack.c.bf16 %v1281, %v1281
        %v1300 = vunpack.c.l.b16 %v1283
        %v1301 = vunpack.c.l.b16 %v1284
        %v1302 = vunpack.c.l.b16 %v1285
        %v1303 = vunpack.c.l.b16 %v1286
        %v1304 = vunpack.c.l.b16 %v1287
        %v1305 = vunpack.c.l.b16 %v1288
        %v1306 = vunpack.c.l.b16 %v1289
        %v1307 = vunpack.c.l.b16 %v1290
        %v1308 = vpack.c.b16 %v1301, %v1300
        %v1309 = vpack.c.b16 %v1303, %v1302
        %v1310 = vpack.c.b16 %v1305, %v1304
        %v1311 = vpack.c.b16 %v1307, %v1306
        %v1317 = vsel %vm1095, %v1291, 0
        %1319 = vmatpush.bf16.msra.mxu0 0
        %1320 = vmatpush.bf16.msra.mxu0 0
        %1321 = vmatpush.bf16.msra.mxu0 0
        %1322 = vmatpush.bf16.msra.mxu0 0
        %1323 = vmatpush.bf16.msra.mxu0 %v1311
        %1324 = vmatpush.bf16.msra.mxu0 %v1310
        %1325 = vmatpush.bf16.msra.mxu0 %v1309
        %1326 = vmatpush.bf16.msra.mxu0 %v1308
        %1327 = vmatmul.bf16.gmra.mxu0 %v1317
        %v1328 = vpop.f32.mrf.mxu0
        %v1329 = vadd.f32 0.0, %v1328
        %v1330 = vpop.f32.mrf.mxu0
        %1331 = vdwg.mxu0
        %v1332 = vadd.f32 %v1214, %v1329
        %v1333 = vadd.f32 %v885, %v1332
        %v1334 = vld [vmem:[%s8] sm:$0x1]
        %v1335 = vld [vmem:[%s9] sm:$0x1]
        %1336 = vadd.xlane.f32.xlu0 %v1333
        %v1337 = vpop.xlane.xlu0 %1336
        %v1338 = vmul.f32 %v1337, %v859
        %v1339 = vsub.f32 %v1333, %v1338
        %v1340 = vmul.f32 %v1339, %v1339
        %1341 = vadd.xlane.f32.xlu0 %v1340
        %v1342 = vpop.xlane.xlu0 %1341
        %v1343 = vmul.f32 %v1342, %v859
        %v1344 = vadd.f32 %v1343, 1e-05
        %v1345 = vrsqrt.pop %v1344
        %v1346 = vmul.f32 %v1345, %v1344
        %v1347 = vmul.f32 %v1346, %v1345
        %v1348 = vmul.f32 0.5, %v1347
        %v1349 = vsub.f32 1.5, %v1348
        %v1350 = vmul.f32 %v1345, %v1349
        %vm1351 = vweird.f32 %v1344
        %vm1352 = vweird.f32 %v1345
        %vm1353 = vmor %vm1351, %vm1352
        %v1354 = vsel %vm1353, %v1345, %v1350
        %v1355 = vmul.f32 %v1339, %v1354
        %v1357 = vperm.slane %v1334, 0
        %v1359 = vmul.f32 %v1355, %v1357
        %v1361 = vperm.slane %v1335, 0
        %v1363 = vadd.f32 %v1359, %v1361
        %v1364 = vld [vmem:[%s10] sm:$0xff]
        %v1365 = vld [vmem:[%s10 + $0x8] sm:$0xff]
        %v1366 = vld [vmem:[%s10 + $0x10] sm:$0xff]
        %v1367 = vld [vmem:[%s10 + $0x18] sm:$0xff]
        %v1368 = vld [vmem:[%s10 + $0x20] sm:$0xff]
        %v1369 = vld [vmem:[%s10 + $0x28] sm:$0xff]
        %v1370 = vld [vmem:[%s10 + $0x30] sm:$0xff]
        %v1371 = vld [vmem:[%s10 + $0x38] sm:$0xff]
        %v1372 = vld [vmem:[%s10 + $0x40] sm:$0xff]
        %v1373 = vld [vmem:[%s10 + $0x48] sm:$0xff]
        %v1374 = vld [vmem:[%s10 + $0x50] sm:$0xff]
        %v1375 = vld [vmem:[%s10 + $0x58] sm:$0xff]
        %v1376 = vld [vmem:[%s10 + $0x60] sm:$0xff]
        %v1377 = vld [vmem:[%s10 + $0x68] sm:$0xff]
        %v1378 = vld [vmem:[%s10 + $0x70] sm:$0xff]
        %v1379 = vld [vmem:[%s10 + $0x78] sm:$0xff]
        %v1380 = vld [vmem:[%s11] sm:$0x3]
        %v1381 = vpack.c.bf16 %v1363, %v1363
        %v1383 = vperm.slane %v1380, 0
        %v1384 = vperm.slane %v1380, 1
        %v1403 = vunpack.c.l.b16 %v1364
        %v1404 = vunpack.c.h.b16 %v1364
        %v1405 = vunpack.c.l.b16 %v1365
        %v1406 = vunpack.c.h.b16 %v1365
        %v1407 = vunpack.c.l.b16 %v1366
        %v1408 = vunpack.c.h.b16 %v1366
        %v1409 = vunpack.c.l.b16 %v1367
        %v1410 = vunpack.c.h.b16 %v1367
        %v1411 = vunpack.c.l.b16 %v1368
        %v1412 = vunpack.c.h.b16 %v1368
        %v1413 = vunpack.c.l.b16 %v1369
        %v1414 = vunpack.c.h.b16 %v1369
        %v1415 = vunpack.c.l.b16 %v1370
        %v1416 = vunpack.c.h.b16 %v1370
        %v1417 = vunpack.c.l.b16 %v1371
        %v1418 = vunpack.c.h.b16 %v1371
        %v1419 = vunpack.c.l.b16 %v1372
        %v1420 = vunpack.c.h.b16 %v1372
        %v1421 = vunpack.c.l.b16 %v1373
        %v1422 = vunpack.c.h.b16 %v1373
        %v1423 = vunpack.c.l.b16 %v1374
        %v1424 = vunpack.c.h.b16 %v1374
        %v1425 = vunpack.c.l.b16 %v1375
        %v1426 = vunpack.c.h.b16 %v1375
        %v1427 = vunpack.c.l.b16 %v1376
        %v1428 = vunpack.c.h.b16 %v1376
        %v1429 = vunpack.c.l.b16 %v1377
        %v1430 = vunpack.c.h.b16 %v1377
        %v1431 = vunpack.c.l.b16 %v1378
        %v1432 = vunpack.c.h.b16 %v1378
        %v1433 = vunpack.c.l.b16 %v1379
        %v1434 = vunpack.c.h.b16 %v1379
        %v1435 = vpack.c.b16 %v1405, %v1403
        %v1436 = vpack.c.b16 %v1406, %v1404
        %v1437 = vpack.c.b16 %v1409, %v1407
        %v1438 = vpack.c.b16 %v1410, %v1408
        %v1439 = vpack.c.b16 %v1413, %v1411
        %v1440 = vpack.c.b16 %v1414, %v1412
        %v1441 = vpack.c.b16 %v1417, %v1415
        %v1442 = vpack.c.b16 %v1418, %v1416
        %v1443 = vpack.c.b16 %v1421, %v1419
        %v1444 = vpack.c.b16 %v1422, %v1420
        %v1445 = vpack.c.b16 %v1425, %v1423
        %v1446 = vpack.c.b16 %v1426, %v1424
        %v1447 = vpack.c.b16 %v1429, %v1427
        %v1448 = vpack.c.b16 %v1430, %v1428
        %v1449 = vpack.c.b16 %v1433, %v1431
        %v1450 = vpack.c.b16 %v1434, %v1432
        %1467 = vmatpush.bf16.msra.mxu0 %v1449
        %1468 = vmatpush.bf16.msra.mxu0 %v1447
        %1469 = vmatpush.bf16.msra.mxu0 %v1445
        %1470 = vmatpush.bf16.msra.mxu0 %v1443
        %1471 = vmatpush.bf16.msra.mxu0 %v1441
        %1472 = vmatpush.bf16.msra.mxu0 %v1439
        %1473 = vmatpush.bf16.msra.mxu0 %v1437
        %1474 = vmatpush.bf16.msra.mxu0 %v1435
        %1475 = vmatmul.bf16.gmra.mxu0 %v1381
        %v1476 = vpop.f32.mrf.mxu0
        %v1477 = vadd.f32 %v1383, %v1476
        %v1478 = vpop.f32.mrf.mxu0
        %1479 = vdwg.mxu0
        %1480 = vmatpush.bf16.msra.mxu0 %v1450
        %1481 = vmatpush.bf16.msra.mxu0 %v1448
        %1482 = vmatpush.bf16.msra.mxu0 %v1446
        %1483 = vmatpush.bf16.msra.mxu0 %v1444
        %1484 = vmatpush.bf16.msra.mxu0 %v1442
        %1485 = vmatpush.bf16.msra.mxu0 %v1440
        %1486 = vmatpush.bf16.msra.mxu0 %v1438
        %1487 = vmatpush.bf16.msra.mxu0 %v1436
        %1488 = vmatmul.bf16.gmra.mxu0 %v1381
        %v1489 = vpop.f32.mrf.mxu0
        %v1490 = vadd.f32 %v1384, %v1489
        %v1491 = vpop.f32.mrf.mxu0
        %1492 = vdwg.mxu0
        %v1493 = vmul.f32 %v1477, 0.5
        %v1494 = vmul.f32 %v1490, 0.5
        %v1495 = vmul.f32 %v1477, 0.044715
        %v1496 = vmul.f32 %v1490, 0.044715
        %v1497 = vmul.f32 %v1495, %v1477
        %v1498 = vmul.f32 %v1496, %v1490
        %v1499 = vmul.f32 %v1497, %v1477
        %v1500 = vmul.f32 %v1498, %v1490
        %v1501 = vadd.f32 %v1477, %v1499
        %v1502 = vadd.f32 %v1490, %v1500
        %v1503 = vmul.f32 %v1501, 0.7978846
        %v1504 = vmul.f32 %v1502, 0.7978846
        %v1505 = vtanh.pop %v1503
        %v1506 = vtanh.pop %v1504
        %v1507 = vadd.f32 %v1505, 1.0
        %v1508 = vadd.f32 %v1506, 1.0
        %v1509 = vmul.f32 %v1493, %v1507
        %v1510 = vmul.f32 %v1494, %v1508
        %v1511 = vld [vmem:[#allocation7] sm:$0xf]
        %v1512 = vld [vmem:[#allocation7 + $0x4] sm:$0xf]
        %v1513 = vld [vmem:[#allocation7 + $0x8] sm:$0xf]
        %v1514 = vld [vmem:[#allocation7 + $0xc] sm:$0xf]
        %v1515 = vld [vmem:[#allocation7 + $0x10] sm:$0xf]
        %v1516 = vld [vmem:[#allocation7 + $0x14] sm:$0xf]
        %v1517 = vld [vmem:[#allocation7 + $0x18] sm:$0xf]
        %v1518 = vld [vmem:[#allocation7 + $0x1c] sm:$0xf]
        %v1519 = vld [vmem:[#allocation7 + $0x20] sm:$0xf]
        %v1520 = vld [vmem:[#allocation7 + $0x24] sm:$0xf]
        %v1521 = vld [vmem:[#allocation7 + $0x28] sm:$0xf]
        %v1522 = vld [vmem:[#allocation7 + $0x2c] sm:$0xf]
        %v1523 = vld [vmem:[#allocation7 + $0x30] sm:$0xf]
        %v1524 = vld [vmem:[#allocation7 + $0x34] sm:$0xf]
        %v1525 = vld [vmem:[#allocation7 + $0x38] sm:$0xf]
        %v1526 = vld [vmem:[#allocation7 + $0x3c] sm:$0xf]
        %v1527 = vld [vmem:[#allocation7 + $0x40] sm:$0xf]
        %v1528 = vld [vmem:[#allocation7 + $0x44] sm:$0xf]
        %v1529 = vld [vmem:[#allocation7 + $0x48] sm:$0xf]
        %v1530 = vld [vmem:[#allocation7 + $0x4c] sm:$0xf]
        %v1531 = vld [vmem:[#allocation7 + $0x50] sm:$0xf]
        %v1532 = vld [vmem:[#allocation7 + $0x54] sm:$0xf]
        %v1533 = vld [vmem:[#allocation7 + $0x58] sm:$0xf]
        %v1534 = vld [vmem:[#allocation7 + $0x5c] sm:$0xf]
        %v1535 = vld [vmem:[#allocation7 + $0x60] sm:$0xf]
        %v1536 = vld [vmem:[#allocation7 + $0x64] sm:$0xf]
        %v1537 = vld [vmem:[#allocation7 + $0x68] sm:$0xf]
        %v1538 = vld [vmem:[#allocation7 + $0x6c] sm:$0xf]
        %v1539 = vld [vmem:[#allocation7 + $0x70] sm:$0xf]
        %v1540 = vld [vmem:[#allocation7 + $0x74] sm:$0xf]
        %v1541 = vld [vmem:[#allocation7 + $0x78] sm:$0xf]
        %v1542 = vld [vmem:[#allocation7 + $0x7c] sm:$0xf]
        %v1543 = vld [vmem:[%s13] sm:$0x1]
        %v1544 = vpack.c.bf16 %v1509, %v1509
        %v1545 = vpack.c.bf16 %v1510, %v1510
        %v1547 = vperm.slane %v1543, 0
        %v1581 = vunpack.c.l.b16 %v1511
        %v1582 = vunpack.c.l.b16 %v1512
        %v1583 = vunpack.c.l.b16 %v1513
        %v1584 = vunpack.c.l.b16 %v1514
        %v1585 = vunpack.c.l.b16 %v1515
        %v1586 = vunpack.c.l.b16 %v1516
        %v1587 = vunpack.c.l.b16 %v1517
        %v1588 = vunpack.c.l.b16 %v1518
        %v1589 = vunpack.c.l.b16 %v1519
        %v1590 = vunpack.c.l.b16 %v1520
        %v1591 = vunpack.c.l.b16 %v1521
        %v1592 = vunpack.c.l.b16 %v1522
        %v1593 = vunpack.c.l.b16 %v1523
        %v1594 = vunpack.c.l.b16 %v1524
        %v1595 = vunpack.c.l.b16 %v1525
        %v1596 = vunpack.c.l.b16 %v1526
        %v1597 = vunpack.c.l.b16 %v1527
        %v1598 = vunpack.c.l.b16 %v1528
        %v1599 = vunpack.c.l.b16 %v1529
        %v1600 = vunpack.c.l.b16 %v1530
        %v1601 = vunpack.c.l.b16 %v1531
        %v1602 = vunpack.c.l.b16 %v1532
        %v1603 = vunpack.c.l.b16 %v1533
        %v1604 = vunpack.c.l.b16 %v1534
        %v1605 = vunpack.c.l.b16 %v1535
        %v1606 = vunpack.c.l.b16 %v1536
        %v1607 = vunpack.c.l.b16 %v1537
        %v1608 = vunpack.c.l.b16 %v1538
        %v1609 = vunpack.c.l.b16 %v1539
        %v1610 = vunpack.c.l.b16 %v1540
        %v1611 = vunpack.c.l.b16 %v1541
        %v1612 = vunpack.c.l.b16 %v1542
        %v1613 = vpack.c.b16 %v1582, %v1581
        %v1614 = vpack.c.b16 %v1584, %v1583
        %v1615 = vpack.c.b16 %v1586, %v1585
        %v1616 = vpack.c.b16 %v1588, %v1587
        %v1617 = vpack.c.b16 %v1590, %v1589
        %v1618 = vpack.c.b16 %v1592, %v1591
        %v1619 = vpack.c.b16 %v1594, %v1593
        %v1620 = vpack.c.b16 %v1596, %v1595
        %v1621 = vpack.c.b16 %v1598, %v1597
        %v1622 = vpack.c.b16 %v1600, %v1599
        %v1623 = vpack.c.b16 %v1602, %v1601
        %v1624 = vpack.c.b16 %v1604, %v1603
        %v1625 = vpack.c.b16 %v1606, %v1605
        %v1626 = vpack.c.b16 %v1608, %v1607
        %v1627 = vpack.c.b16 %v1610, %v1609
        %v1628 = vpack.c.b16 %v1612, %v1611
        %1645 = vmatpush.bf16.msra.mxu0 %v1620
        %1646 = vmatpush.bf16.msra.mxu0 %v1619
        %1647 = vmatpush.bf16.msra.mxu0 %v1618
        %1648 = vmatpush.bf16.msra.mxu0 %v1617
        %1649 = vmatpush.bf16.msra.mxu0 %v1616
        %1650 = vmatpush.bf16.msra.mxu0 %v1615
        %1651 = vmatpush.bf16.msra.mxu0 %v1614
        %1652 = vmatpush.bf16.msra.mxu0 %v1613
        %1653 = vmatmul.bf16.gmra.mxu0 %v1544
        %v1654 = vpop.f32.mrf.mxu0
        %v1655 = vadd.f32 %v1547, %v1654
        %v1656 = vpop.f32.mrf.mxu0
        %1657 = vdwg.mxu0
        %1658 = vmatpush.bf16.msra.mxu0 %v1628
        %1659 = vmatpush.bf16.msra.mxu0 %v1627
        %1660 = vmatpush.bf16.msra.mxu0 %v1626
        %1661 = vmatpush.bf16.msra.mxu0 %v1625
        %1662 = vmatpush.bf16.msra.mxu0 %v1624
        %1663 = vmatpush.bf16.msra.mxu0 %v1623
        %1664 = vmatpush.bf16.msra.mxu0 %v1622
        %1665 = vmatpush.bf16.msra.mxu0 %v1621
        %1666 = vmatmul.bf16.gmra.mxu0 %v1545
        %v1667 = vpop.f32.mrf.mxu0
        %v1668 = vadd.f32 %v1655, %v1667
        %v1669 = vpop.f32.mrf.mxu0
        %1670 = vdwg.mxu0
        %v1671 = vadd.f32 %v1363, %v1668
        %v1672 = vld [vmem:[%s14] sm:$0x1]
        %v1673 = vld [vmem:[%s15] sm:$0x1]
        %1674 = vadd.xlane.f32.xlu0 %v1671
        %v1675 = vpop.xlane.xlu0 %1674
        %v1676 = vmul.f32 %v1675, %v859
        %v1677 = vsub.f32 %v1671, %v1676
        %v1678 = vmul.f32 %v1677, %v1677
        %1679 = vadd.xlane.f32.xlu0 %v1678
        %v1680 = vpop.xlane.xlu0 %1679
        %v1681 = vmul.f32 %v1680, %v859
        %v1682 = vadd.f32 %v1681, 1e-05
        %v1683 = vrsqrt.pop %v1682
        %v1684 = vmul.f32 %v1683, %v1682
        %v1685 = vmul.f32 %v1684, %v1683
        %v1686 = vmul.f32 0.5, %v1685
        %v1687 = vsub.f32 1.5, %v1686
        %v1688 = vmul.f32 %v1683, %v1687
        %vm1689 = vweird.f32 %v1682
        %vm1690 = vweird.f32 %v1683
        %vm1691 = vmor %vm1689, %vm1690
        %v1692 = vsel %vm1691, %v1683, %v1688
        %v1693 = vmul.f32 %v1677, %v1692
        %v1695 = vperm.slane %v1672, 0
        %v1697 = vmul.f32 %v1693, %v1695
        %v1699 = vperm.slane %v1673, 0
        %v1701 = vadd.f32 %v1697, %v1699
        %s1702 = scalar_lea.vmem [#allocation2], 192
        %v1703 = vld [vmem:[%s1702] sm:$0xff]
        %v1704 = vld [vmem:[%s1702 + $0x8] sm:$0xf]
        %v1705 = vld [vmem:[%s1702 + $0xc] sm:$0xff]
        %v1706 = vld [vmem:[%s1702 + $0x14] sm:$0xf]
        %v1707 = vld [vmem:[%s1702 + $0x18] sm:$0xff]
        %v1708 = vld [vmem:[%s1702 + $0x20] sm:$0xf]
        %v1709 = vld [vmem:[%s1702 + $0x24] sm:$0xff]
        %v1710 = vld [vmem:[%s1702 + $0x2c] sm:$0xf]
        %v1711 = vld [vmem:[%s1702 + $0x30] sm:$0xff]
        %v1712 = vld [vmem:[%s1702 + $0x38] sm:$0xf]
        %v1713 = vld [vmem:[%s1702 + $0x3c] sm:$0xff]
        %v1714 = vld [vmem:[%s1702 + $0x44] sm:$0xf]
        %v1715 = vld [vmem:[%s1702 + $0x48] sm:$0xff]
        %v1716 = vld [vmem:[%s1702 + $0x50] sm:$0xf]
        %v1717 = vld [vmem:[%s1702 + $0x54] sm:$0xff]
        %v1718 = vld [vmem:[%s1702 + $0x5c] sm:$0xf]
        %v1719 = vld [vmem:[%s1702 + $0x60] sm:$0xff]
        %v1720 = vld [vmem:[%s1702 + $0x68] sm:$0xf]
        %v1721 = vld [vmem:[%s1702 + $0x6c] sm:$0xff]
        %v1722 = vld [vmem:[%s1702 + $0x74] sm:$0xf]
        %v1723 = vld [vmem:[%s1702 + $0x78] sm:$0xff]
        %v1724 = vld [vmem:[%s1702 + $0x80] sm:$0xf]
        %v1725 = vld [vmem:[%s1702 + $0x84] sm:$0xff]
        %v1726 = vld [vmem:[%s1702 + $0x8c] sm:$0xf]
        %v1727 = vld [vmem:[%s1702 + $0x90] sm:$0xff]
        %v1728 = vld [vmem:[%s1702 + $0x98] sm:$0xf]
        %v1729 = vld [vmem:[%s1702 + $0x9c] sm:$0xff]
        %v1730 = vld [vmem:[%s1702 + $0xa4] sm:$0xf]
        %v1731 = vld [vmem:[%s1702 + $0xa8] sm:$0xff]
        %v1732 = vld [vmem:[%s1702 + $0xb0] sm:$0xf]
        %v1733 = vld [vmem:[%s1702 + $0xb4] sm:$0xff]
        %v1734 = vld [vmem:[%s1702 + $0xbc] sm:$0xf]
        %s1735 = scalar_lea.vmem %s5, 3
        %v1736 = vld [vmem:[%s1735] sm:$0x7]
        %v1737 = vpack.c.bf16 %v1701, %v1701
        %v1739 = vperm.slane %v1736, 0
        %v1740 = vperm.slane %v1736, 1
        %v1741 = vperm.slane %v1736, 2
        %v1777 = vunpack.c.l.b16 %v1703
        %v1778 = vunpack.c.h.b16 %v1703
        %v1779 = vunpack.c.l.b16 %v1704
        %v1780 = vunpack.c.l.b16 %v1705
        %v1781 = vunpack.c.h.b16 %v1705
        %v1782 = vunpack.c.l.b16 %v1706
        %v1783 = vunpack.c.l.b16 %v1707
        %v1784 = vunpack.c.h.b16 %v1707
        %v1785 = vunpack.c.l.b16 %v1708
        %v1786 = vunpack.c.l.b16 %v1709
        %v1787 = vunpack.c.h.b16 %v1709
        %v1788 = vunpack.c.l.b16 %v1710
        %v1789 = vunpack.c.l.b16 %v1711
        %v1790 = vunpack.c.h.b16 %v1711
        %v1791 = vunpack.c.l.b16 %v1712
        %v1792 = vunpack.c.l.b16 %v1713
        %v1793 = vunpack.c.h.b16 %v1713
        %v1794 = vunpack.c.l.b16 %v1714
        %v1795 = vunpack.c.l.b16 %v1715
        %v1796 = vunpack.c.h.b16 %v1715
        %v1797 = vunpack.c.l.b16 %v1716
        %v1798 = vunpack.c.l.b16 %v1717
        %v1799 = vunpack.c.h.b16 %v1717
        %v1800 = vunpack.c.l.b16 %v1718
        %v1801 = vunpack.c.l.b16 %v1719
        %v1802 = vunpack.c.h.b16 %v1719
        %v1803 = vunpack.c.l.b16 %v1720
        %v1804 = vunpack.c.l.b16 %v1721
        %v1805 = vunpack.c.h.b16 %v1721
        %v1806 = vunpack.c.l.b16 %v1722
        %v1807 = vunpack.c.l.b16 %v1723
        %v1808 = vunpack.c.h.b16 %v1723
        %v1809 = vunpack.c.l.b16 %v1724
        %v1810 = vunpack.c.l.b16 %v1725
        %v1811 = vunpack.c.h.b16 %v1725
        %v1812 = vunpack.c.l.b16 %v1726
        %v1813 = vunpack.c.l.b16 %v1727
        %v1814 = vunpack.c.h.b16 %v1727
        %v1815 = vunpack.c.l.b16 %v1728
        %v1816 = vunpack.c.l.b16 %v1729
        %v1817 = vunpack.c.h.b16 %v1729
        %v1818 = vunpack.c.l.b16 %v1730
        %v1819 = vunpack.c.l.b16 %v1731
        %v1820 = vunpack.c.h.b16 %v1731
        %v1821 = vunpack.c.l.b16 %v1732
        %v1822 = vunpack.c.l.b16 %v1733
        %v1823 = vunpack.c.h.b16 %v1733
        %v1824 = vunpack.c.l.b16 %v1734
        %v1825 = vpack.c.b16 %v1780, %v1777
        %v1826 = vpack.c.b16 %v1781, %v1778
        %v1827 = vpack.c.b16 %v1782, %v1779
        %v1828 = vpack.c.b16 %v1786, %v1783
        %v1829 = vpack.c.b16 %v1787, %v1784
        %v1830 = vpack.c.b16 %v1788, %v1785
        %v1831 = vpack.c.b16 %v1792, %v1789
        %v1832 = vpack.c.b16 %v1793, %v1790
        %v1833 = vpack.c.b16 %v1794, %v1791
        %v1834 = vpack.c.b16 %v1798, %v1795
        %v1835 = vpack.c.b16 %v1799, %v1796
        %v1836 = vpack.c.b16 %v1800, %v1797
        %v1837 = vpack.c.b16 %v1804, %v1801
        %v1838 = vpack.c.b16 %v1805, %v1802
        %v1839 = vpack.c.b16 %v1806, %v1803
        %v1840 = vpack.c.b16 %v1810, %v1807
        %v1841 = vpack.c.b16 %v1811, %v1808
        %v1842 = vpack.c.b16 %v1812, %v1809
        %v1843 = vpack.c.b16 %v1816, %v1813
        %v1844 = vpack.c.b16 %v1817, %v1814
        %v1845 = vpack.c.b16 %v1818, %v1815
        %v1846 = vpack.c.b16 %v1822, %v1819
        %v1847 = vpack.c.b16 %v1823, %v1820
        %v1848 = vpack.c.b16 %v1824, %v1821
        %1873 = vmatpush.bf16.msra.mxu0 %v1846
        %1874 = vmatpush.bf16.msra.mxu0 %v1843
        %1875 = vmatpush.bf16.msra.mxu0 %v1840
        %1876 = vmatpush.bf16.msra.mxu0 %v1837
        %1877 = vmatpush.bf16.msra.mxu0 %v1834
        %1878 = vmatpush.bf16.msra.mxu0 %v1831
        %1879 = vmatpush.bf16.msra.mxu0 %v1828
        %1880 = vmatpush.bf16.msra.mxu0 %v1825
        %1881 = vmatmul.bf16.gmra.mxu0 %v1737
        %v1882 = vpop.f32.mrf.mxu0
        %v1883 = vadd.f32 %v1739, %v1882
        %v1884 = vpop.f32.mrf.mxu0
        %1885 = vdwg.mxu0
        %1886 = vmatpush.bf16.msra.mxu0 %v1847
        %1887 = vmatpush.bf16.msra.mxu0 %v1844
        %1888 = vmatpush.bf16.msra.mxu0 %v1841
        %1889 = vmatpush.bf16.msra.mxu0 %v1838
        %1890 = vmatpush.bf16.msra.mxu0 %v1835
        %1891 = vmatpush.bf16.msra.mxu0 %v1832
        %1892 = vmatpush.bf16.msra.mxu0 %v1829
        %1893 = vmatpush.bf16.msra.mxu0 %v1826
        %1894 = vmatmul.bf16.gmra.mxu0 %v1737
        %v1895 = vpop.f32.mrf.mxu0
        %v1896 = vadd.f32 %v1740, %v1895
        %v1897 = vpop.f32.mrf.mxu0
        %1898 = vdwg.mxu0
        %1899 = vmatpush.bf16.msra.mxu0 %v1848
        %1900 = vmatpush.bf16.msra.mxu0 %v1845
        %1901 = vmatpush.bf16.msra.mxu0 %v1842
        %1902 = vmatpush.bf16.msra.mxu0 %v1839
        %1903 = vmatpush.bf16.msra.mxu0 %v1836
        %1904 = vmatpush.bf16.msra.mxu0 %v1833
        %1905 = vmatpush.bf16.msra.mxu0 %v1830
        %1906 = vmatpush.bf16.msra.mxu0 %v1827
        %1907 = vmatmul.bf16.gmra.mxu0 %v1737
        %v1908 = vpop.f32.mrf.mxu0
        %v1909 = vadd.f32 %v1741, %v1908
        %v1910 = vpop.f32.mrf.mxu0
        %1911 = vdwg.mxu0
        %s1912 = scalar_lea.vmem %s7, 1
        %v1913 = vld [vmem:[%s1912] sm:$0x1]
        %v1915 = vsel %vm1095, %v1883, 0
        %v1918 = vsel %vm1095, %v1896, 0
        %1920 = vmatpush.xpose.msra.mxu0 0.0
        %1921 = vmatpush.xpose.msra.mxu0 0.0
        %1922 = vmatpush.xpose.msra.mxu0 0.0
        %1923 = vmatpush.xpose.msra.mxu0 0.0
        %1924 = vmatpush.xpose.msra.mxu0 0.0
        %1925 = vmatpush.xpose.msra.mxu0 0.0
        %1926 = vmatpush.xpose.msra.mxu0 0.0
        %1927 = vmatpush.xpose.msra.mxu0 0.0
        %1928 = vmatpush.xpose.msra.mxu0 0.0
        %1929 = vmatpush.xpose.msra.mxu0 0.0
        %1930 = vmatpush.xpose.msra.mxu0 0.0
        %1931 = vmatpush.xpose.msra.mxu0 0.0
        %1932 = vmatpush.xpose.msra.mxu0 0.0
        %1933 = vmatpush.xpose.msra.mxu0 0.0
        %1934 = vmatpush.xpose.msra.mxu0 0.0
        %1935 = vmatpush.xpose.msra.mxu0 %v1918
        %1936 = vmatmul.f32.gmra.mxu0 %v1915
        %v1937 = vpop.f32.mrf.mxu0
        %v1938 = vadd.f32 0.0, %v1937
        %1939 = vdwg.mxu0
        %v1940 = vmul.f32 %v1938, 0.125
        %v1941 = vadd.f32 %v1940, %v1124
        %v1942 = vsel %vm1127, %v1941, -inf
        %1943 = vmax.xlane.f32.xlu0 %v1942
        %v1944 = vpop.xlane.xlu0 %1943
        %v1945 = vsub.f32 %v1941, %v1944
        %v1946 = vmul.f32 %v1945, 1.442695
        %v1947 = vpow.pop %v1946
        %v1948 = vsel %vm1127, %v1947, 0.0
        %1949 = vadd.xlane.f32.xlu0 %v1948
        %v1950 = vpop.xlane.xlu0 %1949
        %v1951 = vrcp.pop %v1950
        %v1952 = vmul.f32 %v1947, %v1951
        %v1954 = vsel %vm1127, %v1952, 0
        %1956 = vmatpush.msra.mxu0 0.0
        %1957 = vmatpush.msra.mxu0 0.0
        %1958 = vmatpush.msra.mxu0 0.0
        %1959 = vmatpush.msra.mxu0 0.0
        %1960 = vmatpush.msra.mxu0 0.0
        %1961 = vmatpush.msra.mxu0 0.0
        %1962 = vmatpush.msra.mxu0 0.0
        %1963 = vmatpush.msra.mxu0 0.0
        %1964 = vmatpush.msra.mxu0 0.0
        %1965 = vmatpush.msra.mxu0 0.0
        %1966 = vmatpush.msra.mxu0 0.0
        %1967 = vmatpush.msra.mxu0 0.0
        %1968 = vmatpush.msra.mxu0 0.0
        %1969 = vmatpush.msra.mxu0 0.0
        %1970 = vmatpush.msra.mxu0 0.0
        %1971 = vmatpush.msra.mxu0 %v1909
        %1972 = vmatmul.f32.gmra.mxu0 %v1954
        %v1973 = vpop.f32.mrf.mxu0
        %v1974 = vadd.f32 0.0, %v1973
        %1975 = vdwg.mxu0
        %s1976 = scalar_lea.vmem [#allocation5], 64
        %v1977 = vld [vmem:[%s1976] sm:$0xf]
        %v1978 = vld [vmem:[%s1976 + $0x4] sm:$0xf]
        %v1979 = vld [vmem:[%s1976 + $0x8] sm:$0xf]
        %v1980 = vld [vmem:[%s1976 + $0xc] sm:$0xf]
        %v1981 = vld [vmem:[%s1976 + $0x10] sm:$0xf]
        %v1982 = vld [vmem:[%s1976 + $0x14] sm:$0xf]
        %v1983 = vld [vmem:[%s1976 + $0x18] sm:$0xf]
        %v1984 = vld [vmem:[%s1976 + $0x1c] sm:$0xf]
        %v1985 = vpack.c.bf16 %v1974, %v1974
        %v1994 = vunpack.c.l.b16 %v1977
        %v1995 = vunpack.c.l.b16 %v1978
        %v1996 = vunpack.c.l.b16 %v1979
        %v1997 = vunpack.c.l.b16 %v1980
        %v1998 = vunpack.c.l.b16 %v1981
        %v1999 = vunpack.c.l.b16 %v1982
        %v2000 = vunpack.c.l.b16 %v1983
        %v2001 = vunpack.c.l.b16 %v1984
        %v2002 = vpack.c.b16 %v1995, %v1994
        %v2003 = vpack.c.b16 %v1997, %v1996
        %v2004 = vpack.c.b16 %v1999, %v1998
        %v2005 = vpack.c.b16 %v2001, %v2000
        %v2011 = vsel %vm1095, %v1985, 0
        %2013 = vmatpush.bf16.msra.mxu0 0
        %2014 = vmatpush.bf16.msra.mxu0 0
        %2015 = vmatpush.bf16.msra.mxu0 0
        %2016 = vmatpush.bf16.msra.mxu0 0
        %2017 = vmatpush.bf16.msra.mxu0 %v2005
        %2018 = vmatpush.bf16.msra.mxu0 %v2004
        %2019 = vmatpush.bf16.msra.mxu0 %v2003
        %2020 = vmatpush.bf16.msra.mxu0 %v2002
        %2021 = vmatmul.bf16.gmra.mxu0 %v2011
        %v2022 = vpop.f32.mrf.mxu0
        %v2023 = vadd.f32 0.0, %v2022
        %v2024 = vpop.f32.mrf.mxu0
        %2025 = vdwg.mxu0
        %v2027 = vperm.slane %v1913, 0
        %v2029 = vadd.f32 %v2027, %v2023
        %2030 = vrot.lane.b32.xlu0 %v1883, 64
        %v2031 = vpop.permute.xlu0 %2030
        %2032 = vrot.lane.b32.xlu0 %v1896, 64
        %v2033 = vpop.permute.xlu0 %2032
        %v2034 = vsel %vm1095, %v2031, 0
        %v2036 = vsel %vm1095, %v2033, 0
        %2038 = vmatpush.xpose.msra.mxu0 0.0
        %2039 = vmatpush.xpose.msra.mxu0 0.0
        %2040 = vmatpush.xpose.msra.mxu0 0.0
        %2041 = vmatpush.xpose.msra.mxu0 0.0
        %2042 = vmatpush.xpose.msra.mxu0 0.0
        %2043 = vmatpush.xpose.msra.mxu0 0.0
        %2044 = vmatpush.xpose.msra.mxu0 0.0
        %2045 = vmatpush.xpose.msra.mxu0 0.0
        %2046 = vmatpush.xpose.msra.mxu0 0.0
        %2047 = vmatpush.xpose.msra.mxu0 0.0
        %2048 = vmatpush.xpose.msra.mxu0 0.0
        %2049 = vmatpush.xpose.msra.mxu0 0.0
        %2050 = vmatpush.xpose.msra.mxu0 0.0
        %2051 = vmatpush.xpose.msra.mxu0 0.0
        %2052 = vmatpush.xpose.msra.mxu0 0.0
        %2053 = vmatpush.xpose.msra.mxu0 %v2036
        %2054 = vmatmul.f32.gmra.mxu0 %v2034
        %v2055 = vpop.f32.mrf.mxu0
        %v2056 = vadd.f32 0.0, %v2055
        %2057 = vdwg.mxu0
        %v2058 = vmul.f32 %v2056, 0.125
        %v2059 = vadd.f32 %v2058, %v1124
        %v2060 = vsel %vm1127, %v2059, -inf
        %2061 = vmax.xlane.f32.xlu0 %v2060
        %v2062 = vpop.xlane.xlu0 %2061
        %v2063 = vsub.f32 %v2059, %v2062
        %v2064 = vmul.f32 %v2063, 1.442695
        %v2065 = vpow.pop %v2064
        %v2066 = vsel %vm1127, %v2065, 0.0
        %2067 = vadd.xlane.f32.xlu0 %v2066
        %v2068 = vpop.xlane.xlu0 %2067
        %v2069 = vrcp.pop %v2068
        %v2070 = vmul.f32 %v2065, %v2069
        %2072 = vrot.lane.b32.xlu0 %v1909, 64
        %v2073 = vpop.permute.xlu0 %2072
        %v2076 = vsel %vm1127, %v2070, 0
        %2078 = vmatpush.msra.mxu0 0.0
        %2079 = vmatpush.msra.mxu0 0.0
        %2080 = vmatpush.msra.mxu0 0.0
        %2081 = vmatpush.msra.mxu0 0.0
        %2082 = vmatpush.msra.mxu0 0.0
        %2083 = vmatpush.msra.mxu0 0.0
        %2084 = vmatpush.msra.mxu0 0.0
        %2085 = vmatpush.msra.mxu0 0.0
        %2086 = vmatpush.msra.mxu0 0.0
        %2087 = vmatpush.msra.mxu0 0.0
        %2088 = vmatpush.msra.mxu0 0.0
        %2089 = vmatpush.msra.mxu0 0.0
        %2090 = vmatpush.msra.mxu0 0.0
        %2091 = vmatpush.msra.mxu0 0.0
        %2092 = vmatpush.msra.mxu0 0.0
        %2093 = vmatpush.msra.mxu0 %v2073
        %2094 = vmatmul.f32.gmra.mxu0 %v2076
        %v2095 = vpop.f32.mrf.mxu0
        %v2096 = vadd.f32 0.0, %v2095
        %2097 = vdwg.mxu0
        %v2098 = vld [vmem:[%s1976 + $0x20] sm:$0xf]
        %v2099 = vld [vmem:[%s1976 + $0x24] sm:$0xf]
        %v2100 = vld [vmem:[%s1976 + $0x28] sm:$0xf]
        %v2101 = vld [vmem:[%s1976 + $0x2c] sm:$0xf]
        %v2102 = vld [vmem:[%s1976 + $0x30] sm:$0xf]
        %v2103 = vld [vmem:[%s1976 + $0x34] sm:$0xf]
        %v2104 = vld [vmem:[%s1976 + $0x38] sm:$0xf]
        %v2105 = vld [vmem:[%s1976 + $0x3c] sm:$0xf]
        %v2106 = vpack.c.bf16 %v2096, %v2096
        %v2115 = vunpack.c.l.b16 %v2098
        %v2116 = vunpack.c.l.b16 %v2099
        %v2117 = vunpack.c.l.b16 %v2100
        %v2118 = vunpack.c.l.b16 %v2101
        %v2119 = vunpack.c.l.b16 %v2102
        %v2120 = vunpack.c.l.b16 %v2103
        %v2121 = vunpack.c.l.b16 %v2104
        %v2122 = vunpack.c.l.b16 %v2105
        %v2123 = vpack.c.b16 %v2116, %v2115
        %v2124 = vpack.c.b16 %v2118, %v2117
        %v2125 = vpack.c.b16 %v2120, %v2119
        %v2126 = vpack.c.b16 %v2122, %v2121
        %v2132 = vsel %vm1095, %v2106, 0
        %2134 = vmatpush.bf16.msra.mxu0 0
        %2135 = vmatpush.bf16.msra.mxu0 0
        %2136 = vmatpush.bf16.msra.mxu0 0
        %2137 = vmatpush.bf16.msra.mxu0 0
        %2138 = vmatpush.bf16.msra.mxu0 %v2126
        %2139 = vmatpush.bf16.msra.mxu0 %v2125
        %2140 = vmatpush.bf16.msra.mxu0 %v2124
        %2141 = vmatpush.bf16.msra.mxu0 %v2123
        %2142 = vmatmul.bf16.gmra.mxu0 %v2132
        %v2143 = vpop.f32.mrf.mxu0
        %v2144 = vadd.f32 0.0, %v2143
        %v2145 = vpop.f32.mrf.mxu0
        %2146 = vdwg.mxu0
        %v2147 = vadd.f32 %v2029, %v2144
        %v2148 = vadd.f32 %v1701, %v2147
        %s2149 = scalar_lea.vmem %s8, 1
        %v2150 = vld [vmem:[%s2149] sm:$0x1]
        %s2151 = scalar_lea.vmem %s9, 1
        %v2152 = vld [vmem:[%s2151] sm:$0x1]
        %2153 = vadd.xlane.f32.xlu0 %v2148
        %v2154 = vpop.xlane.xlu0 %2153
        %v2155 = vmul.f32 %v2154, %v859
        %v2156 = vsub.f32 %v2148, %v2155
        %v2157 = vmul.f32 %v2156, %v2156
        %2158 = vadd.xlane.f32.xlu0 %v2157
        %v2159 = vpop.xlane.xlu0 %2158
        %v2160 = vmul.f32 %v2159, %v859
        %v2161 = vadd.f32 %v2160, 1e-05
        %v2162 = vrsqrt.pop %v2161
        %v2163 = vmul.f32 %v2162, %v2161
        %v2164 = vmul.f32 %v2163, %v2162
        %v2165 = vmul.f32 0.5, %v2164
        %v2166 = vsub.f32 1.5, %v2165
        %v2167 = vmul.f32 %v2162, %v2166
        %vm2168 = vweird.f32 %v2161
        %vm2169 = vweird.f32 %v2162
        %vm2170 = vmor %vm2168, %vm2169
        %v2171 = vsel %vm2170, %v2162, %v2167
        %v2172 = vmul.f32 %v2156, %v2171
        %v2174 = vperm.slane %v2150, 0
        %v2176 = vmul.f32 %v2172, %v2174
        %v2178 = vperm.slane %v2152, 0
        %v2180 = vadd.f32 %v2176, %v2178
        %s2181 = scalar_lea.vmem %s10, 128
        %v2182 = vld [vmem:[%s2181] sm:$0xff]
        %v2183 = vld [vmem:[%s2181 + $0x8] sm:$0xff]
        %v2184 = vld [vmem:[%s2181 + $0x10] sm:$0xff]
        %v2185 = vld [vmem:[%s2181 + $0x18] sm:$0xff]
        %v2186 = vld [vmem:[%s2181 + $0x20] sm:$0xff]
        %v2187 = vld [vmem:[%s2181 + $0x28] sm:$0xff]
        %v2188 = vld [vmem:[%s2181 + $0x30] sm:$0xff]
        %v2189 = vld [vmem:[%s2181 + $0x38] sm:$0xff]
        %v2190 = vld [vmem:[%s2181 + $0x40] sm:$0xff]
        %v2191 = vld [vmem:[%s2181 + $0x48] sm:$0xff]
        %v2192 = vld [vmem:[%s2181 + $0x50] sm:$0xff]
        %v2193 = vld [vmem:[%s2181 + $0x58] sm:$0xff]
        %v2194 = vld [vmem:[%s2181 + $0x60] sm:$0xff]
        %v2195 = vld [vmem:[%s2181 + $0x68] sm:$0xff]
        %v2196 = vld [vmem:[%s2181 + $0x70] sm:$0xff]
        %v2197 = vld [vmem:[%s2181 + $0x78] sm:$0xff]
        %s2198 = scalar_lea.vmem %s11, 2
        %v2199 = vld [vmem:[%s2198] sm:$0x3]
        %v2200 = vpack.c.bf16 %v2180, %v2180
        %v2202 = vperm.slane %v2199, 0
        %v2203 = vperm.slane %v2199, 1
        %v2222 = vunpack.c.l.b16 %v2182
        %v2223 = vunpack.c.h.b16 %v2182
        %v2224 = vunpack.c.l.b16 %v2183
        %v2225 = vunpack.c.h.b16 %v2183
        %v2226 = vunpack.c.l.b16 %v2184
        %v2227 = vunpack.c.h.b16 %v2184
        %v2228 = vunpack.c.l.b16 %v2185
        %v2229 = vunpack.c.h.b16 %v2185
        %v2230 = vunpack.c.l.b16 %v2186
        %v2231 = vunpack.c.h.b16 %v2186
        %v2232 = vunpack.c.l.b16 %v2187
        %v2233 = vunpack.c.h.b16 %v2187
        %v2234 = vunpack.c.l.b16 %v2188
        %v2235 = vunpack.c.h.b16 %v2188
        %v2236 = vunpack.c.l.b16 %v2189
        %v2237 = vunpack.c.h.b16 %v2189
        %v2238 = vunpack.c.l.b16 %v2190
        %v2239 = vunpack.c.h.b16 %v2190
        %v2240 = vunpack.c.l.b16 %v2191
        %v2241 = vunpack.c.h.b16 %v2191
        %v2242 = vunpack.c.l.b16 %v2192
        %v2243 = vunpack.c.h.b16 %v2192
        %v2244 = vunpack.c.l.b16 %v2193
        %v2245 = vunpack.c.h.b16 %v2193
        %v2246 = vunpack.c.l.b16 %v2194
        %v2247 = vunpack.c.h.b16 %v2194
        %v2248 = vunpack.c.l.b16 %v2195
        %v2249 = vunpack.c.h.b16 %v2195
        %v2250 = vunpack.c.l.b16 %v2196
        %v2251 = vunpack.c.h.b16 %v2196
        %v2252 = vunpack.c.l.b16 %v2197
        %v2253 = vunpack.c.h.b16 %v2197
        %v2254 = vpack.c.b16 %v2224, %v2222
        %v2255 = vpack.c.b16 %v2225, %v2223
        %v2256 = vpack.c.b16 %v2228, %v2226
        %v2257 = vpack.c.b16 %v2229, %v2227
        %v2258 = vpack.c.b16 %v2232, %v2230
        %v2259 = vpack.c.b16 %v2233, %v2231
        %v2260 = vpack.c.b16 %v2236, %v2234
        %v2261 = vpack.c.b16 %v2237, %v2235
        %v2262 = vpack.c.b16 %v2240, %v2238
        %v2263 = vpack.c.b16 %v2241, %v2239
        %v2264 = vpack.c.b16 %v2244, %v2242
        %v2265 = vpack.c.b16 %v2245, %v2243
        %v2266 = vpack.c.b16 %v2248, %v2246
        %v2267 = vpack.c.b16 %v2249, %v2247
        %v2268 = vpack.c.b16 %v2252, %v2250
        %v2269 = vpack.c.b16 %v2253, %v2251
        %2286 = vmatpush.bf16.msra.mxu0 %v2268
        %2287 = vmatpush.bf16.msra.mxu0 %v2266
        %2288 = vmatpush.bf16.msra.mxu0 %v2264
        %2289 = vmatpush.bf16.msra.mxu0 %v2262
        %2290 = vmatpush.bf16.msra.mxu0 %v2260
        %2291 = vmatpush.bf16.msra.mxu0 %v2258
        %2292 = vmatpush.bf16.msra.mxu0 %v2256
        %2293 = vmatpush.bf16.msra.mxu0 %v2254
        %2294 = vmatmul.bf16.gmra.mxu0 %v2200
        %v2295 = vpop.f32.mrf.mxu0
        %v2296 = vadd.f32 %v2202, %v2295
        %v2297 = vpop.f32.mrf.mxu0
        %2298 = vdwg.mxu0
        %2299 = vmatpush.bf16.msra.mxu0 %v2269
        %2300 = vmatpush.bf16.msra.mxu0 %v2267
        %2301 = vmatpush.bf16.msra.mxu0 %v2265
        %2302 = vmatpush.bf16.msra.mxu0 %v2263
        %2303 = vmatpush.bf16.msra.mxu0 %v2261
        %2304 = vmatpush.bf16.msra.mxu0 %v2259
        %2305 = vmatpush.bf16.msra.mxu0 %v2257
        %2306 = vmatpush.bf16.msra.mxu0 %v2255
        %2307 = vmatmul.bf16.gmra.mxu0 %v2200
        %v2308 = vpop.f32.mrf.mxu0
        %v2309 = vadd.f32 %v2203, %v2308
        %v2310 = vpop.f32.mrf.mxu0
        %2311 = vdwg.mxu0
        %v2312 = vmul.f32 %v2296, 0.5
        %v2313 = vmul.f32 %v2309, 0.5
        %v2314 = vmul.f32 %v2296, 0.044715
        %v2315 = vmul.f32 %v2309, 0.044715
        %v2316 = vmul.f32 %v2314, %v2296
        %v2317 = vmul.f32 %v2315, %v2309
        %v2318 = vmul.f32 %v2316, %v2296
        %v2319 = vmul.f32 %v2317, %v2309
        %v2320 = vadd.f32 %v2296, %v2318
        %v2321 = vadd.f32 %v2309, %v2319
        %v2322 = vmul.f32 %v2320, 0.7978846
        %v2323 = vmul.f32 %v2321, 0.7978846
        %v2324 = vtanh.pop %v2322
        %v2325 = vtanh.pop %v2323
        %v2326 = vadd.f32 %v2324, 1.0
        %v2327 = vadd.f32 %v2325, 1.0
        %v2328 = vmul.f32 %v2312, %v2326
        %v2329 = vmul.f32 %v2313, %v2327
        %s2330 = scalar_lea.vmem [#allocation7], 128
        %v2331 = vld [vmem:[%s2330] sm:$0xf]
        %v2332 = vld [vmem:[%s2330 + $0x4] sm:$0xf]
        %v2333 = vld [vmem:[%s2330 + $0x8] sm:$0xf]
        %v2334 = vld [vmem:[%s2330 + $0xc] sm:$0xf]
        %v2335 = vld [vmem:[%s2330 + $0x10] sm:$0xf]
        %v2336 = vld [vmem:[%s2330 + $0x14] sm:$0xf]
        %v2337 = vld [vmem:[%s2330 + $0x18] sm:$0xf]
        %v2338 = vld [vmem:[%s2330 + $0x1c] sm:$0xf]
        %v2339 = vld [vmem:[%s2330 + $0x20] sm:$0xf]
        %v2340 = vld [vmem:[%s2330 + $0x24] sm:$0xf]
        %v2341 = vld [vmem:[%s2330 + $0x28] sm:$0xf]
        %v2342 = vld [vmem:[%s2330 + $0x2c] sm:$0xf]
        %v2343 = vld [vmem:[%s2330 + $0x30] sm:$0xf]
        %v2344 = vld [vmem:[%s2330 + $0x34] sm:$0xf]
        %v2345 = vld [vmem:[%s2330 + $0x38] sm:$0xf]
        %v2346 = vld [vmem:[%s2330 + $0x3c] sm:$0xf]
        %v2347 = vld [vmem:[%s2330 + $0x40] sm:$0xf]
        %v2348 = vld [vmem:[%s2330 + $0x44] sm:$0xf]
        %v2349 = vld [vmem:[%s2330 + $0x48] sm:$0xf]
        %v2350 = vld [vmem:[%s2330 + $0x4c] sm:$0xf]
        %v2351 = vld [vmem:[%s2330 + $0x50] sm:$0xf]
        %v2352 = vld [vmem:[%s2330 + $0x54] sm:$0xf]
        %v2353 = vld [vmem:[%s2330 + $0x58] sm:$0xf]
        %v2354 = vld [vmem:[%s2330 + $0x5c] sm:$0xf]
        %v2355 = vld [vmem:[%s2330 + $0x60] sm:$0xf]
        %v2356 = vld [vmem:[%s2330 + $0x64] sm:$0xf]
        %v2357 = vld [vmem:[%s2330 + $0x68] sm:$0xf]
        %v2358 = vld [vmem:[%s2330 + $0x6c] sm:$0xf]
        %v2359 = vld [vmem:[%s2330 + $0x70] sm:$0xf]
        %v2360 = vld [vmem:[%s2330 + $0x74] sm:$0xf]
        %v2361 = vld [vmem:[%s2330 + $0x78] sm:$0xf]
        %v2362 = vld [vmem:[%s2330 + $0x7c] sm:$0xf]
        %s2363 = scalar_lea.vmem %s13, 1
        %v2364 = vld [vmem:[%s2363] sm:$0x1]
        %v2365 = vpack.c.bf16 %v2328, %v2328
        %v2366 = vpack.c.bf16 %v2329, %v2329
        %v2368 = vperm.slane %v2364, 0
        %v2402 = vunpack.c.l.b16 %v2331
        %v2403 = vunpack.c.l.b16 %v2332
        %v2404 = vunpack.c.l.b16 %v2333
        %v2405 = vunpack.c.l.b16 %v2334
        %v2406 = vunpack.c.l.b16 %v2335
        %v2407 = vunpack.c.l.b16 %v2336
        %v2408 = vunpack.c.l.b16 %v2337
        %v2409 = vunpack.c.l.b16 %v2338
        %v2410 = vunpack.c.l.b16 %v2339
        %v2411 = vunpack.c.l.b16 %v2340
        %v2412 = vunpack.c.l.b16 %v2341
        %v2413 = vunpack.c.l.b16 %v2342
        %v2414 = vunpack.c.l.b16 %v2343
        %v2415 = vunpack.c.l.b16 %v2344
        %v2416 = vunpack.c.l.b16 %v2345
        %v2417 = vunpack.c.l.b16 %v2346
        %v2418 = vunpack.c.l.b16 %v2347
        %v2419 = vunpack.c.l.b16 %v2348
        %v2420 = vunpack.c.l.b16 %v2349
        %v2421 = vunpack.c.l.b16 %v2350
        %v2422 = vunpack.c.l.b16 %v2351
        %v2423 = vunpack.c.l.b16 %v2352
        %v2424 = vunpack.c.l.b16 %v2353
        %v2425 = vunpack.c.l.b16 %v2354
        %v2426 = vunpack.c.l.b16 %v2355
        %v2427 = vunpack.c.l.b16 %v2356
        %v2428 = vunpack.c.l.b16 %v2357
        %v2429 = vunpack.c.l.b16 %v2358
        %v2430 = vunpack.c.l.b16 %v2359
        %v2431 = vunpack.c.l.b16 %v2360
        %v2432 = vunpack.c.l.b16 %v2361
        %v2433 = vunpack.c.l.b16 %v2362
        %v2434 = vpack.c.b16 %v2403, %v2402
        %v2435 = vpack.c.b16 %v2405, %v2404
        %v2436 = vpack.c.b16 %v2407, %v2406
        %v2437 = vpack.c.b16 %v2409, %v2408
        %v2438 = vpack.c.b16 %v2411, %v2410
        %v2439 = vpack.c.b16 %v2413, %v2412
        %v2440 = vpack.c.b16 %v2415, %v2414
        %v2441 = vpack.c.b16 %v2417, %v2416
        %v2442 = vpack.c.b16 %v2419, %v2418
        %v2443 = vpack.c.b16 %v2421, %v2420
        %v2444 = vpack.c.b16 %v2423, %v2422
        %v2445 = vpack.c.b16 %v2425, %v2424
        %v2446 = vpack.c.b16 %v2427, %v2426
        %v2447 = vpack.c.b16 %v2429, %v2428
        %v2448 = vpack.c.b16 %v2431, %v2430
        %v2449 = vpack.c.b16 %v2433, %v2432
        %2466 = vmatpush.bf16.msra.mxu0 %v2441
        %2467 = vmatpush.bf16.msra.mxu0 %v2440
        %2468 = vmatpush.bf16.msra.mxu0 %v2439
        %2469 = vmatpush.bf16.msra.mxu0 %v2438
        %2470 = vmatpush.bf16.msra.mxu0 %v2437
        %2471 = vmatpush.bf16.msra.mxu0 %v2436
        %2472 = vmatpush.bf16.msra.mxu0 %v2435
        %2473 = vmatpush.bf16.msra.mxu0 %v2434
        %2474 = vmatmul.bf16.gmra.mxu0 %v2365
        %v2475 = vpop.f32.mrf.mxu0
        %v2476 = vadd.f32 %v2368, %v2475
        %v2477 = vpop.f32.mrf.mxu0
        %2478 = vdwg.mxu0
        %2479 = vmatpush.bf16.msra.mxu0 %v2449
        %2480 = vmatpush.bf16.msra.mxu0 %v2448
        %2481 = vmatpush.bf16.msra.mxu0 %v2447
        %2482 = vmatpush.bf16.msra.mxu0 %v2446
        %2483 = vmatpush.bf16.msra.mxu0 %v2445
        %2484 = vmatpush.bf16.msra.mxu0 %v2444
        %2485 = vmatpush.bf16.msra.mxu0 %v2443
        %2486 = vmatpush.bf16.msra.mxu0 %v2442
        %2487 = vmatmul.bf16.gmra.mxu0 %v2366
        %v2488 = vpop.f32.mrf.mxu0
        %v2489 = vadd.f32 %v2476, %v2488
        %v2490 = vpop.f32.mrf.mxu0
        %2491 = vdwg.mxu0
        %v2492 = vadd.f32 %v2180, %v2489
        %s2493 = scalar_lea.vmem %s14, 1
        %v2494 = vld [vmem:[%s2493] sm:$0x1]
        %s2495 = scalar_lea.vmem %s15, 1
        %v2496 = vld [vmem:[%s2495] sm:$0x1]
        %2497 = vadd.xlane.f32.xlu0 %v2492
        %v2498 = vpop.xlane.xlu0 %2497
        %v2499 = vmul.f32 %v2498, %v859
        %v2500 = vsub.f32 %v2492, %v2499
        %v2501 = vmul.f32 %v2500, %v2500
        %2502 = vadd.xlane.f32.xlu0 %v2501
        %v2503 = vpop.xlane.xlu0 %2502
        %v2504 = vmul.f32 %v2503, %v859
        %v2505 = vadd.f32 %v2504, 1e-05
        %v2506 = vrsqrt.pop %v2505
        %v2507 = vmul.f32 %v2506, %v2505
        %v2508 = vmul.f32 %v2507, %v2506
        %v2509 = vmul.f32 0.5, %v2508
        %v2510 = vsub.f32 1.5, %v2509
        %v2511 = vmul.f32 %v2506, %v2510
        %vm2512 = vweird.f32 %v2505
        %vm2513 = vweird.f32 %v2506
        %vm2514 = vmor %vm2512, %vm2513
        %v2515 = vsel %vm2514, %v2506, %v2511
        %v2516 = vmul.f32 %v2500, %v2515
        %v2518 = vperm.slane %v2494, 0
        %v2520 = vmul.f32 %v2516, %v2518
        %v2522 = vperm.slane %v2496, 0
        %v2524 = vadd.f32 %v2520, %v2522
        %v2525 = vld [vmem:[%s16] sm:$0xf]
        %v2526 = vld [vmem:[%s16 + $0x4] sm:$0xf]
        %v2527 = vld [vmem:[%s16 + $0x8] sm:$0xf]
        %v2528 = vld [vmem:[%s16 + $0xc] sm:$0xf]
        %v2529 = vld [vmem:[%s16 + $0x10] sm:$0xf]
        %v2530 = vld [vmem:[%s16 + $0x14] sm:$0xf]
        %v2531 = vld [vmem:[%s16 + $0x18] sm:$0xf]
        %v2532 = vld [vmem:[%s16 + $0x1c] sm:$0xf]
        %v2533 = vld [vmem:[%s16 + $0x20] sm:$0xf]
        %v2534 = vld [vmem:[%s16 + $0x24] sm:$0xf]
        %v2535 = vld [vmem:[%s16 + $0x28] sm:$0xf]
        %v2536 = vld [vmem:[%s16 + $0x2c] sm:$0xf]
        %v2537 = vld [vmem:[%s16 + $0x30] sm:$0xf]
        %v2538 = vld [vmem:[%s16 + $0x34] sm:$0xf]
        %v2539 = vld [vmem:[%s16 + $0x38] sm:$0xf]
        %v2540 = vld [vmem:[%s16 + $0x3c] sm:$0xf]
        %v2541 = vld [vmem:[%s17] sm:$0x1]
        %v2542 = vpack.c.bf16 %v2524, %v2524
        %v2559 = vunpack.c.l.b16 %v2525
        %v2560 = vunpack.c.l.b16 %v2526
        %v2561 = vunpack.c.l.b16 %v2527
        %v2562 = vunpack.c.l.b16 %v2528
        %v2563 = vunpack.c.l.b16 %v2529
        %v2564 = vunpack.c.l.b16 %v2530
        %v2565 = vunpack.c.l.b16 %v2531
        %v2566 = vunpack.c.l.b16 %v2532
        %v2567 = vunpack.c.l.b16 %v2533
        %v2568 = vunpack.c.l.b16 %v2534
        %v2569 = vunpack.c.l.b16 %v2535
        %v2570 = vunpack.c.l.b16 %v2536
        %v2571 = vunpack.c.l.b16 %v2537
        %v2572 = vunpack.c.l.b16 %v2538
        %v2573 = vunpack.c.l.b16 %v2539
        %v2574 = vunpack.c.l.b16 %v2540
        %v2575 = vpack.c.b16 %v2560, %v2559
        %v2576 = vpack.c.b16 %v2562, %v2561
        %v2577 = vpack.c.b16 %v2564, %v2563
        %v2578 = vpack.c.b16 %v2566, %v2565
        %v2579 = vpack.c.b16 %v2568, %v2567
        %v2580 = vpack.c.b16 %v2570, %v2569
        %v2581 = vpack.c.b16 %v2572, %v2571
        %v2582 = vpack.c.b16 %v2574, %v2573
        %2591 = vmatpush.bf16.msra.mxu0 %v2582
        %2592 = vmatpush.bf16.msra.mxu0 %v2581
        %2593 = vmatpush.bf16.msra.mxu0 %v2580
        %2594 = vmatpush.bf16.msra.mxu0 %v2579
        %2595 = vmatpush.bf16.msra.mxu0 %v2578
        %2596 = vmatpush.bf16.msra.mxu0 %v2577
        %2597 = vmatpush.bf16.msra.mxu0 %v2576
        %2598 = vmatpush.bf16.msra.mxu0 %v2575
        %2599 = vmatmul.bf16.gmra.mxu0 %v2542
        %v2600 = vpop.f32.mrf.mxu0
        %v2601 = vadd.f32 %v2541, %v2600
        %v2602 = vpop.f32.mrf.mxu0
        %2603 = vdwg.mxu0
        %v2604 = vtanh.pop %v2601
        %v2605 = vld [vmem:[#allocation8] sm:$0xff]
        %v2606 = vld [vmem:[#allocation8 + $0x8] sm:$0xff]
        %v2607 = vld [vmem:[#allocation8 + $0x10] sm:$0xff]
        %v2608 = vld [vmem:[#allocation8 + $0x18] sm:$0xff]
        %v2609 = vld [vmem:[#allocation8 + $0x20] sm:$0xff]
        %v2610 = vld [vmem:[#allocation8 + $0x28] sm:$0xff]
        %v2611 = vld [vmem:[#allocation8 + $0x30] sm:$0xff]
        %v2612 = vld [vmem:[#allocation8 + $0x38] sm:$0xff]
        %v2613 = vld [vmem:[#allocation8 + $0x40] sm:$0xff]
        %v2614 = vld [vmem:[#allocation8 + $0x48] sm:$0xff]
        %v2615 = vld [vmem:[#allocation8 + $0x50] sm:$0xff]
        %v2616 = vld [vmem:[#allocation8 + $0x58] sm:$0xff]
        %v2617 = vld [vmem:[#allocation8 + $0x60] sm:$0xff]
        %v2618 = vld [vmem:[#allocation8 + $0x68] sm:$0xff]
        %v2619 = vld [vmem:[#allocation8 + $0x70] sm:$0xff]
        %v2620 = vld [vmem:[#allocation8 + $0x78] sm:$0xff]
        %v2621 = vld [vmem:[#allocation8 + $0x80] sm:$0xff]
        %v2622 = vld [vmem:[#allocation8 + $0x88] sm:$0xff]
        %v2623 = vld [vmem:[#allocation8 + $0x90] sm:$0xff]
        %v2624 = vld [vmem:[#allocation8 + $0x98] sm:$0xff]
        %v2625 = vld [vmem:[#allocation8 + $0xa0] sm:$0xff]
        %v2626 = vld [vmem:[#allocation8 + $0xa8] sm:$0xff]
        %v2627 = vld [vmem:[#allocation8 + $0xb0] sm:$0xff]
        %v2628 = vld [vmem:[#allocation8 + $0xb8] sm:$0xff]
        %v2629 = vld [vmem:[#allocation8 + $0xc0] sm:$0xff]
        %v2630 = vld [vmem:[#allocation8 + $0xc8] sm:$0xff]
        %v2631 = vld [vmem:[#allocation8 + $0xd0] sm:$0xff]
        %v2632 = vld [vmem:[#allocation8 + $0xd8] sm:$0xff]
        %v2633 = vld [vmem:[#allocation8 + $0xe0] sm:$0xff]
        %v2634 = vld [vmem:[#allocation8 + $0xe8] sm:$0xff]
        %v2635 = vld [vmem:[#allocation8 + $0xf0] sm:$0xff]
        %v2636 = vld [vmem:[#allocation8 + $0xf8] sm:$0xff]
        %v2637 = vld [vmem:[#allocation8 + $0x100] sm:$0xff]
        %v2638 = vld [vmem:[#allocation8 + $0x108] sm:$0xff]
        %v2639 = vld [vmem:[#allocation8 + $0x110] sm:$0xff]
        %v2640 = vld [vmem:[#allocation8 + $0x118] sm:$0xff]
        %v2641 = vld [vmem:[#allocation8 + $0x120] sm:$0xff]
        %v2642 = vld [vmem:[#allocation8 + $0x128] sm:$0xff]
        %v2643 = vld [vmem:[#allocation8 + $0x130] sm:$0xff]
        %v2644 = vld [vmem:[#allocation8 + $0x138] sm:$0xff]
        %v2645 = vld [vmem:[#allocation8 + $0x140] sm:$0xff]
        %v2646 = vld [vmem:[#allocation8 + $0x148] sm:$0xff]
        %v2647 = vld [vmem:[#allocation8 + $0x150] sm:$0xff]
        %v2648 = vld [vmem:[#allocation8 + $0x158] sm:$0xff]
        %v2649 = vld [vmem:[#allocation8 + $0x160] sm:$0xff]
        %v2650 = vld [vmem:[#allocation8 + $0x168] sm:$0xff]
        %v2651 = vld [vmem:[#allocation8 + $0x170] sm:$0xff]
        %v2652 = vld [vmem:[#allocation8 + $0x178] sm:$0xff]
        %v2653 = vld [vmem:[#allocation8 + $0x180] sm:$0xff]
        %v2654 = vld [vmem:[#allocation8 + $0x188] sm:$0xff]
        %v2655 = vld [vmem:[#allocation8 + $0x190] sm:$0xff]
        %v2656 = vld [vmem:[#allocation8 + $0x198] sm:$0xff]
        %v2657 = vld [vmem:[#allocation8 + $0x1a0] sm:$0xff]
        %v2658 = vld [vmem:[#allocation8 + $0x1a8] sm:$0xff]
        %v2659 = vld [vmem:[#allocation8 + $0x1b0] sm:$0xff]
        %v2660 = vld [vmem:[#allocation8 + $0x1b8] sm:$0xff]
        %v2661 = vld [vmem:[#allocation8 + $0x1c0] sm:$0xff]
        %v2662 = vld [vmem:[#allocation8 + $0x1c8] sm:$0xff]
        %v2663 = vld [vmem:[#allocation8 + $0x1d0] sm:$0xff]
        %v2664 = vld [vmem:[#allocation8 + $0x1d8] sm:$0xff]
        %v2665 = vld [vmem:[#allocation8 + $0x1e0] sm:$0xff]
        %v2666 = vld [vmem:[#allocation8 + $0x1e8] sm:$0xff]
        %v2667 = vld [vmem:[#allocation8 + $0x1f0] sm:$0xff]
        %v2668 = vld [vmem:[#allocation8 + $0x1f8] sm:$0xff]
        %v2669 = vld [vmem:[%s19] sm:$0xff]
        %v2670 = vpack.c.bf16 %v2604, %v2604
        %v2735 = vunpack.c.l.b16 %v2605
        %v2736 = vunpack.c.h.b16 %v2605
        %v2737 = vunpack.c.l.b16 %v2606
        %v2738 = vunpack.c.h.b16 %v2606
        %v2739 = vunpack.c.l.b16 %v2607
        %v2740 = vunpack.c.h.b16 %v2607
        %v2741 = vunpack.c.l.b16 %v2608
        %v2742 = vunpack.c.h.b16 %v2608
        %v2743 = vunpack.c.l.b16 %v2609
        %v2744 = vunpack.c.h.b16 %v2609
        %v2745 = vunpack.c.l.b16 %v2610
        %v2746 = vunpack.c.h.b16 %v2610
        %v2747 = vunpack.c.l.b16 %v2611
        %v2748 = vunpack.c.h.b16 %v2611
        %v2749 = vunpack.c.l.b16 %v2612
        %v2750 = vunpack.c.h.b16 %v2612
        %v2751 = vunpack.c.l.b16 %v2613
        %v2752 = vunpack.c.h.b16 %v2613
        %v2753 = vunpack.c.l.b16 %v2614
        %v2754 = vunpack.c.h.b16 %v2614
        %v2755 = vunpack.c.l.b16 %v2615
        %v2756 = vunpack.c.h.b16 %v2615
        %v2757 = vunpack.c.l.b16 %v2616
        %v2758 = vunpack.c.h.b16 %v2616
        %v2759 = vunpack.c.l.b16 %v2617
        %v2760 = vunpack.c.h.b16 %v2617
        %v2761 = vunpack.c.l.b16 %v2618
        %v2762 = vunpack.c.h.b16 %v2618
        %v2763 = vunpack.c.l.b16 %v2619
        %v2764 = vunpack.c.h.b16 %v2619
        %v2765 = vunpack.c.l.b16 %v2620
        %v2766 = vunpack.c.h.b16 %v2620
        %v2767 = vunpack.c.l.b16 %v2621
        %v2768 = vunpack.c.h.b16 %v2621
        %v2769 = vunpack.c.l.b16 %v2622
        %v2770 = vunpack.c.h.b16 %v2622
        %v2771 = vunpack.c.l.b16 %v2623
        %v2772 = vunpack.c.h.b16 %v2623
        %v2773 = vunpack.c.l.b16 %v2624
        %v2774 = vunpack.c.h.b16 %v2624
        %v2775 = vunpack.c.l.b16 %v2625
        %v2776 = vunpack.c.h.b16 %v2625
        %v2777 = vunpack.c.l.b16 %v2626
        %v2778 = vunpack.c.h.b16 %v2626
        %v2779 = vunpack.c.l.b16 %v2627
        %v2780 = vunpack.c.h.b16 %v2627
        %v2781 = vunpack.c.l.b16 %v2628
        %v2782 = vunpack.c.h.b16 %v2628
        %v2783 = vunpack.c.l.b16 %v2629
        %v2784 = vunpack.c.h.b16 %v2629
        %v2785 = vunpack.c.l.b16 %v2630
        %v2786 = vunpack.c.h.b16 %v2630
        %v2787 = vunpack.c.l.b16 %v2631
        %v2788 = vunpack.c.h.b16 %v2631
        %v2789 = vunpack.c.l.b16 %v2632
        %v2790 = vunpack.c.h.b16 %v2632
        %v2791 = vunpack.c.l.b16 %v2633
        %v2792 = vunpack.c.h.b16 %v2633
        %v2793 = vunpack.c.l.b16 %v2634
        %v2794 = vunpack.c.h.b16 %v2634
        %v2795 = vunpack.c.l.b16 %v2635
        %v2796 = vunpack.c.h.b16 %v2635
        %v2797 = vunpack.c.l.b16 %v2636
        %v2798 = vunpack.c.h.b16 %v2636
        %v2799 = vunpack.c.l.b16 %v2637
        %v2800 = vunpack.c.h.b16 %v2637
        %v2801 = vunpack.c.l.b16 %v2638
        %v2802 = vunpack.c.h.b16 %v2638
        %v2803 = vunpack.c.l.b16 %v2639
        %v2804 = vunpack.c.h.b16 %v2639
        %v2805 = vunpack.c.l.b16 %v2640
        %v2806 = vunpack.c.h.b16 %v2640
        %v2807 = vunpack.c.l.b16 %v2641
        %v2808 = vunpack.c.h.b16 %v2641
        %v2809 = vunpack.c.l.b16 %v2642
        %v2810 = vunpack.c.h.b16 %v2642
        %v2811 = vunpack.c.l.b16 %v2643
        %v2812 = vunpack.c.h.b16 %v2643
        %v2813 = vunpack.c.l.b16 %v2644
        %v2814 = vunpack.c.h.b16 %v2644
        %v2815 = vunpack.c.l.b16 %v2645
        %v2816 = vunpack.c.h.b16 %v2645
        %v2817 = vunpack.c.l.b16 %v2646
        %v2818 = vunpack.c.h.b16 %v2646
        %v2819 = vunpack.c.l.b16 %v2647
        %v2820 = vunpack.c.h.b16 %v2647
        %v2821 = vunpack.c.l.b16 %v2648
        %v2822 = vunpack.c.h.b16 %v2648
        %v2823 = vunpack.c.l.b16 %v2649
        %v2824 = vunpack.c.h.b16 %v2649
        %v2825 = vunpack.c.l.b16 %v2650
        %v2826 = vunpack.c.h.b16 %v2650
        %v2827 = vunpack.c.l.b16 %v2651
        %v2828 = vunpack.c.h.b16 %v2651
        %v2829 = vunpack.c.l.b16 %v2652
        %v2830 = vunpack.c.h.b16 %v2652
        %v2831 = vunpack.c.l.b16 %v2653
        %v2832 = vunpack.c.h.b16 %v2653
        %v2833 = vunpack.c.l.b16 %v2654
        %v2834 = vunpack.c.h.b16 %v2654
        %v2835 = vunpack.c.l.b16 %v2655
        %v2836 = vunpack.c.h.b16 %v2655
        %v2837 = vunpack.c.l.b16 %v2656
        %v2838 = vunpack.c.h.b16 %v2656
        %v2839 = vunpack.c.l.b16 %v2657
        %v2840 = vunpack.c.h.b16 %v2657
        %v2841 = vunpack.c.l.b16 %v2658
        %v2842 = vunpack.c.h.b16 %v2658
        %v2843 = vunpack.c.l.b16 %v2659
        %v2844 = vunpack.c.h.b16 %v2659
        %v2845 = vunpack.c.l.b16 %v2660
        %v2846 = vunpack.c.h.b16 %v2660
        %v2847 = vunpack.c.l.b16 %v2661
        %v2848 = vunpack.c.h.b16 %v2661
        %v2849 = vunpack.c.l.b16 %v2662
        %v2850 = vunpack.c.h.b16 %v2662
        %v2851 = vunpack.c.l.b16 %v2663
        %v2852 = vunpack.c.h.b16 %v2663
        %v2853 = vunpack.c.l.b16 %v2664
        %v2854 = vunpack.c.h.b16 %v2664
        %v2855 = vunpack.c.l.b16 %v2665
        %v2856 = vunpack.c.h.b16 %v2665
        %v2857 = vunpack.c.l.b16 %v2666
        %v2858 = vunpack.c.h.b16 %v2666
        %v2859 = vunpack.c.l.b16 %v2667
        %v2860 = vunpack.c.h.b16 %v2667
        %v2861 = vunpack.c.l.b16 %v2668
        %v2862 = vunpack.c.h.b16 %v2668
        %v2863 = vpack.c.b16 %v2743, %v2735
        %v2864 = vpack.c.b16 %v2744, %v2736
        %v2865 = vpack.c.b16 %v2745, %v2737
        %v2866 = vpack.c.b16 %v2746, %v2738
        %v2867 = vpack.c.b16 %v2747, %v2739
        %v2868 = vpack.c.b16 %v2748, %v2740
        %v2869 = vpack.c.b16 %v2749, %v2741
        %v2870 = vpack.c.b16 %v2750, %v2742
        %v2871 = vpack.c.b16 %v2759, %v2751
        %v2872 = vpack.c.b16 %v2760, %v2752
        %v2873 = vpack.c.b16 %v2761, %v2753
        %v2874 = vpack.c.b16 %v2762, %v2754
        %v2875 = vpack.c.b16 %v2763, %v2755
        %v2876 = vpack.c.b16 %v2764, %v2756
        %v2877 = vpack.c.b16 %v2765, %v2757
        %v2878 = vpack.c.b16 %v2766, %v2758
        %v2879 = vpack.c.b16 %v2775, %v2767
        %v2880 = vpack.c.b16 %v2776, %v2768
        %v2881 = vpack.c.b16 %v2777, %v2769
        %v2882 = vpack.c.b16 %v2778, %v2770
        %v2883 = vpack.c.b16 %v2779, %v2771
        %v2884 = vpack.c.b16 %v2780, %v2772
        %v2885 = vpack.c.b16 %v2781, %v2773
        %v2886 = vpack.c.b16 %v2782, %v2774
        %v2887 = vpack.c.b16 %v2791, %v2783
        %v2888 = vpack.c.b16 %v2792, %v2784
        %v2889 = vpack.c.b16 %v2793, %v2785
        %v2890 = vpack.c.b16 %v2794, %v2786
        %v2891 = vpack.c.b16 %v2795, %v2787
        %v2892 = vpack.c.b16 %v2796, %v2788
        %v2893 = vpack.c.b16 %v2797, %v2789
        %v2894 = vpack.c.b16 %v2798, %v2790
        %v2895 = vpack.c.b16 %v2807, %v2799
        %v2896 = vpack.c.b16 %v2808, %v2800
        %v2897 = vpack.c.b16 %v2809, %v2801
        %v2898 = vpack.c.b16 %v2810, %v2802
        %v2899 = vpack.c.b16 %v2811, %v2803
        %v2900 = vpack.c.b16 %v2812, %v2804
        %v2901 = vpack.c.b16 %v2813, %v2805
        %v2902 = vpack.c.b16 %v2814, %v2806
        %v2903 = vpack.c.b16 %v2823, %v2815
        %v2904 = vpack.c.b16 %v2824, %v2816
        %v2905 = vpack.c.b16 %v2825, %v2817
        %v2906 = vpack.c.b16 %v2826, %v2818
        %v2907 = vpack.c.b16 %v2827, %v2819
        %v2908 = vpack.c.b16 %v2828, %v2820
        %v2909 = vpack.c.b16 %v2829, %v2821
        %v2910 = vpack.c.b16 %v2830, %v2822
        %v2911 = vpack.c.b16 %v2839, %v2831
        %v2912 = vpack.c.b16 %v2840, %v2832
        %v2913 = vpack.c.b16 %v2841, %v2833
        %v2914 = vpack.c.b16 %v2842, %v2834
        %v2915 = vpack.c.b16 %v2843, %v2835
        %v2916 = vpack.c.b16 %v2844, %v2836
        %v2917 = vpack.c.b16 %v2845, %v2837
        %v2918 = vpack.c.b16 %v2846, %v2838
        %v2919 = vpack.c.b16 %v2855, %v2847
        %v2920 = vpack.c.b16 %v2856, %v2848
        %v2921 = vpack.c.b16 %v2857, %v2849
        %v2922 = vpack.c.b16 %v2858, %v2850
        %v2923 = vpack.c.b16 %v2859, %v2851
        %v2924 = vpack.c.b16 %v2860, %v2852
        %v2925 = vpack.c.b16 %v2861, %v2853
        %v2926 = vpack.c.b16 %v2862, %v2854
        %v2992 = vperm.slane %v2669, 0
        %v2993 = vperm.slane %v2669, 1
        %v2994 = vperm.slane %v2669, 2
        %v2995 = vperm.slane %v2669, 3
        %v2996 = vperm.slane %v2669, 4
        %v2997 = vperm.slane %v2669, 5
        %v2998 = vperm.slane %v2669, 6
        %v2999 = vperm.slane %v2669, 7
        %3008 = vmatpush.bf16.msra.mxu0 %v2919
        %3009 = vmatpush.bf16.msra.mxu0 %v2911
        %3010 = vmatpush.bf16.msra.mxu0 %v2903
        %3011 = vmatpush.bf16.msra.mxu0 %v2895
        %3012 = vmatpush.bf16.msra.mxu0 %v2887
        %3013 = vmatpush.bf16.msra.mxu0 %v2879
        %3014 = vmatpush.bf16.msra.mxu0 %v2871
        %3015 = vmatpush.bf16.msra.mxu0 %v2863
        %3016 = vmatmul.bf16.gmra.mxu0 %v2670
        %v3017 = vpop.f32.mrf.mxu0
        %v3018 = vadd.f32 %v2992, %v3017
        %v3019 = vpop.f32.mrf.mxu0
        %3020 = vdwg.mxu0
        %3021 = vmatpush.bf16.msra.mxu0 %v2920
        %3022 = vmatpush.bf16.msra.mxu0 %v2912
        %3023 = vmatpush.bf16.msra.mxu0 %v2904
        %3024 = vmatpush.bf16.msra.mxu0 %v2896
        %3025 = vmatpush.bf16.msra.mxu0 %v2888
        %3026 = vmatpush.bf16.msra.mxu0 %v2880
        %3027 = vmatpush.bf16.msra.mxu0 %v2872
        %3028 = vmatpush.bf16.msra.mxu0 %v2864
        %3029 = vmatmul.bf16.gmra.mxu0 %v2670
        %v3030 = vpop.f32.mrf.mxu0
        %v3031 = vadd.f32 %v2993, %v3030
        %v3032 = vpop.f32.mrf.mxu0
        %3033 = vdwg.mxu0
        %3034 = vmatpush.bf16.msra.mxu0 %v2921
        %3035 = vmatpush.bf16.msra.mxu0 %v2913
        %3036 = vmatpush.bf16.msra.mxu0 %v2905
        %3037 = vmatpush.bf16.msra.mxu0 %v2897
        %3038 = vmatpush.bf16.msra.mxu0 %v2889
        %3039 = vmatpush.bf16.msra.mxu0 %v2881
        %3040 = vmatpush.bf16.msra.mxu0 %v2873
        %3041 = vmatpush.bf16.msra.mxu0 %v2865
        %3042 = vmatmul.bf16.gmra.mxu0 %v2670
        %v3043 = vpop.f32.mrf.mxu0
        %v3044 = vadd.f32 %v2994, %v3043
        %v3045 = vpop.f32.mrf.mxu0
        %3046 = vdwg.mxu0
        %3047 = vmatpush.bf16.msra.mxu0 %v2922
        %3048 = vmatpush.bf16.msra.mxu0 %v2914
        %3049 = vmatpush.bf16.msra.mxu0 %v2906
        %3050 = vmatpush.bf16.msra.mxu0 %v2898
        %3051 = vmatpush.bf16.msra.mxu0 %v2890
        %3052 = vmatpush.bf16.msra.mxu0 %v2882
        %3053 = vmatpush.bf16.msra.mxu0 %v2874
        %3054 = vmatpush.bf16.msra.mxu0 %v2866
        %3055 = vmatmul.bf16.gmra.mxu0 %v2670
        %v3056 = vpop.f32.mrf.mxu0
        %v3057 = vadd.f32 %v2995, %v3056
        %v3058 = vpop.f32.mrf.mxu0
        %3059 = vdwg.mxu0
        %3060 = vmatpush.bf16.msra.mxu0 %v2923
        %3061 = vmatpush.bf16.msra.mxu0 %v2915
        %3062 = vmatpush.bf16.msra.mxu0 %v2907
        %3063 = vmatpush.bf16.msra.mxu0 %v2899
        %3064 = vmatpush.bf16.msra.mxu0 %v2891
        %3065 = vmatpush.bf16.msra.mxu0 %v2883
        %3066 = vmatpush.bf16.msra.mxu0 %v2875
        %3067 = vmatpush.bf16.msra.mxu0 %v2867
        %3068 = vmatmul.bf16.gmra.mxu0 %v2670
        %v3069 = vpop.f32.mrf.mxu0
        %v3070 = vadd.f32 %v2996, %v3069
        %v3071 = vpop.f32.mrf.mxu0
        %3072 = vdwg.mxu0
        %3073 = vmatpush.bf16.msra.mxu0 %v2924
        %3074 = vmatpush.bf16.msra.mxu0 %v2916
        %3075 = vmatpush.bf16.msra.mxu0 %v2908
        %3076 = vmatpush.bf16.msra.mxu0 %v2900
        %3077 = vmatpush.bf16.msra.mxu0 %v2892
        %3078 = vmatpush.bf16.msra.mxu0 %v2884
        %3079 = vmatpush.bf16.msra.mxu0 %v2876
        %3080 = vmatpush.bf16.msra.mxu0 %v2868
        %3081 = vmatmul.bf16.gmra.mxu0 %v2670
        %v3082 = vpop.f32.mrf.mxu0
        %v3083 = vadd.f32 %v2997, %v3082
        %v3084 = vpop.f32.mrf.mxu0
        %3085 = vdwg.mxu0
        %3086 = vmatpush.bf16.msra.mxu0 %v2925
        %3087 = vmatpush.bf16.msra.mxu0 %v2917
        %3088 = vmatpush.bf16.msra.mxu0 %v2909
        %3089 = vmatpush.bf16.msra.mxu0 %v2901
        %3090 = vmatpush.bf16.msra.mxu0 %v2893
        %3091 = vmatpush.bf16.msra.mxu0 %v2885
        %3092 = vmatpush.bf16.msra.mxu0 %v2877
        %3093 = vmatpush.bf16.msra.mxu0 %v2869
        %3094 = vmatmul.bf16.gmra.mxu0 %v2670
        %v3095 = vpop.f32.mrf.mxu0
        %v3096 = vadd.f32 %v2998, %v3095
        %v3097 = vpop.f32.mrf.mxu0
        %3098 = vdwg.mxu0
        %3099 = vmatpush.bf16.msra.mxu0 %v2926
        %3100 = vmatpush.bf16.msra.mxu0 %v2918
        %3101 = vmatpush.bf16.msra.mxu0 %v2910
        %3102 = vmatpush.bf16.msra.mxu0 %v2902
        %3103 = vmatpush.bf16.msra.mxu0 %v2894
        %3104 = vmatpush.bf16.msra.mxu0 %v2886
        %3105 = vmatpush.bf16.msra.mxu0 %v2878
        %3106 = vmatpush.bf16.msra.mxu0 %v2870
        %3107 = vmatmul.bf16.gmra.mxu0 %v2670
        %v3108 = vpop.f32.mrf.mxu0
        %v3109 = vadd.f32 %v2999, %v3108
        %v3110 = vpop.f32.mrf.mxu0
        %3111 = vdwg.mxu0
        %vm3112 = vcmp.ge.f32.partialorder %v3018, 0.0
        %vm3113 = vcmp.ge.f32.partialorder %v3031, 0.0
        %vm3114 = vcmp.ge.f32.partialorder %v3044, 0.0
        %vm3115 = vcmp.ge.f32.partialorder %v3057, 0.0
        %vm3116 = vcmp.ge.f32.partialorder %v3070, 0.0
        %vm3117 = vcmp.ge.f32.partialorder %v3083, 0.0
        %vm3118 = vcmp.ge.f32.partialorder %v3096, 0.0
        %vm3119 = vcmp.ge.f32.partialorder %v3109, 0.0
        %v3120 = vmul.f32 %v3018, 0.1
        %v3121 = vmul.f32 %v3031, 0.1
        %v3122 = vmul.f32 %v3044, 0.1
        %v3123 = vmul.f32 %v3057, 0.1
        %v3124 = vmul.f32 %v3070, 0.1
        %v3125 = vmul.f32 %v3083, 0.1
        %v3126 = vmul.f32 %v3096, 0.1
        %v3127 = vmul.f32 %v3109, 0.1
        %v3128 = vsel %vm3112, %v3018, %v3120
        %v3129 = vsel %vm3113, %v3031, %v3121
        %v3130 = vsel %vm3114, %v3044, %v3122
        %v3131 = vsel %vm3115, %v3057, %v3123
        %v3132 = vsel %vm3116, %v3070, %v3124
        %v3133 = vsel %vm3117, %v3083, %v3125
        %v3134 = vsel %vm3118, %v3096, %v3126
        %v3135 = vsel %vm3119, %v3109, %v3127
        %v3136 = vld [vmem:[#allocation10] sm:$0xff]
        %v3137 = vld [vmem:[#allocation10 + $0x8] sm:$0xff]
        %v3138 = vld [vmem:[#allocation10 + $0x10] sm:$0xff]
        %v3139 = vld [vmem:[#allocation10 + $0x18] sm:$0xff]
        %v3140 = vld [vmem:[#allocation10 + $0x20] sm:$0xff]
        %v3141 = vld [vmem:[#allocation10 + $0x28] sm:$0xff]
        %v3142 = vld [vmem:[#allocation10 + $0x30] sm:$0xff]
        %v3143 = vld [vmem:[#allocation10 + $0x38] sm:$0xff]
        %v3144 = vld [vmem:[#allocation10 + $0x40] sm:$0xff]
        %v3145 = vld [vmem:[#allocation10 + $0x48] sm:$0xff]
        %v3146 = vld [vmem:[#allocation10 + $0x50] sm:$0xff]
        %v3147 = vld [vmem:[#allocation10 + $0x58] sm:$0xff]
        %v3148 = vld [vmem:[#allocation10 + $0x60] sm:$0xff]
        %v3149 = vld [vmem:[#allocation10 + $0x68] sm:$0xff]
        %v3150 = vld [vmem:[#allocation10 + $0x70] sm:$0xff]
        %v3151 = vld [vmem:[#allocation10 + $0x78] sm:$0xff]
        %v3152 = vld [vmem:[#allocation10 + $0x80] sm:$0xff]
        %v3153 = vld [vmem:[#allocation10 + $0x88] sm:$0xff]
        %v3154 = vld [vmem:[#allocation10 + $0x90] sm:$0xff]
        %v3155 = vld [vmem:[#allocation10 + $0x98] sm:$0xff]
        %v3156 = vld [vmem:[#allocation10 + $0xa0] sm:$0xff]
        %v3157 = vld [vmem:[#allocation10 + $0xa8] sm:$0xff]
        %v3158 = vld [vmem:[#allocation10 + $0xb0] sm:$0xff]
        %v3159 = vld [vmem:[#allocation10 + $0xb8] sm:$0xff]
        %v3160 = vld [vmem:[#allocation10 + $0xc0] sm:$0xff]
        %v3161 = vld [vmem:[#allocation10 + $0xc8] sm:$0xff]
        %v3162 = vld [vmem:[#allocation10 + $0xd0] sm:$0xff]
        %v3163 = vld [vmem:[#allocation10 + $0xd8] sm:$0xff]
        %v3164 = vld [vmem:[#allocation10 + $0xe0] sm:$0xff]
        %v3165 = vld [vmem:[#allocation10 + $0xe8] sm:$0xff]
        %v3166 = vld [vmem:[#allocation10 + $0xf0] sm:$0xff]
        %v3167 = vld [vmem:[#allocation10 + $0xf8] sm:$0xff]
        %v3168 = vld [vmem:[#allocation10 + $0x100] sm:$0xff]
        %v3169 = vld [vmem:[#allocation10 + $0x108] sm:$0xff]
        %v3170 = vld [vmem:[#allocation10 + $0x110] sm:$0xff]
        %v3171 = vld [vmem:[#allocation10 + $0x118] sm:$0xff]
        %v3172 = vld [vmem:[#allocation10 + $0x120] sm:$0xff]
        %v3173 = vld [vmem:[#allocation10 + $0x128] sm:$0xff]
        %v3174 = vld [vmem:[#allocation10 + $0x130] sm:$0xff]
        %v3175 = vld [vmem:[#allocation10 + $0x138] sm:$0xff]
        %v3176 = vld [vmem:[#allocation10 + $0x140] sm:$0xff]
        %v3177 = vld [vmem:[#allocation10 + $0x148] sm:$0xff]
        %v3178 = vld [vmem:[#allocation10 + $0x150] sm:$0xff]
        %v3179 = vld [vmem:[#allocation10 + $0x158] sm:$0xff]
        %v3180 = vld [vmem:[#allocation10 + $0x160] sm:$0xff]
        %v3181 = vld [vmem:[#allocation10 + $0x168] sm:$0xff]
        %v3182 = vld [vmem:[#allocation10 + $0x170] sm:$0xff]
        %v3183 = vld [vmem:[#allocation10 + $0x178] sm:$0xff]
        %v3184 = vld [vmem:[#allocation10 + $0x180] sm:$0xff]
        %v3185 = vld [vmem:[#allocation10 + $0x188] sm:$0xff]
        %v3186 = vld [vmem:[#allocation10 + $0x190] sm:$0xff]
        %v3187 = vld [vmem:[#allocation10 + $0x198] sm:$0xff]
        %v3188 = vld [vmem:[#allocation10 + $0x1a0] sm:$0xff]
        %v3189 = vld [vmem:[#allocation10 + $0x1a8] sm:$0xff]
        %v3190 = vld [vmem:[#allocation10 + $0x1b0] sm:$0xff]
        %v3191 = vld [vmem:[#allocation10 + $0x1b8] sm:$0xff]
        %v3192 = vld [vmem:[#allocation10 + $0x1c0] sm:$0xff]
        %v3193 = vld [vmem:[#allocation10 + $0x1c8] sm:$0xff]
        %v3194 = vld [vmem:[#allocation10 + $0x1d0] sm:$0xff]
        %v3195 = vld [vmem:[#allocation10 + $0x1d8] sm:$0xff]
        %v3196 = vld [vmem:[#allocation10 + $0x1e0] sm:$0xff]
        %v3197 = vld [vmem:[#allocation10 + $0x1e8] sm:$0xff]
        %v3198 = vld [vmem:[#allocation10 + $0x1f0] sm:$0xff]
        %v3199 = vld [vmem:[#allocation10 + $0x1f8] sm:$0xff]
        %v3200 = vld [vmem:[#allocation10 + $0x200] sm:$0xff]
        %v3201 = vld [vmem:[#allocation10 + $0x208] sm:$0xff]
        %v3202 = vld [vmem:[#allocation10 + $0x210] sm:$0xff]
        %v3203 = vld [vmem:[#allocation10 + $0x218] sm:$0xff]
        %v3204 = vld [vmem:[#allocation10 + $0x220] sm:$0xff]
        %v3205 = vld [vmem:[#allocation10 + $0x228] sm:$0xff]
        %v3206 = vld [vmem:[#allocation10 + $0x230] sm:$0xff]
        %v3207 = vld [vmem:[#allocation10 + $0x238] sm:$0xff]
        %v3208 = vld [vmem:[#allocation10 + $0x240] sm:$0xff]
        %v3209 = vld [vmem:[#allocation10 + $0x248] sm:$0xff]
        %v3210 = vld [vmem:[#allocation10 + $0x250] sm:$0xff]
        %v3211 = vld [vmem:[#allocation10 + $0x258] sm:$0xff]
        %v3212 = vld [vmem:[#allocation10 + $0x260] sm:$0xff]
        %v3213 = vld [vmem:[#allocation10 + $0x268] sm:$0xff]
        %v3214 = vld [vmem:[#allocation10 + $0x270] sm:$0xff]
        %v3215 = vld [vmem:[#allocation10 + $0x278] sm:$0xff]
        %v3216 = vld [vmem:[#allocation10 + $0x280] sm:$0xff]
        %v3217 = vld [vmem:[#allocation10 + $0x288] sm:$0xff]
        %v3218 = vld [vmem:[#allocation10 + $0x290] sm:$0xff]
        %v3219 = vld [vmem:[#allocation10 + $0x298] sm:$0xff]
        %v3220 = vld [vmem:[#allocation10 + $0x2a0] sm:$0xff]
        %v3221 = vld [vmem:[#allocation10 + $0x2a8] sm:$0xff]
        %v3222 = vld [vmem:[#allocation10 + $0x2b0] sm:$0xff]
        %v3223 = vld [vmem:[#allocation10 + $0x2b8] sm:$0xff]
        %v3224 = vld [vmem:[#allocation10 + $0x2c0] sm:$0xff]
        %v3225 = vld [vmem:[#allocation10 + $0x2c8] sm:$0xff]
        %v3226 = vld [vmem:[#allocation10 + $0x2d0] sm:$0xff]
        %v3227 = vld [vmem:[#allocation10 + $0x2d8] sm:$0xff]
        %v3228 = vld [vmem:[#allocation10 + $0x2e0] sm:$0xff]
        %v3229 = vld [vmem:[#allocation10 + $0x2e8] sm:$0xff]
        %v3230 = vld [vmem:[#allocation10 + $0x2f0] sm:$0xff]
        %v3231 = vld [vmem:[#allocation10 + $0x2f8] sm:$0xff]
        %v3232 = vld [vmem:[#allocation10 + $0x300] sm:$0xff]
        %v3233 = vld [vmem:[#allocation10 + $0x308] sm:$0xff]
        %v3234 = vld [vmem:[#allocation10 + $0x310] sm:$0xff]
        %v3235 = vld [vmem:[#allocation10 + $0x318] sm:$0xff]
        %v3236 = vld [vmem:[#allocation10 + $0x320] sm:$0xff]
        %v3237 = vld [vmem:[#allocation10 + $0x328] sm:$0xff]
        %v3238 = vld [vmem:[#allocation10 + $0x330] sm:$0xff]
        %v3239 = vld [vmem:[#allocation10 + $0x338] sm:$0xff]
        %v3240 = vld [vmem:[#allocation10 + $0x340] sm:$0xff]
        %v3241 = vld [vmem:[#allocation10 + $0x348] sm:$0xff]
        %v3242 = vld [vmem:[#allocation10 + $0x350] sm:$0xff]
        %v3243 = vld [vmem:[#allocation10 + $0x358] sm:$0xff]
        %v3244 = vld [vmem:[#allocation10 + $0x360] sm:$0xff]
        %v3245 = vld [vmem:[#allocation10 + $0x368] sm:$0xff]
        %v3246 = vld [vmem:[#allocation10 + $0x370] sm:$0xff]
        %v3247 = vld [vmem:[#allocation10 + $0x378] sm:$0xff]
        %v3248 = vld [vmem:[#allocation10 + $0x380] sm:$0xff]
        %v3249 = vld [vmem:[#allocation10 + $0x388] sm:$0xff]
        %v3250 = vld [vmem:[#allocation10 + $0x390] sm:$0xff]
        %v3251 = vld [vmem:[#allocation10 + $0x398] sm:$0xff]
        %v3252 = vld [vmem:[#allocation10 + $0x3a0] sm:$0xff]
        %v3253 = vld [vmem:[#allocation10 + $0x3a8] sm:$0xff]
        %v3254 = vld [vmem:[#allocation10 + $0x3b0] sm:$0xff]
        %v3255 = vld [vmem:[#allocation10 + $0x3b8] sm:$0xff]
        %v3256 = vld [vmem:[#allocation10 + $0x3c0] sm:$0xff]
        %v3257 = vld [vmem:[#allocation10 + $0x3c8] sm:$0xff]
        %v3258 = vld [vmem:[#allocation10 + $0x3d0] sm:$0xff]
        %v3259 = vld [vmem:[#allocation10 + $0x3d8] sm:$0xff]
        %v3260 = vld [vmem:[#allocation10 + $0x3e0] sm:$0xff]
        %v3261 = vld [vmem:[#allocation10 + $0x3e8] sm:$0xff]
        %v3262 = vld [vmem:[#allocation10 + $0x3f0] sm:$0xff]
        %v3263 = vld [vmem:[#allocation10 + $0x3f8] sm:$0xff]
        %v3264 = vld [vmem:[#allocation10 + $0x400] sm:$0xff]
        %v3265 = vld [vmem:[#allocation10 + $0x408] sm:$0xff]
        %v3266 = vld [vmem:[#allocation10 + $0x410] sm:$0xff]
        %v3267 = vld [vmem:[#allocation10 + $0x418] sm:$0xff]
        %v3268 = vld [vmem:[#allocation10 + $0x420] sm:$0xff]
        %v3269 = vld [vmem:[#allocation10 + $0x428] sm:$0xff]
        %v3270 = vld [vmem:[#allocation10 + $0x430] sm:$0xff]
        %v3271 = vld [vmem:[#allocation10 + $0x438] sm:$0xff]
        %v3272 = vld [vmem:[#allocation10 + $0x440] sm:$0xff]
        %v3273 = vld [vmem:[#allocation10 + $0x448] sm:$0xff]
        %v3274 = vld [vmem:[#allocation10 + $0x450] sm:$0xff]
        %v3275 = vld [vmem:[#allocation10 + $0x458] sm:$0xff]
        %v3276 = vld [vmem:[#allocation10 + $0x460] sm:$0xff]
        %v3277 = vld [vmem:[#allocation10 + $0x468] sm:$0xff]
        %v3278 = vld [vmem:[#allocation10 + $0x470] sm:$0xff]
        %v3279 = vld [vmem:[#allocation10 + $0x478] sm:$0xff]
        %v3280 = vld [vmem:[#allocation10 + $0x480] sm:$0xff]
        %v3281 = vld [vmem:[#allocation10 + $0x488] sm:$0xff]
        %v3282 = vld [vmem:[#allocation10 + $0x490] sm:$0xff]
        %v3283 = vld [vmem:[#allocation10 + $0x498] sm:$0xff]
        %v3284 = vld [vmem:[#allocation10 + $0x4a0] sm:$0xff]
        %v3285 = vld [vmem:[#allocation10 + $0x4a8] sm:$0xff]
        %v3286 = vld [vmem:[#allocation10 + $0x4b0] sm:$0xff]
        %v3287 = vld [vmem:[#allocation10 + $0x4b8] sm:$0xff]
        %v3288 = vld [vmem:[#allocation10 + $0x4c0] sm:$0xff]
        %v3289 = vld [vmem:[#allocation10 + $0x4c8] sm:$0xff]
        %v3290 = vld [vmem:[#allocation10 + $0x4d0] sm:$0xff]
        %v3291 = vld [vmem:[#allocation10 + $0x4d8] sm:$0xff]
        %v3292 = vld [vmem:[#allocation10 + $0x4e0] sm:$0xff]
        %v3293 = vld [vmem:[#allocation10 + $0x4e8] sm:$0xff]
        %v3294 = vld [vmem:[#allocation10 + $0x4f0] sm:$0xff]
        %v3295 = vld [vmem:[#allocation10 + $0x4f8] sm:$0xff]
        %v3296 = vld [vmem:[#allocation10 + $0x500] sm:$0xff]
        %v3297 = vld [vmem:[#allocation10 + $0x508] sm:$0xff]
        %v3298 = vld [vmem:[#allocation10 + $0x510] sm:$0xff]
        %v3299 = vld [vmem:[#allocation10 + $0x518] sm:$0xff]
        %v3300 = vld [vmem:[#allocation10 + $0x520] sm:$0xff]
        %v3301 = vld [vmem:[#allocation10 + $0x528] sm:$0xff]
        %v3302 = vld [vmem:[#allocation10 + $0x530] sm:$0xff]
        %v3303 = vld [vmem:[#allocation10 + $0x538] sm:$0xff]
        %v3304 = vld [vmem:[#allocation10 + $0x540] sm:$0xff]
        %v3305 = vld [vmem:[#allocation10 + $0x548] sm:$0xff]
        %v3306 = vld [vmem:[#allocation10 + $0x550] sm:$0xff]
        %v3307 = vld [vmem:[#allocation10 + $0x558] sm:$0xff]
        %v3308 = vld [vmem:[#allocation10 + $0x560] sm:$0xff]
        %v3309 = vld [vmem:[#allocation10 + $0x568] sm:$0xff]
        %v3310 = vld [vmem:[#allocation10 + $0x570] sm:$0xff]
        %v3311 = vld [vmem:[#allocation10 + $0x578] sm:$0xff]
        %v3312 = vld [vmem:[#allocation10 + $0x580] sm:$0xff]
        %v3313 = vld [vmem:[#allocation10 + $0x588] sm:$0xff]
        %v3314 = vld [vmem:[#allocation10 + $0x590] sm:$0xff]
        %v3315 = vld [vmem:[#allocation10 + $0x598] sm:$0xff]
        %v3316 = vld [vmem:[#allocation10 + $0x5a0] sm:$0xff]
        %v3317 = vld [vmem:[#allocation10 + $0x5a8] sm:$0xff]
        %v3318 = vld [vmem:[#allocation10 + $0x5b0] sm:$0xff]
        %v3319 = vld [vmem:[#allocation10 + $0x5b8] sm:$0xff]
        %v3320 = vld [vmem:[#allocation10 + $0x5c0] sm:$0xff]
        %v3321 = vld [vmem:[#allocation10 + $0x5c8] sm:$0xff]
        %v3322 = vld [vmem:[#allocation10 + $0x5d0] sm:$0xff]
        %v3323 = vld [vmem:[#allocation10 + $0x5d8] sm:$0xff]
        %v3324 = vld [vmem:[#allocation10 + $0x5e0] sm:$0xff]
        %v3325 = vld [vmem:[#allocation10 + $0x5e8] sm:$0xff]
        %v3326 = vld [vmem:[#allocation10 + $0x5f0] sm:$0xff]
        %v3327 = vld [vmem:[#allocation10 + $0x5f8] sm:$0xff]
        %v3328 = vld [vmem:[#allocation10 + $0x600] sm:$0xff]
        %v3329 = vld [vmem:[#allocation10 + $0x608] sm:$0xff]
        %v3330 = vld [vmem:[#allocation10 + $0x610] sm:$0xff]
        %v3331 = vld [vmem:[#allocation10 + $0x618] sm:$0xff]
        %v3332 = vld [vmem:[#allocation10 + $0x620] sm:$0xff]
        %v3333 = vld [vmem:[#allocation10 + $0x628] sm:$0xff]
        %v3334 = vld [vmem:[#allocation10 + $0x630] sm:$0xff]
        %v3335 = vld [vmem:[#allocation10 + $0x638] sm:$0xff]
        %v3336 = vld [vmem:[#allocation10 + $0x640] sm:$0xff]
        %v3337 = vld [vmem:[#allocation10 + $0x648] sm:$0xff]
        %v3338 = vld [vmem:[#allocation10 + $0x650] sm:$0xff]
        %v3339 = vld [vmem:[#allocation10 + $0x658] sm:$0xff]
        %v3340 = vld [vmem:[#allocation10 + $0x660] sm:$0xff]
        %v3341 = vld [vmem:[#allocation10 + $0x668] sm:$0xff]
        %v3342 = vld [vmem:[#allocation10 + $0x670] sm:$0xff]
        %v3343 = vld [vmem:[#allocation10 + $0x678] sm:$0xff]
        %v3344 = vld [vmem:[#allocation10 + $0x680] sm:$0xff]
        %v3345 = vld [vmem:[#allocation10 + $0x688] sm:$0xff]
        %v3346 = vld [vmem:[#allocation10 + $0x690] sm:$0xff]
        %v3347 = vld [vmem:[#allocation10 + $0x698] sm:$0xff]
        %v3348 = vld [vmem:[#allocation10 + $0x6a0] sm:$0xff]
        %v3349 = vld [vmem:[#allocation10 + $0x6a8] sm:$0xff]
        %v3350 = vld [vmem:[#allocation10 + $0x6b0] sm:$0xff]
        %v3351 = vld [vmem:[#allocation10 + $0x6b8] sm:$0xff]
        %v3352 = vld [vmem:[#allocation10 + $0x6c0] sm:$0xff]
        %v3353 = vld [vmem:[#allocation10 + $0x6c8] sm:$0xff]
        %v3354 = vld [vmem:[#allocation10 + $0x6d0] sm:$0xff]
        %v3355 = vld [vmem:[#allocation10 + $0x6d8] sm:$0xff]
        %v3356 = vld [vmem:[#allocation10 + $0x6e0] sm:$0xff]
        %v3357 = vld [vmem:[#allocation10 + $0x6e8] sm:$0xff]
        %v3358 = vld [vmem:[#allocation10 + $0x6f0] sm:$0xff]
        %v3359 = vld [vmem:[#allocation10 + $0x6f8] sm:$0xff]
        %v3360 = vld [vmem:[#allocation10 + $0x700] sm:$0xff]
        %v3361 = vld [vmem:[#allocation10 + $0x708] sm:$0xff]
        %v3362 = vld [vmem:[#allocation10 + $0x710] sm:$0xff]
        %v3363 = vld [vmem:[#allocation10 + $0x718] sm:$0xff]
        %v3364 = vld [vmem:[#allocation10 + $0x720] sm:$0xff]
        %v3365 = vld [vmem:[#allocation10 + $0x728] sm:$0xff]
        %v3366 = vld [vmem:[#allocation10 + $0x730] sm:$0xff]
        %v3367 = vld [vmem:[#allocation10 + $0x738] sm:$0xff]
        %v3368 = vld [vmem:[#allocation10 + $0x740] sm:$0xff]
        %v3369 = vld [vmem:[#allocation10 + $0x748] sm:$0xff]
        %v3370 = vld [vmem:[#allocation10 + $0x750] sm:$0xff]
        %v3371 = vld [vmem:[#allocation10 + $0x758] sm:$0xff]
        %v3372 = vld [vmem:[#allocation10 + $0x760] sm:$0xff]
        %v3373 = vld [vmem:[#allocation10 + $0x768] sm:$0xff]
        %v3374 = vld [vmem:[#allocation10 + $0x770] sm:$0xff]
        %v3375 = vld [vmem:[#allocation10 + $0x778] sm:$0xff]
        %v3376 = vld [vmem:[#allocation10 + $0x780] sm:$0xff]
        %v3377 = vld [vmem:[#allocation10 + $0x788] sm:$0xff]
        %v3378 = vld [vmem:[#allocation10 + $0x790] sm:$0xff]
        %v3379 = vld [vmem:[#allocation10 + $0x798] sm:$0xff]
        %v3380 = vld [vmem:[#allocation10 + $0x7a0] sm:$0xff]
        %v3381 = vld [vmem:[#allocation10 + $0x7a8] sm:$0xff]
        %v3382 = vld [vmem:[#allocation10 + $0x7b0] sm:$0xff]
        %v3383 = vld [vmem:[#allocation10 + $0x7b8] sm:$0xff]
        %v3384 = vld [vmem:[#allocation10 + $0x7c0] sm:$0xff]
        %v3385 = vld [vmem:[#allocation10 + $0x7c8] sm:$0xff]
        %v3386 = vld [vmem:[#allocation10 + $0x7d0] sm:$0xff]
        %v3387 = vld [vmem:[#allocation10 + $0x7d8] sm:$0xff]
        %v3388 = vld [vmem:[#allocation10 + $0x7e0] sm:$0xff]
        %v3389 = vld [vmem:[#allocation10 + $0x7e8] sm:$0xff]
        %v3390 = vld [vmem:[#allocation10 + $0x7f0] sm:$0xff]
        %v3391 = vld [vmem:[#allocation10 + $0x7f8] sm:$0xff]
        %v3392 = vld [vmem:[%s21] sm:$0xf]
        %v3393 = vpack.c.bf16 %v3128, %v3128
        %v3394 = vpack.c.bf16 %v3129, %v3129
        %v3395 = vpack.c.bf16 %v3130, %v3130
        %v3396 = vpack.c.bf16 %v3131, %v3131
        %v3397 = vpack.c.bf16 %v3132, %v3132
        %v3398 = vpack.c.bf16 %v3133, %v3133
        %v3399 = vpack.c.bf16 %v3134, %v3134
        %v3400 = vpack.c.bf16 %v3135, %v3135
        %v3657 = vunpack.c.l.b16 %v3136
        %v3658 = vunpack.c.h.b16 %v3136
        %v3659 = vunpack.c.l.b16 %v3137
        %v3660 = vunpack.c.h.b16 %v3137
        %v3661 = vunpack.c.l.b16 %v3138
        %v3662 = vunpack.c.h.b16 %v3138
        %v3663 = vunpack.c.l.b16 %v3139
        %v3664 = vunpack.c.h.b16 %v3139
        %v3665 = vunpack.c.l.b16 %v3140
        %v3666 = vunpack.c.h.b16 %v3140
        %v3667 = vunpack.c.l.b16 %v3141
        %v3668 = vunpack.c.h.b16 %v3141
        %v3669 = vunpack.c.l.b16 %v3142
        %v3670 = vunpack.c.h.b16 %v3142
        %v3671 = vunpack.c.l.b16 %v3143
        %v3672 = vunpack.c.h.b16 %v3143
        %v3673 = vunpack.c.l.b16 %v3144
        %v3674 = vunpack.c.h.b16 %v3144
        %v3675 = vunpack.c.l.b16 %v3145
        %v3676 = vunpack.c.h.b16 %v3145
        %v3677 = vunpack.c.l.b16 %v3146
        %v3678 = vunpack.c.h.b16 %v3146
        %v3679 = vunpack.c.l.b16 %v3147
        %v3680 = vunpack.c.h.b16 %v3147
        %v3681 = vunpack.c.l.b16 %v3148
        %v3682 = vunpack.c.h.b16 %v3148
        %v3683 = vunpack.c.l.b16 %v3149
        %v3684 = vunpack.c.h.b16 %v3149
        %v3685 = vunpack.c.l.b16 %v3150
        %v3686 = vunpack.c.h.b16 %v3150
        %v3687 = vunpack.c.l.b16 %v3151
        %v3688 = vunpack.c.h.b16 %v3151
        %v3689 = vunpack.c.l.b16 %v3152
        %v3690 = vunpack.c.h.b16 %v3152
        %v3691 = vunpack.c.l.b16 %v3153
        %v3692 = vunpack.c.h.b16 %v3153
        %v3693 = vunpack.c.l.b16 %v3154
        %v3694 = vunpack.c.h.b16 %v3154
        %v3695 = vunpack.c.l.b16 %v3155
        %v3696 = vunpack.c.h.b16 %v3155
        %v3697 = vunpack.c.l.b16 %v3156
        %v3698 = vunpack.c.h.b16 %v3156
        %v3699 = vunpack.c.l.b16 %v3157
        %v3700 = vunpack.c.h.b16 %v3157
        %v3701 = vunpack.c.l.b16 %v3158
        %v3702 = vunpack.c.h.b16 %v3158
        %v3703 = vunpack.c.l.b16 %v3159
        %v3704 = vunpack.c.h.b16 %v3159
        %v3705 = vunpack.c.l.b16 %v3160
        %v3706 = vunpack.c.h.b16 %v3160
        %v3707 = vunpack.c.l.b16 %v3161
        %v3708 = vunpack.c.h.b16 %v3161
        %v3709 = vunpack.c.l.b16 %v3162
        %v3710 = vunpack.c.h.b16 %v3162
        %v3711 = vunpack.c.l.b16 %v3163
        %v3712 = vunpack.c.h.b16 %v3163
        %v3713 = vunpack.c.l.b16 %v3164
        %v3714 = vunpack.c.h.b16 %v3164
        %v3715 = vunpack.c.l.b16 %v3165
        %v3716 = vunpack.c.h.b16 %v3165
        %v3717 = vunpack.c.l.b16 %v3166
        %v3718 = vunpack.c.h.b16 %v3166
        %v3719 = vunpack.c.l.b16 %v3167
        %v3720 = vunpack.c.h.b16 %v3167
        %v3721 = vunpack.c.l.b16 %v3168
        %v3722 = vunpack.c.h.b16 %v3168
        %v3723 = vunpack.c.l.b16 %v3169
        %v3724 = vunpack.c.h.b16 %v3169
        %v3725 = vunpack.c.l.b16 %v3170
        %v3726 = vunpack.c.h.b16 %v3170
        %v3727 = vunpack.c.l.b16 %v3171
        %v3728 = vunpack.c.h.b16 %v3171
        %v3729 = vunpack.c.l.b16 %v3172
        %v3730 = vunpack.c.h.b16 %v3172
        %v3731 = vunpack.c.l.b16 %v3173
        %v3732 = vunpack.c.h.b16 %v3173
        %v3733 = vunpack.c.l.b16 %v3174
        %v3734 = vunpack.c.h.b16 %v3174
        %v3735 = vunpack.c.l.b16 %v3175
        %v3736 = vunpack.c.h.b16 %v3175
        %v3737 = vunpack.c.l.b16 %v3176
        %v3738 = vunpack.c.h.b16 %v3176
        %v3739 = vunpack.c.l.b16 %v3177
        %v3740 = vunpack.c.h.b16 %v3177
        %v3741 = vunpack.c.l.b16 %v3178
        %v3742 = vunpack.c.h.b16 %v3178
        %v3743 = vunpack.c.l.b16 %v3179
        %v3744 = vunpack.c.h.b16 %v3179
        %v3745 = vunpack.c.l.b16 %v3180
        %v3746 = vunpack.c.h.b16 %v3180
        %v3747 = vunpack.c.l.b16 %v3181
        %v3748 = vunpack.c.h.b16 %v3181
        %v3749 = vunpack.c.l.b16 %v3182
        %v3750 = vunpack.c.h.b16 %v3182
        %v3751 = vunpack.c.l.b16 %v3183
        %v3752 = vunpack.c.h.b16 %v3183
        %v3753 = vunpack.c.l.b16 %v3184
        %v3754 = vunpack.c.h.b16 %v3184
        %v3755 = vunpack.c.l.b16 %v3185
        %v3756 = vunpack.c.h.b16 %v3185
        %v3757 = vunpack.c.l.b16 %v3186
        %v3758 = vunpack.c.h.b16 %v3186
        %v3759 = vunpack.c.l.b16 %v3187
        %v3760 = vunpack.c.h.b16 %v3187
        %v3761 = vunpack.c.l.b16 %v3188
        %v3762 = vunpack.c.h.b16 %v3188
        %v3763 = vunpack.c.l.b16 %v3189
        %v3764 = vunpack.c.h.b16 %v3189
        %v3765 = vunpack.c.l.b16 %v3190
        %v3766 = vunpack.c.h.b16 %v3190
        %v3767 = vunpack.c.l.b16 %v3191
        %v3768 = vunpack.c.h.b16 %v3191
        %v3769 = vunpack.c.l.b16 %v3192
        %v3770 = vunpack.c.h.b16 %v3192
        %v3771 = vunpack.c.l.b16 %v3193
        %v3772 = vunpack.c.h.b16 %v3193
        %v3773 = vunpack.c.l.b16 %v3194
        %v3774 = vunpack.c.h.b16 %v3194
        %v3775 = vunpack.c.l.b16 %v3195
        %v3776 = vunpack.c.h.b16 %v3195
        %v3777 = vunpack.c.l.b16 %v3196
        %v3778 = vunpack.c.h.b16 %v3196
        %v3779 = vunpack.c.l.b16 %v3197
        %v3780 = vunpack.c.h.b16 %v3197
        %v3781 = vunpack.c.l.b16 %v3198
        %v3782 = vunpack.c.h.b16 %v3198
        %v3783 = vunpack.c.l.b16 %v3199
        %v3784 = vunpack.c.h.b16 %v3199
        %v3785 = vunpack.c.l.b16 %v3200
        %v3786 = vunpack.c.h.b16 %v3200
        %v3787 = vunpack.c.l.b16 %v3201
        %v3788 = vunpack.c.h.b16 %v3201
        %v3789 = vunpack.c.l.b16 %v3202
        %v3790 = vunpack.c.h.b16 %v3202
        %v3791 = vunpack.c.l.b16 %v3203
        %v3792 = vunpack.c.h.b16 %v3203
        %v3793 = vunpack.c.l.b16 %v3204
        %v3794 = vunpack.c.h.b16 %v3204
        %v3795 = vunpack.c.l.b16 %v3205
        %v3796 = vunpack.c.h.b16 %v3205
        %v3797 = vunpack.c.l.b16 %v3206
        %v3798 = vunpack.c.h.b16 %v3206
        %v3799 = vunpack.c.l.b16 %v3207
        %v3800 = vunpack.c.h.b16 %v3207
        %v3801 = vunpack.c.l.b16 %v3208
        %v3802 = vunpack.c.h.b16 %v3208
        %v3803 = vunpack.c.l.b16 %v3209
        %v3804 = vunpack.c.h.b16 %v3209
        %v3805 = vunpack.c.l.b16 %v3210
        %v3806 = vunpack.c.h.b16 %v3210
        %v3807 = vunpack.c.l.b16 %v3211
        %v3808 = vunpack.c.h.b16 %v3211
        %v3809 = vunpack.c.l.b16 %v3212
        %v3810 = vunpack.c.h.b16 %v3212
        %v3811 = vunpack.c.l.b16 %v3213
        %v3812 = vunpack.c.h.b16 %v3213
        %v3813 = vunpack.c.l.b16 %v3214
        %v3814 = vunpack.c.h.b16 %v3214
        %v3815 = vunpack.c.l.b16 %v3215
        %v3816 = vunpack.c.h.b16 %v3215
        %v3817 = vunpack.c.l.b16 %v3216
        %v3818 = vunpack.c.h.b16 %v3216
        %v3819 = vunpack.c.l.b16 %v3217
        %v3820 = vunpack.c.h.b16 %v3217
        %v3821 = vunpack.c.l.b16 %v3218
        %v3822 = vunpack.c.h.b16 %v3218
        %v3823 = vunpack.c.l.b16 %v3219
        %v3824 = vunpack.c.h.b16 %v3219
        %v3825 = vunpack.c.l.b16 %v3220
        %v3826 = vunpack.c.h.b16 %v3220
        %v3827 = vunpack.c.l.b16 %v3221
        %v3828 = vunpack.c.h.b16 %v3221
        %v3829 = vunpack.c.l.b16 %v3222
        %v3830 = vunpack.c.h.b16 %v3222
        %v3831 = vunpack.c.l.b16 %v3223
        %v3832 = vunpack.c.h.b16 %v3223
        %v3833 = vunpack.c.l.b16 %v3224
        %v3834 = vunpack.c.h.b16 %v3224
        %v3835 = vunpack.c.l.b16 %v3225
        %v3836 = vunpack.c.h.b16 %v3225
        %v3837 = vunpack.c.l.b16 %v3226
        %v3838 = vunpack.c.h.b16 %v3226
        %v3839 = vunpack.c.l.b16 %v3227
        %v3840 = vunpack.c.h.b16 %v3227
        %v3841 = vunpack.c.l.b16 %v3228
        %v3842 = vunpack.c.h.b16 %v3228
        %v3843 = vunpack.c.l.b16 %v3229
        %v3844 = vunpack.c.h.b16 %v3229
        %v3845 = vunpack.c.l.b16 %v3230
        %v3846 = vunpack.c.h.b16 %v3230
        %v3847 = vunpack.c.l.b16 %v3231
        %v3848 = vunpack.c.h.b16 %v3231
        %v3849 = vunpack.c.l.b16 %v3232
        %v3850 = vunpack.c.h.b16 %v3232
        %v3851 = vunpack.c.l.b16 %v3233
        %v3852 = vunpack.c.h.b16 %v3233
        %v3853 = vunpack.c.l.b16 %v3234
        %v3854 = vunpack.c.h.b16 %v3234
        %v3855 = vunpack.c.l.b16 %v3235
        %v3856 = vunpack.c.h.b16 %v3235
        %v3857 = vunpack.c.l.b16 %v3236
        %v3858 = vunpack.c.h.b16 %v3236
        %v3859 = vunpack.c.l.b16 %v3237
        %v3860 = vunpack.c.h.b16 %v3237
        %v3861 = vunpack.c.l.b16 %v3238
        %v3862 = vunpack.c.h.b16 %v3238
        %v3863 = vunpack.c.l.b16 %v3239
        %v3864 = vunpack.c.h.b16 %v3239
        %v3865 = vunpack.c.l.b16 %v3240
        %v3866 = vunpack.c.h.b16 %v3240
        %v3867 = vunpack.c.l.b16 %v3241
        %v3868 = vunpack.c.h.b16 %v3241
        %v3869 = vunpack.c.l.b16 %v3242
        %v3870 = vunpack.c.h.b16 %v3242
        %v3871 = vunpack.c.l.b16 %v3243
        %v3872 = vunpack.c.h.b16 %v3243
        %v3873 = vunpack.c.l.b16 %v3244
        %v3874 = vunpack.c.h.b16 %v3244
        %v3875 = vunpack.c.l.b16 %v3245
        %v3876 = vunpack.c.h.b16 %v3245
        %v3877 = vunpack.c.l.b16 %v3246
        %v3878 = vunpack.c.h.b16 %v3246
        %v3879 = vunpack.c.l.b16 %v3247
        %v3880 = vunpack.c.h.b16 %v3247
        %v3881 = vunpack.c.l.b16 %v3248
        %v3882 = vunpack.c.h.b16 %v3248
        %v3883 = vunpack.c.l.b16 %v3249
        %v3884 = vunpack.c.h.b16 %v3249
        %v3885 = vunpack.c.l.b16 %v3250
        %v3886 = vunpack.c.h.b16 %v3250
        %v3887 = vunpack.c.l.b16 %v3251
        %v3888 = vunpack.c.h.b16 %v3251
        %v3889 = vunpack.c.l.b16 %v3252
        %v3890 = vunpack.c.h.b16 %v3252
        %v3891 = vunpack.c.l.b16 %v3253
        %v3892 = vunpack.c.h.b16 %v3253
        %v3893 = vunpack.c.l.b16 %v3254
        %v3894 = vunpack.c.h.b16 %v3254
        %v3895 = vunpack.c.l.b16 %v3255
        %v3896 = vunpack.c.h.b16 %v3255
        %v3897 = vunpack.c.l.b16 %v3256
        %v3898 = vunpack.c.h.b16 %v3256
        %v3899 = vunpack.c.l.b16 %v3257
        %v3900 = vunpack.c.h.b16 %v3257
        %v3901 = vunpack.c.l.b16 %v3258
        %v3902 = vunpack.c.h.b16 %v3258
        %v3903 = vunpack.c.l.b16 %v3259
        %v3904 = vunpack.c.h.b16 %v3259
        %v3905 = vunpack.c.l.b16 %v3260
        %v3906 = vunpack.c.h.b16 %v3260
        %v3907 = vunpack.c.l.b16 %v3261
        %v3908 = vunpack.c.h.b16 %v3261
        %v3909 = vunpack.c.l.b16 %v3262
        %v3910 = vunpack.c.h.b16 %v3262
        %v3911 = vunpack.c.l.b16 %v3263
        %v3912 = vunpack.c.h.b16 %v3263
        %v3913 = vunpack.c.l.b16 %v3264
        %v3914 = vunpack.c.h.b16 %v3264
        %v3915 = vunpack.c.l.b16 %v3265
        %v3916 = vunpack.c.h.b16 %v3265
        %v3917 = vunpack.c.l.b16 %v3266
        %v3918 = vunpack.c.h.b16 %v3266
        %v3919 = vunpack.c.l.b16 %v3267
        %v3920 = vunpack.c.h.b16 %v3267
        %v3921 = vunpack.c.l.b16 %v3268
        %v3922 = vunpack.c.h.b16 %v3268
        %v3923 = vunpack.c.l.b16 %v3269
        %v3924 = vunpack.c.h.b16 %v3269
        %v3925 = vunpack.c.l.b16 %v3270
        %v3926 = vunpack.c.h.b16 %v3270
        %v3927 = vunpack.c.l.b16 %v3271
        %v3928 = vunpack.c.h.b16 %v3271
        %v3929 = vunpack.c.l.b16 %v3272
        %v3930 = vunpack.c.h.b16 %v3272
        %v3931 = vunpack.c.l.b16 %v3273
        %v3932 = vunpack.c.h.b16 %v3273
        %v3933 = vunpack.c.l.b16 %v3274
        %v3934 = vunpack.c.h.b16 %v3274
        %v3935 = vunpack.c.l.b16 %v3275
        %v3936 = vunpack.c.h.b16 %v3275
        %v3937 = vunpack.c.l.b16 %v3276
        %v3938 = vunpack.c.h.b16 %v3276
        %v3939 = vunpack.c.l.b16 %v3277
        %v3940 = vunpack.c.h.b16 %v3277
        %v3941 = vunpack.c.l.b16 %v3278
        %v3942 = vunpack.c.h.b16 %v3278
        %v3943 = vunpack.c.l.b16 %v3279
        %v3944 = vunpack.c.h.b16 %v3279
        %v3945 = vunpack.c.l.b16 %v3280
        %v3946 = vunpack.c.h.b16 %v3280
        %v3947 = vunpack.c.l.b16 %v3281
        %v3948 = vunpack.c.h.b16 %v3281
        %v3949 = vunpack.c.l.b16 %v3282
        %v3950 = vunpack.c.h.b16 %v3282
        %v3951 = vunpack.c.l.b16 %v3283
        %v3952 = vunpack.c.h.b16 %v3283
        %v3953 = vunpack.c.l.b16 %v3284
        %v3954 = vunpack.c.h.b16 %v3284
        %v3955 = vunpack.c.l.b16 %v3285
        %v3956 = vunpack.c.h.b16 %v3285
        %v3957 = vunpack.c.l.b16 %v3286
        %v3958 = vunpack.c.h.b16 %v3286
        %v3959 = vunpack.c.l.b16 %v3287
        %v3960 = vunpack.c.h.b16 %v3287
        %v3961 = vunpack.c.l.b16 %v3288
        %v3962 = vunpack.c.h.b16 %v3288
        %v3963 = vunpack.c.l.b16 %v3289
        %v3964 = vunpack.c.h.b16 %v3289
        %v3965 = vunpack.c.l.b16 %v3290
        %v3966 = vunpack.c.h.b16 %v3290
        %v3967 = vunpack.c.l.b16 %v3291
        %v3968 = vunpack.c.h.b16 %v3291
        %v3969 = vunpack.c.l.b16 %v3292
        %v3970 = vunpack.c.h.b16 %v3292
        %v3971 = vunpack.c.l.b16 %v3293
        %v3972 = vunpack.c.h.b16 %v3293
        %v3973 = vunpack.c.l.b16 %v3294
        %v3974 = vunpack.c.h.b16 %v3294
        %v3975 = vunpack.c.l.b16 %v3295
        %v3976 = vunpack.c.h.b16 %v3295
        %v3977 = vunpack.c.l.b16 %v3296
        %v3978 = vunpack.c.h.b16 %v3296
        %v3979 = vunpack.c.l.b16 %v3297
        %v3980 = vunpack.c.h.b16 %v3297
        %v3981 = vunpack.c.l.b16 %v3298
        %v3982 = vunpack.c.h.b16 %v3298
        %v3983 = vunpack.c.l.b16 %v3299
        %v3984 = vunpack.c.h.b16 %v3299
        %v3985 = vunpack.c.l.b16 %v3300
        %v3986 = vunpack.c.h.b16 %v3300
        %v3987 = vunpack.c.l.b16 %v3301
        %v3988 = vunpack.c.h.b16 %v3301
        %v3989 = vunpack.c.l.b16 %v3302
        %v3990 = vunpack.c.h.b16 %v3302
        %v3991 = vunpack.c.l.b16 %v3303
        %v3992 = vunpack.c.h.b16 %v3303
        %v3993 = vunpack.c.l.b16 %v3304
        %v3994 = vunpack.c.h.b16 %v3304
        %v3995 = vunpack.c.l.b16 %v3305
        %v3996 = vunpack.c.h.b16 %v3305
        %v3997 = vunpack.c.l.b16 %v3306
        %v3998 = vunpack.c.h.b16 %v3306
        %v3999 = vunpack.c.l.b16 %v3307
        %v4000 = vunpack.c.h.b16 %v3307
        %v4001 = vunpack.c.l.b16 %v3308
        %v4002 = vunpack.c.h.b16 %v3308
        %v4003 = vunpack.c.l.b16 %v3309
        %v4004 = vunpack.c.h.b16 %v3309
        %v4005 = vunpack.c.l.b16 %v3310
        %v4006 = vunpack.c.h.b16 %v3310
        %v4007 = vunpack.c.l.b16 %v3311
        %v4008 = vunpack.c.h.b16 %v3311
        %v4009 = vunpack.c.l.b16 %v3312
        %v4010 = vunpack.c.h.b16 %v3312
        %v4011 = vunpack.c.l.b16 %v3313
        %v4012 = vunpack.c.h.b16 %v3313
        %v4013 = vunpack.c.l.b16 %v3314
        %v4014 = vunpack.c.h.b16 %v3314
        %v4015 = vunpack.c.l.b16 %v3315
        %v4016 = vunpack.c.h.b16 %v3315
        %v4017 = vunpack.c.l.b16 %v3316
        %v4018 = vunpack.c.h.b16 %v3316
        %v4019 = vunpack.c.l.b16 %v3317
        %v4020 = vunpack.c.h.b16 %v3317
        %v4021 = vunpack.c.l.b16 %v3318
        %v4022 = vunpack.c.h.b16 %v3318
        %v4023 = vunpack.c.l.b16 %v3319
        %v4024 = vunpack.c.h.b16 %v3319
        %v4025 = vunpack.c.l.b16 %v3320
        %v4026 = vunpack.c.h.b16 %v3320
        %v4027 = vunpack.c.l.b16 %v3321
        %v4028 = vunpack.c.h.b16 %v3321
        %v4029 = vunpack.c.l.b16 %v3322
        %v4030 = vunpack.c.h.b16 %v3322
        %v4031 = vunpack.c.l.b16 %v3323
        %v4032 = vunpack.c.h.b16 %v3323
        %v4033 = vunpack.c.l.b16 %v3324
        %v4034 = vunpack.c.h.b16 %v3324
        %v4035 = vunpack.c.l.b16 %v3325
        %v4036 = vunpack.c.h.b16 %v3325
        %v4037 = vunpack.c.l.b16 %v3326
        %v4038 = vunpack.c.h.b16 %v3326
        %v4039 = vunpack.c.l.b16 %v3327
        %v4040 = vunpack.c.h.b16 %v3327
        %v4041 = vunpack.c.l.b16 %v3328
        %v4042 = vunpack.c.h.b16 %v3328
        %v4043 = vunpack.c.l.b16 %v3329
        %v4044 = vunpack.c.h.b16 %v3329
        %v4045 = vunpack.c.l.b16 %v3330
        %v4046 = vunpack.c.h.b16 %v3330
        %v4047 = vunpack.c.l.b16 %v3331
        %v4048 = vunpack.c.h.b16 %v3331
        %v4049 = vunpack.c.l.b16 %v3332
        %v4050 = vunpack.c.h.b16 %v3332
        %v4051 = vunpack.c.l.b16 %v3333
        %v4052 = vunpack.c.h.b16 %v3333
        %v4053 = vunpack.c.l.b16 %v3334
        %v4054 = vunpack.c.h.b16 %v3334
        %v4055 = vunpack.c.l.b16 %v3335
        %v4056 = vunpack.c.h.b16 %v3335
        %v4057 = vunpack.c.l.b16 %v3336
        %v4058 = vunpack.c.h.b16 %v3336
        %v4059 = vunpack.c.l.b16 %v3337
        %v4060 = vunpack.c.h.b16 %v3337
        %v4061 = vunpack.c.l.b16 %v3338
        %v4062 = vunpack.c.h.b16 %v3338
        %v4063 = vunpack.c.l.b16 %v3339
        %v4064 = vunpack.c.h.b16 %v3339
        %v4065 = vunpack.c.l.b16 %v3340
        %v4066 = vunpack.c.h.b16 %v3340
        %v4067 = vunpack.c.l.b16 %v3341
        %v4068 = vunpack.c.h.b16 %v3341
        %v4069 = vunpack.c.l.b16 %v3342
        %v4070 = vunpack.c.h.b16 %v3342
        %v4071 = vunpack.c.l.b16 %v3343
        %v4072 = vunpack.c.h.b16 %v3343
        %v4073 = vunpack.c.l.b16 %v3344
        %v4074 = vunpack.c.h.b16 %v3344
        %v4075 = vunpack.c.l.b16 %v3345
        %v4076 = vunpack.c.h.b16 %v3345
        %v4077 = vunpack.c.l.b16 %v3346
        %v4078 = vunpack.c.h.b16 %v3346
        %v4079 = vunpack.c.l.b16 %v3347
        %v4080 = vunpack.c.h.b16 %v3347
        %v4081 = vunpack.c.l.b16 %v3348
        %v4082 = vunpack.c.h.b16 %v3348
        %v4083 = vunpack.c.l.b16 %v3349
        %v4084 = vunpack.c.h.b16 %v3349
        %v4085 = vunpack.c.l.b16 %v3350
        %v4086 = vunpack.c.h.b16 %v3350
        %v4087 = vunpack.c.l.b16 %v3351
        %v4088 = vunpack.c.h.b16 %v3351
        %v4089 = vunpack.c.l.b16 %v3352
        %v4090 = vunpack.c.h.b16 %v3352
        %v4091 = vunpack.c.l.b16 %v3353
        %v4092 = vunpack.c.h.b16 %v3353
        %v4093 = vunpack.c.l.b16 %v3354
        %v4094 = vunpack.c.h.b16 %v3354
        %v4095 = vunpack.c.l.b16 %v3355
        %v4096 = vunpack.c.h.b16 %v3355
        %v4097 = vunpack.c.l.b16 %v3356
        %v4098 = vunpack.c.h.b16 %v3356
        %v4099 = vunpack.c.l.b16 %v3357
        %v4100 = vunpack.c.h.b16 %v3357
        %v4101 = vunpack.c.l.b16 %v3358
        %v4102 = vunpack.c.h.b16 %v3358
        %v4103 = vunpack.c.l.b16 %v3359
        %v4104 = vunpack.c.h.b16 %v3359
        %v4105 = vunpack.c.l.b16 %v3360
        %v4106 = vunpack.c.h.b16 %v3360
        %v4107 = vunpack.c.l.b16 %v3361
        %v4108 = vunpack.c.h.b16 %v3361
        %v4109 = vunpack.c.l.b16 %v3362
        %v4110 = vunpack.c.h.b16 %v3362
        %v4111 = vunpack.c.l.b16 %v3363
        %v4112 = vunpack.c.h.b16 %v3363
        %v4113 = vunpack.c.l.b16 %v3364
        %v4114 = vunpack.c.h.b16 %v3364
        %v4115 = vunpack.c.l.b16 %v3365
        %v4116 = vunpack.c.h.b16 %v3365
        %v4117 = vunpack.c.l.b16 %v3366
        %v4118 = vunpack.c.h.b16 %v3366
        %v4119 = vunpack.c.l.b16 %v3367
        %v4120 = vunpack.c.h.b16 %v3367
        %v4121 = vunpack.c.l.b16 %v3368
        %v4122 = vunpack.c.h.b16 %v3368
        %v4123 = vunpack.c.l.b16 %v3369
        %v4124 = vunpack.c.h.b16 %v3369
        %v4125 = vunpack.c.l.b16 %v3370
        %v4126 = vunpack.c.h.b16 %v3370
        %v4127 = vunpack.c.l.b16 %v3371
        %v4128 = vunpack.c.h.b16 %v3371
        %v4129 = vunpack.c.l.b16 %v3372
        %v4130 = vunpack.c.h.b16 %v3372
        %v4131 = vunpack.c.l.b16 %v3373
        %v4132 = vunpack.c.h.b16 %v3373
        %v4133 = vunpack.c.l.b16 %v3374
        %v4134 = vunpack.c.h.b16 %v3374
        %v4135 = vunpack.c.l.b16 %v3375
        %v4136 = vunpack.c.h.b16 %v3375
        %v4137 = vunpack.c.l.b16 %v3376
        %v4138 = vunpack.c.h.b16 %v3376
        %v4139 = vunpack.c.l.b16 %v3377
        %v4140 = vunpack.c.h.b16 %v3377
        %v4141 = vunpack.c.l.b16 %v3378
        %v4142 = vunpack.c.h.b16 %v3378
        %v4143 = vunpack.c.l.b16 %v3379
        %v4144 = vunpack.c.h.b16 %v3379
        %v4145 = vunpack.c.l.b16 %v3380
        %v4146 = vunpack.c.h.b16 %v3380
        %v4147 = vunpack.c.l.b16 %v3381
        %v4148 = vunpack.c.h.b16 %v3381
        %v4149 = vunpack.c.l.b16 %v3382
        %v4150 = vunpack.c.h.b16 %v3382
        %v4151 = vunpack.c.l.b16 %v3383
        %v4152 = vunpack.c.h.b16 %v3383
        %v4153 = vunpack.c.l.b16 %v3384
        %v4154 = vunpack.c.h.b16 %v3384
        %v4155 = vunpack.c.l.b16 %v3385
        %v4156 = vunpack.c.h.b16 %v3385
        %v4157 = vunpack.c.l.b16 %v3386
        %v4158 = vunpack.c.h.b16 %v3386
        %v4159 = vunpack.c.l.b16 %v3387
        %v4160 = vunpack.c.h.b16 %v3387
        %v4161 = vunpack.c.l.b16 %v3388
        %v4162 = vunpack.c.h.b16 %v3388
        %v4163 = vunpack.c.l.b16 %v3389
        %v4164 = vunpack.c.h.b16 %v3389
        %v4165 = vunpack.c.l.b16 %v3390
        %v4166 = vunpack.c.h.b16 %v3390
        %v4167 = vunpack.c.l.b16 %v3391
        %v4168 = vunpack.c.h.b16 %v3391
        %v4169 = vpack.c.b16 %v3661, %v3657
        %v4170 = vpack.c.b16 %v3662, %v3658
        %v4171 = vpack.c.b16 %v3663, %v3659
        %v4172 = vpack.c.b16 %v3664, %v3660
        %v4173 = vpack.c.b16 %v3669, %v3665
        %v4174 = vpack.c.b16 %v3670, %v3666
        %v4175 = vpack.c.b16 %v3671, %v3667
        %v4176 = vpack.c.b16 %v3672, %v3668
        %v4177 = vpack.c.b16 %v3677, %v3673
        %v4178 = vpack.c.b16 %v3678, %v3674
        %v4179 = vpack.c.b16 %v3679, %v3675
        %v4180 = vpack.c.b16 %v3680, %v3676
        %v4181 = vpack.c.b16 %v3685, %v3681
        %v4182 = vpack.c.b16 %v3686, %v3682
        %v4183 = vpack.c.b16 %v3687, %v3683
        %v4184 = vpack.c.b16 %v3688, %v3684
        %v4185 = vpack.c.b16 %v3693, %v3689
        %v4186 = vpack.c.b16 %v3694, %v3690
        %v4187 = vpack.c.b16 %v3695, %v3691
        %v4188 = vpack.c.b16 %v3696, %v3692
        %v4189 = vpack.c.b16 %v3701, %v3697
        %v4190 = vpack.c.b16 %v3702, %v3698
        %v4191 = vpack.c.b16 %v3703, %v3699
        %v4192 = vpack.c.b16 %v3704, %v3700
        %v4193 = vpack.c.b16 %v3709, %v3705
        %v4194 = vpack.c.b16 %v3710, %v3706
        %v4195 = vpack.c.b16 %v3711, %v3707
        %v4196 = vpack.c.b16 %v3712, %v3708
        %v4197 = vpack.c.b16 %v3717, %v3713
        %v4198 = vpack.c.b16 %v3718, %v3714
        %v4199 = vpack.c.b16 %v3719, %v3715
        %v4200 = vpack.c.b16 %v3720, %v3716
        %v4201 = vpack.c.b16 %v3725, %v3721
        %v4202 = vpack.c.b16 %v3726, %v3722
        %v4203 = vpack.c.b16 %v3727, %v3723
        %v4204 = vpack.c.b16 %v3728, %v3724
        %v4205 = vpack.c.b16 %v3733, %v3729
        %v4206 = vpack.c.b16 %v3734, %v3730
        %v4207 = vpack.c.b16 %v3735, %v3731
        %v4208 = vpack.c.b16 %v3736, %v3732
        %v4209 = vpack.c.b16 %v3741, %v3737
        %v4210 = vpack.c.b16 %v3742, %v3738
        %v4211 = vpack.c.b16 %v3743, %v3739
        %v4212 = vpack.c.b16 %v3744, %v3740
        %v4213 = vpack.c.b16 %v3749, %v3745
        %v4214 = vpack.c.b16 %v3750, %v3746
        %v4215 = vpack.c.b16 %v3751, %v3747
        %v4216 = vpack.c.b16 %v3752, %v3748
        %v4217 = vpack.c.b16 %v3757, %v3753
        %v4218 = vpack.c.b16 %v3758, %v3754
        %v4219 = vpack.c.b16 %v3759, %v3755
        %v4220 = vpack.c.b16 %v3760, %v3756
        %v4221 = vpack.c.b16 %v3765, %v3761
        %v4222 = vpack.c.b16 %v3766, %v3762
        %v4223 = vpack.c.b16 %v3767, %v3763
        %v4224 = vpack.c.b16 %v3768, %v3764
        %v4225 = vpack.c.b16 %v3773, %v3769
        %v4226 = vpack.c.b16 %v3774, %v3770
        %v4227 = vpack.c.b16 %v3775, %v3771
        %v4228 = vpack.c.b16 %v3776, %v3772
        %v4229 = vpack.c.b16 %v3781, %v3777
        %v4230 = vpack.c.b16 %v3782, %v3778
        %v4231 = vpack.c.b16 %v3783, %v3779
        %v4232 = vpack.c.b16 %v3784, %v3780
        %v4233 = vpack.c.b16 %v3789, %v3785
        %v4234 = vpack.c.b16 %v3790, %v3786
        %v4235 = vpack.c.b16 %v3791, %v3787
        %v4236 = vpack.c.b16 %v3792, %v3788
        %v4237 = vpack.c.b16 %v3797, %v3793
        %v4238 = vpack.c.b16 %v3798, %v3794
        %v4239 = vpack.c.b16 %v3799, %v3795
        %v4240 = vpack.c.b16 %v3800, %v3796
        %v4241 = vpack.c.b16 %v3805, %v3801
        %v4242 = vpack.c.b16 %v3806, %v3802
        %v4243 = vpack.c.b16 %v3807, %v3803
        %v4244 = vpack.c.b16 %v3808, %v3804
        %v4245 = vpack.c.b16 %v3813, %v3809
        %v4246 = vpack.c.b16 %v3814, %v3810
        %v4247 = vpack.c.b16 %v3815, %v3811
        %v4248 = vpack.c.b16 %v3816, %v3812
        %v4249 = vpack.c.b16 %v3821, %v3817
        %v4250 = vpack.c.b16 %v3822, %v3818
        %v4251 = vpack.c.b16 %v3823, %v3819
        %v4252 = vpack.c.b16 %v3824, %v3820
        %v4253 = vpack.c.b16 %v3829, %v3825
        %v4254 = vpack.c.b16 %v3830, %v3826
        %v4255 = vpack.c.b16 %v3831, %v3827
        %v4256 = vpack.c.b16 %v3832, %v3828
        %v4257 = vpack.c.b16 %v3837, %v3833
        %v4258 = vpack.c.b16 %v3838, %v3834
        %v4259 = vpack.c.b16 %v3839, %v3835
        %v4260 = vpack.c.b16 %v3840, %v3836
        %v4261 = vpack.c.b16 %v3845, %v3841
        %v4262 = vpack.c.b16 %v3846, %v3842
        %v4263 = vpack.c.b16 %v3847, %v3843
        %v4264 = vpack.c.b16 %v3848, %v3844
        %v4265 = vpack.c.b16 %v3853, %v3849
        %v4266 = vpack.c.b16 %v3854, %v3850
        %v4267 = vpack.c.b16 %v3855, %v3851
        %v4268 = vpack.c.b16 %v3856, %v3852
        %v4269 = vpack.c.b16 %v3861, %v3857
        %v4270 = vpack.c.b16 %v3862, %v3858
        %v4271 = vpack.c.b16 %v3863, %v3859
        %v4272 = vpack.c.b16 %v3864, %v3860
        %v4273 = vpack.c.b16 %v3869, %v3865
        %v4274 = vpack.c.b16 %v3870, %v3866
        %v4275 = vpack.c.b16 %v3871, %v3867
        %v4276 = vpack.c.b16 %v3872, %v3868
        %v4277 = vpack.c.b16 %v3877, %v3873
        %v4278 = vpack.c.b16 %v3878, %v3874
        %v4279 = vpack.c.b16 %v3879, %v3875
        %v4280 = vpack.c.b16 %v3880, %v3876
        %v4281 = vpack.c.b16 %v3885, %v3881
        %v4282 = vpack.c.b16 %v3886, %v3882
        %v4283 = vpack.c.b16 %v3887, %v3883
        %v4284 = vpack.c.b16 %v3888, %v3884
        %v4285 = vpack.c.b16 %v3893, %v3889
        %v4286 = vpack.c.b16 %v3894, %v3890
        %v4287 = vpack.c.b16 %v3895, %v3891
        %v4288 = vpack.c.b16 %v3896, %v3892
        %v4289 = vpack.c.b16 %v3901, %v3897
        %v4290 = vpack.c.b16 %v3902, %v3898
        %v4291 = vpack.c.b16 %v3903, %v3899
        %v4292 = vpack.c.b16 %v3904, %v3900
        %v4293 = vpack.c.b16 %v3909, %v3905
        %v4294 = vpack.c.b16 %v3910, %v3906
        %v4295 = vpack.c.b16 %v3911, %v3907
        %v4296 = vpack.c.b16 %v3912, %v3908
        %v4297 = vpack.c.b16 %v3917, %v3913
        %v4298 = vpack.c.b16 %v3918, %v3914
        %v4299 = vpack.c.b16 %v3919, %v3915
        %v4300 = vpack.c.b16 %v3920, %v3916
        %v4301 = vpack.c.b16 %v3925, %v3921
        %v4302 = vpack.c.b16 %v3926, %v3922
        %v4303 = vpack.c.b16 %v3927, %v3923
        %v4304 = vpack.c.b16 %v3928, %v3924
        %v4305 = vpack.c.b16 %v3933, %v3929
        %v4306 = vpack.c.b16 %v3934, %v3930
        %v4307 = vpack.c.b16 %v3935, %v3931
        %v4308 = vpack.c.b16 %v3936, %v3932
        %v4309 = vpack.c.b16 %v3941, %v3937
        %v4310 = vpack.c.b16 %v3942, %v3938
        %v4311 = vpack.c.b16 %v3943, %v3939
        %v4312 = vpack.c.b16 %v3944, %v3940
        %v4313 = vpack.c.b16 %v3949, %v3945
        %v4314 = vpack.c.b16 %v3950, %v3946
        %v4315 = vpack.c.b16 %v3951, %v3947
        %v4316 = vpack.c.b16 %v3952, %v3948
        %v4317 = vpack.c.b16 %v3957, %v3953
        %v4318 = vpack.c.b16 %v3958, %v3954
        %v4319 = vpack.c.b16 %v3959, %v3955
        %v4320 = vpack.c.b16 %v3960, %v3956
        %v4321 = vpack.c.b16 %v3965, %v3961
        %v4322 = vpack.c.b16 %v3966, %v3962
        %v4323 = vpack.c.b16 %v3967, %v3963
        %v4324 = vpack.c.b16 %v3968, %v3964
        %v4325 = vpack.c.b16 %v3973, %v3969
        %v4326 = vpack.c.b16 %v3974, %v3970
        %v4327 = vpack.c.b16 %v3975, %v3971
        %v4328 = vpack.c.b16 %v3976, %v3972
        %v4329 = vpack.c.b16 %v3981, %v3977
        %v4330 = vpack.c.b16 %v3982, %v3978
        %v4331 = vpack.c.b16 %v3983, %v3979
        %v4332 = vpack.c.b16 %v3984, %v3980
        %v4333 = vpack.c.b16 %v3989, %v3985
        %v4334 = vpack.c.b16 %v3990, %v3986
        %v4335 = vpack.c.b16 %v3991, %v3987
        %v4336 = vpack.c.b16 %v3992, %v3988
        %v4337 = vpack.c.b16 %v3997, %v3993
        %v4338 = vpack.c.b16 %v3998, %v3994
        %v4339 = vpack.c.b16 %v3999, %v3995
        %v4340 = vpack.c.b16 %v4000, %v3996
        %v4341 = vpack.c.b16 %v4005, %v4001
        %v4342 = vpack.c.b16 %v4006, %v4002
        %v4343 = vpack.c.b16 %v4007, %v4003
        %v4344 = vpack.c.b16 %v4008, %v4004
        %v4345 = vpack.c.b16 %v4013, %v4009
        %v4346 = vpack.c.b16 %v4014, %v4010
        %v4347 = vpack.c.b16 %v4015, %v4011
        %v4348 = vpack.c.b16 %v4016, %v4012
        %v4349 = vpack.c.b16 %v4021, %v4017
        %v4350 = vpack.c.b16 %v4022, %v4018
        %v4351 = vpack.c.b16 %v4023, %v4019
        %v4352 = vpack.c.b16 %v4024, %v4020
        %v4353 = vpack.c.b16 %v4029, %v4025
        %v4354 = vpack.c.b16 %v4030, %v4026
        %v4355 = vpack.c.b16 %v4031, %v4027
        %v4356 = vpack.c.b16 %v4032, %v4028
        %v4357 = vpack.c.b16 %v4037, %v4033
        %v4358 = vpack.c.b16 %v4038, %v4034
        %v4359 = vpack.c.b16 %v4039, %v4035
        %v4360 = vpack.c.b16 %v4040, %v4036
        %v4361 = vpack.c.b16 %v4045, %v4041
        %v4362 = vpack.c.b16 %v4046, %v4042
        %v4363 = vpack.c.b16 %v4047, %v4043
        %v4364 = vpack.c.b16 %v4048, %v4044
        %v4365 = vpack.c.b16 %v4053, %v4049
        %v4366 = vpack.c.b16 %v4054, %v4050
        %v4367 = vpack.c.b16 %v4055, %v4051
        %v4368 = vpack.c.b16 %v4056, %v4052
        %v4369 = vpack.c.b16 %v4061, %v4057
        %v4370 = vpack.c.b16 %v4062, %v4058
        %v4371 = vpack.c.b16 %v4063, %v4059
        %v4372 = vpack.c.b16 %v4064, %v4060
        %v4373 = vpack.c.b16 %v4069, %v4065
        %v4374 = vpack.c.b16 %v4070, %v4066
        %v4375 = vpack.c.b16 %v4071, %v4067
        %v4376 = vpack.c.b16 %v4072, %v4068
        %v4377 = vpack.c.b16 %v4077, %v4073
        %v4378 = vpack.c.b16 %v4078, %v4074
        %v4379 = vpack.c.b16 %v4079, %v4075
        %v4380 = vpack.c.b16 %v4080, %v4076
        %v4381 = vpack.c.b16 %v4085, %v4081
        %v4382 = vpack.c.b16 %v4086, %v4082
        %v4383 = vpack.c.b16 %v4087, %v4083
        %v4384 = vpack.c.b16 %v4088, %v4084
        %v4385 = vpack.c.b16 %v4093, %v4089
        %v4386 = vpack.c.b16 %v4094, %v4090
        %v4387 = vpack.c.b16 %v4095, %v4091
        %v4388 = vpack.c.b16 %v4096, %v4092
        %v4389 = vpack.c.b16 %v4101, %v4097
        %v4390 = vpack.c.b16 %v4102, %v4098
        %v4391 = vpack.c.b16 %v4103, %v4099
        %v4392 = vpack.c.b16 %v4104, %v4100
        %v4393 = vpack.c.b16 %v4109, %v4105
        %v4394 = vpack.c.b16 %v4110, %v4106
        %v4395 = vpack.c.b16 %v4111, %v4107
        %v4396 = vpack.c.b16 %v4112, %v4108
        %v4397 = vpack.c.b16 %v4117, %v4113
        %v4398 = vpack.c.b16 %v4118, %v4114
        %v4399 = vpack.c.b16 %v4119, %v4115
        %v4400 = vpack.c.b16 %v4120, %v4116
        %v4401 = vpack.c.b16 %v4125, %v4121
        %v4402 = vpack.c.b16 %v4126, %v4122
        %v4403 = vpack.c.b16 %v4127, %v4123
        %v4404 = vpack.c.b16 %v4128, %v4124
        %v4405 = vpack.c.b16 %v4133, %v4129
        %v4406 = vpack.c.b16 %v4134, %v4130
        %v4407 = vpack.c.b16 %v4135, %v4131
        %v4408 = vpack.c.b16 %v4136, %v4132
        %v4409 = vpack.c.b16 %v4141, %v4137
        %v4410 = vpack.c.b16 %v4142, %v4138
        %v4411 = vpack.c.b16 %v4143, %v4139
        %v4412 = vpack.c.b16 %v4144, %v4140
        %v4413 = vpack.c.b16 %v4149, %v4145
        %v4414 = vpack.c.b16 %v4150, %v4146
        %v4415 = vpack.c.b16 %v4151, %v4147
        %v4416 = vpack.c.b16 %v4152, %v4148
        %v4417 = vpack.c.b16 %v4157, %v4153
        %v4418 = vpack.c.b16 %v4158, %v4154
        %v4419 = vpack.c.b16 %v4159, %v4155
        %v4420 = vpack.c.b16 %v4160, %v4156
        %v4421 = vpack.c.b16 %v4165, %v4161
        %v4422 = vpack.c.b16 %v4166, %v4162
        %v4423 = vpack.c.b16 %v4167, %v4163
        %v4424 = vpack.c.b16 %v4168, %v4164
        %v4682 = vperm.slane %v3392, 0
        %v4683 = vperm.slane %v3392, 1
        %v4684 = vperm.slane %v3392, 2
        %v4685 = vperm.slane %v3392, 3
        %4690 = vmatpush.bf16.msra.mxu0 %v4197
        %4691 = vmatpush.bf16.msra.mxu0 %v4193
        %4692 = vmatpush.bf16.msra.mxu0 %v4189
        %4693 = vmatpush.bf16.msra.mxu0 %v4185
        %4694 = vmatpush.bf16.msra.mxu0 %v4181
        %4695 = vmatpush.bf16.msra.mxu0 %v4177
        %4696 = vmatpush.bf16.msra.mxu0 %v4173
        %4697 = vmatpush.bf16.msra.mxu0 %v4169
        %4698 = vmatmul.bf16.gmra.mxu0 %v3393
        %v4699 = vpop.f32.mrf.mxu0
        %v4700 = vadd.f32 %v4682, %v4699
        %v4701 = vpop.f32.mrf.mxu0
        %4702 = vdwg.mxu0
        %4703 = vmatpush.bf16.msra.mxu0 %v4229
        %4704 = vmatpush.bf16.msra.mxu0 %v4225
        %4705 = vmatpush.bf16.msra.mxu0 %v4221
        %4706 = vmatpush.bf16.msra.mxu0 %v4217
        %4707 = vmatpush.bf16.msra.mxu0 %v4213
        %4708 = vmatpush.bf16.msra.mxu0 %v4209
        %4709 = vmatpush.bf16.msra.mxu0 %v4205
        %4710 = vmatpush.bf16.msra.mxu0 %v4201
        %4711 = vmatmul.bf16.gmra.mxu0 %v3394
        %v4712 = vpop.f32.mrf.mxu0
        %v4713 = vadd.f32 %v4700, %v4712
        %v4714 = vpop.f32.mrf.mxu0
        %4715 = vdwg.mxu0
        %4716 = vmatpush.bf16.msra.mxu0 %v4261
        %4717 = vmatpush.bf16.msra.mxu0 %v4257
        %4718 = vmatpush.bf16.msra.mxu0 %v4253
        %4719 = vmatpush.bf16.msra.mxu0 %v4249
        %4720 = vmatpush.bf16.msra.mxu0 %v4245
        %4721 = vmatpush.bf16.msra.mxu0 %v4241
        %4722 = vmatpush.bf16.msra.mxu0 %v4237
        %4723 = vmatpush.bf16.msra.mxu0 %v4233
        %4724 = vmatmul.bf16.gmra.mxu0 %v3395
        %v4725 = vpop.f32.mrf.mxu0
        %v4726 = vadd.f32 %v4713, %v4725
        %v4727 = vpop.f32.mrf.mxu0
        %4728 = vdwg.mxu0
        %4729 = vmatpush.bf16.msra.mxu0 %v4293
        %4730 = vmatpush.bf16.msra.mxu0 %v4289
        %4731 = vmatpush.bf16.msra.mxu0 %v4285
        %4732 = vmatpush.bf16.msra.mxu0 %v4281
        %4733 = vmatpush.bf16.msra.mxu0 %v4277
        %4734 = vmatpush.bf16.msra.mxu0 %v4273
        %4735 = vmatpush.bf16.msra.mxu0 %v4269
        %4736 = vmatpush.bf16.msra.mxu0 %v4265
        %4737 = vmatmul.bf16.gmra.mxu0 %v3396
        %v4738 = vpop.f32.mrf.mxu0
        %v4739 = vadd.f32 %v4726, %v4738
        %v4740 = vpop.f32.mrf.mxu0
        %4741 = vdwg.mxu0
        %4742 = vmatpush.bf16.msra.mxu0 %v4325
        %4743 = vmatpush.bf16.msra.mxu0 %v4321
        %4744 = vmatpush.bf16.msra.mxu0 %v4317
        %4745 = vmatpush.bf16.msra.mxu0 %v4313
        %4746 = vmatpush.bf16.msra.mxu0 %v4309
        %4747 = vmatpush.bf16.msra.mxu0 %v4305
        %4748 = vmatpush.bf16.msra.mxu0 %v4301
        %4749 = vmatpush.bf16.msra.mxu0 %v4297
        %4750 = vmatmul.bf16.gmra.mxu0 %v3397
        %v4751 = vpop.f32.mrf.mxu0
        %v4752 = vadd.f32 %v4739, %v4751
        %v4753 = vpop.f32.mrf.mxu0
        %4754 = vdwg.mxu0
        %4755 = vmatpush.bf16.msra.mxu0 %v4357
        %4756 = vmatpush.bf16.msra.mxu0 %v4353
        %4757 = vmatpush.bf16.msra.mxu0 %v4349
        %4758 = vmatpush.bf16.msra.mxu0 %v4345
        %4759 = vmatpush.bf16.msra.mxu0 %v4341
        %4760 = vmatpush.bf16.msra.mxu0 %v4337
        %4761 = vmatpush.bf16.msra.mxu0 %v4333
        %4762 = vmatpush.bf16.msra.mxu0 %v4329
        %4763 = vmatmul.bf16.gmra.mxu0 %v3398
        %v4764 = vpop.f32.mrf.mxu0
        %v4765 = vadd.f32 %v4752, %v4764
        %v4766 = vpop.f32.mrf.mxu0
        %4767 = vdwg.mxu0
        %4768 = vmatpush.bf16.msra.mxu0 %v4389
        %4769 = vmatpush.bf16.msra.mxu0 %v4385
        %4770 = vmatpush.bf16.msra.mxu0 %v4381
        %4771 = vmatpush.bf16.msra.mxu0 %v4377
        %4772 = vmatpush.bf16.msra.mxu0 %v4373
        %4773 = vmatpush.bf16.msra.mxu0 %v4369
        %4774 = vmatpush.bf16.msra.mxu0 %v4365
        %4775 = vmatpush.bf16.msra.mxu0 %v4361
        %4776 = vmatmul.bf16.gmra.mxu0 %v3399
        %v4777 = vpop.f32.mrf.mxu0
        %v4778 = vadd.f32 %v4765, %v4777
        %v4779 = vpop.f32.mrf.mxu0
        %4780 = vdwg.mxu0
        %4781 = vmatpush.bf16.msra.mxu0 %v4421
        %4782 = vmatpush.bf16.msra.mxu0 %v4417
        %4783 = vmatpush.bf16.msra.mxu0 %v4413
        %4784 = vmatpush.bf16.msra.mxu0 %v4409
        %4785 = vmatpush.bf16.msra.mxu0 %v4405
        %4786 = vmatpush.bf16.msra.mxu0 %v4401
        %4787 = vmatpush.bf16.msra.mxu0 %v4397
        %4788 = vmatpush.bf16.msra.mxu0 %v4393
        %4789 = vmatmul.bf16.gmra.mxu0 %v3400
        %v4790 = vpop.f32.mrf.mxu0
        %v4791 = vadd.f32 %v4778, %v4790
        %v4792 = vpop.f32.mrf.mxu0
        %4793 = vdwg.mxu0
        %4794 = vmatpush.bf16.msra.mxu0 %v4198
        %4795 = vmatpush.bf16.msra.mxu0 %v4194
        %4796 = vmatpush.bf16.msra.mxu0 %v4190
        %4797 = vmatpush.bf16.msra.mxu0 %v4186
        %4798 = vmatpush.bf16.msra.mxu0 %v4182
        %4799 = vmatpush.bf16.msra.mxu0 %v4178
        %4800 = vmatpush.bf16.msra.mxu0 %v4174
        %4801 = vmatpush.bf16.msra.mxu0 %v4170
        %4802 = vmatmul.bf16.gmra.mxu0 %v3393
        %v4803 = vpop.f32.mrf.mxu0
        %v4804 = vadd.f32 %v4683, %v4803
        %v4805 = vpop.f32.mrf.mxu0
        %4806 = vdwg.mxu0
        %4807 = vmatpush.bf16.msra.mxu0 %v4230
        %4808 = vmatpush.bf16.msra.mxu0 %v4226
        %4809 = vmatpush.bf16.msra.mxu0 %v4222
        %4810 = vmatpush.bf16.msra.mxu0 %v4218
        %4811 = vmatpush.bf16.msra.mxu0 %v4214
        %4812 = vmatpush.bf16.msra.mxu0 %v4210
        %4813 = vmatpush.bf16.msra.mxu0 %v4206
        %4814 = vmatpush.bf16.msra.mxu0 %v4202
        %4815 = vmatmul.bf16.gmra.mxu0 %v3394
        %v4816 = vpop.f32.mrf.mxu0
        %v4817 = vadd.f32 %v4804, %v4816
        %v4818 = vpop.f32.mrf.mxu0
        %4819 = vdwg.mxu0
        %4820 = vmatpush.bf16.msra.mxu0 %v4262
        %4821 = vmatpush.bf16.msra.mxu0 %v4258
        %4822 = vmatpush.bf16.msra.mxu0 %v4254
        %4823 = vmatpush.bf16.msra.mxu0 %v4250
        %4824 = vmatpush.bf16.msra.mxu0 %v4246
        %4825 = vmatpush.bf16.msra.mxu0 %v4242
        %4826 = vmatpush.bf16.msra.mxu0 %v4238
        %4827 = vmatpush.bf16.msra.mxu0 %v4234
        %4828 = vmatmul.bf16.gmra.mxu0 %v3395
        %v4829 = vpop.f32.mrf.mxu0
        %v4830 = vadd.f32 %v4817, %v4829
        %v4831 = vpop.f32.mrf.mxu0
        %4832 = vdwg.mxu0
        %4833 = vmatpush.bf16.msra.mxu0 %v4294
        %4834 = vmatpush.bf16.msra.mxu0 %v4290
        %4835 = vmatpush.bf16.msra.mxu0 %v4286
        %4836 = vmatpush.bf16.msra.mxu0 %v4282
        %4837 = vmatpush.bf16.msra.mxu0 %v4278
        %4838 = vmatpush.bf16.msra.mxu0 %v4274
        %4839 = vmatpush.bf16.msra.mxu0 %v4270
        %4840 = vmatpush.bf16.msra.mxu0 %v4266
        %4841 = vmatmul.bf16.gmra.mxu0 %v3396
        %v4842 = vpop.f32.mrf.mxu0
        %v4843 = vadd.f32 %v4830, %v4842
        %v4844 = vpop.f32.mrf.mxu0
        %4845 = vdwg.mxu0
        %4846 = vmatpush.bf16.msra.mxu0 %v4326
        %4847 = vmatpush.bf16.msra.mxu0 %v4322
        %4848 = vmatpush.bf16.msra.mxu0 %v4318
        %4849 = vmatpush.bf16.msra.mxu0 %v4314
        %4850 = vmatpush.bf16.msra.mxu0 %v4310
        %4851 = vmatpush.bf16.msra.mxu0 %v4306
        %4852 = vmatpush.bf16.msra.mxu0 %v4302
        %4853 = vmatpush.bf16.msra.mxu0 %v4298
        %4854 = vmatmul.bf16.gmra.mxu0 %v3397
        %v4855 = vpop.f32.mrf.mxu0
        %v4856 = vadd.f32 %v4843, %v4855
        %v4857 = vpop.f32.mrf.mxu0
        %4858 = vdwg.mxu0
        %4859 = vmatpush.bf16.msra.mxu0 %v4358
        %4860 = vmatpush.bf16.msra.mxu0 %v4354
        %4861 = vmatpush.bf16.msra.mxu0 %v4350
        %4862 = vmatpush.bf16.msra.mxu0 %v4346
        %4863 = vmatpush.bf16.msra.mxu0 %v4342
        %4864 = vmatpush.bf16.msra.mxu0 %v4338
        %4865 = vmatpush.bf16.msra.mxu0 %v4334
        %4866 = vmatpush.bf16.msra.mxu0 %v4330
        %4867 = vmatmul.bf16.gmra.mxu0 %v3398
        %v4868 = vpop.f32.mrf.mxu0
        %v4869 = vadd.f32 %v4856, %v4868
        %v4870 = vpop.f32.mrf.mxu0
        %4871 = vdwg.mxu0
        %4872 = vmatpush.bf16.msra.mxu0 %v4390
        %4873 = vmatpush.bf16.msra.mxu0 %v4386
        %4874 = vmatpush.bf16.msra.mxu0 %v4382
        %4875 = vmatpush.bf16.msra.mxu0 %v4378
        %4876 = vmatpush.bf16.msra.mxu0 %v4374
        %4877 = vmatpush.bf16.msra.mxu0 %v4370
        %4878 = vmatpush.bf16.msra.mxu0 %v4366
        %4879 = vmatpush.bf16.msra.mxu0 %v4362
        %4880 = vmatmul.bf16.gmra.mxu0 %v3399
        %v4881 = vpop.f32.mrf.mxu0
        %v4882 = vadd.f32 %v4869, %v4881
        %v4883 = vpop.f32.mrf.mxu0
        %4884 = vdwg.mxu0
        %4885 = vmatpush.bf16.msra.mxu0 %v4422
        %4886 = vmatpush.bf16.msra.mxu0 %v4418
        %4887 = vmatpush.bf16.msra.mxu0 %v4414
        %4888 = vmatpush.bf16.msra.mxu0 %v4410
        %4889 = vmatpush.bf16.msra.mxu0 %v4406
        %4890 = vmatpush.bf16.msra.mxu0 %v4402
        %4891 = vmatpush.bf16.msra.mxu0 %v4398
        %4892 = vmatpush.bf16.msra.mxu0 %v4394
        %4893 = vmatmul.bf16.gmra.mxu0 %v3400
        %v4894 = vpop.f32.mrf.mxu0
        %v4895 = vadd.f32 %v4882, %v4894
        %v4896 = vpop.f32.mrf.mxu0
        %4897 = vdwg.mxu0
        %4898 = vmatpush.bf16.msra.mxu0 %v4199
        %4899 = vmatpush.bf16.msra.mxu0 %v4195
        %4900 = vmatpush.bf16.msra.mxu0 %v4191
        %4901 = vmatpush.bf16.msra.mxu0 %v4187
        %4902 = vmatpush.bf16.msra.mxu0 %v4183
        %4903 = vmatpush.bf16.msra.mxu0 %v4179
        %4904 = vmatpush.bf16.msra.mxu0 %v4175
        %4905 = vmatpush.bf16.msra.mxu0 %v4171
        %4906 = vmatmul.bf16.gmra.mxu0 %v3393
        %v4907 = vpop.f32.mrf.mxu0
        %v4908 = vadd.f32 %v4684, %v4907
        %v4909 = vpop.f32.mrf.mxu0
        %4910 = vdwg.mxu0
        %4911 = vmatpush.bf16.msra.mxu0 %v4231
        %4912 = vmatpush.bf16.msra.mxu0 %v4227
        %4913 = vmatpush.bf16.msra.mxu0 %v4223
        %4914 = vmatpush.bf16.msra.mxu0 %v4219
        %4915 = vmatpush.bf16.msra.mxu0 %v4215
        %4916 = vmatpush.bf16.msra.mxu0 %v4211
        %4917 = vmatpush.bf16.msra.mxu0 %v4207
        %4918 = vmatpush.bf16.msra.mxu0 %v4203
        %4919 = vmatmul.bf16.gmra.mxu0 %v3394
        %v4920 = vpop.f32.mrf.mxu0
        %v4921 = vadd.f32 %v4908, %v4920
        %v4922 = vpop.f32.mrf.mxu0
        %4923 = vdwg.mxu0
        %4924 = vmatpush.bf16.msra.mxu0 %v4263
        %4925 = vmatpush.bf16.msra.mxu0 %v4259
        %4926 = vmatpush.bf16.msra.mxu0 %v4255
        %4927 = vmatpush.bf16.msra.mxu0 %v4251
        %4928 = vmatpush.bf16.msra.mxu0 %v4247
        %4929 = vmatpush.bf16.msra.mxu0 %v4243
        %4930 = vmatpush.bf16.msra.mxu0 %v4239
        %4931 = vmatpush.bf16.msra.mxu0 %v4235
        %4932 = vmatmul.bf16.gmra.mxu0 %v3395
        %v4933 = vpop.f32.mrf.mxu0
        %v4934 = vadd.f32 %v4921, %v4933
        %v4935 = vpop.f32.mrf.mxu0
        %4936 = vdwg.mxu0
        %4937 = vmatpush.bf16.msra.mxu0 %v4295
        %4938 = vmatpush.bf16.msra.mxu0 %v4291
        %4939 = vmatpush.bf16.msra.mxu0 %v4287
        %4940 = vmatpush.bf16.msra.mxu0 %v4283
        %4941 = vmatpush.bf16.msra.mxu0 %v4279
        %4942 = vmatpush.bf16.msra.mxu0 %v4275
        %4943 = vmatpush.bf16.msra.mxu0 %v4271
        %4944 = vmatpush.bf16.msra.mxu0 %v4267
        %4945 = vmatmul.bf16.gmra.mxu0 %v3396
        %v4946 = vpop.f32.mrf.mxu0
        %v4947 = vadd.f32 %v4934, %v4946
        %v4948 = vpop.f32.mrf.mxu0
        %4949 = vdwg.mxu0
        %4950 = vmatpush.bf16.msra.mxu0 %v4327
        %4951 = vmatpush.bf16.msra.mxu0 %v4323
        %4952 = vmatpush.bf16.msra.mxu0 %v4319
        %4953 = vmatpush.bf16.msra.mxu0 %v4315
        %4954 = vmatpush.bf16.msra.mxu0 %v4311
        %4955 = vmatpush.bf16.msra.mxu0 %v4307
        %4956 = vmatpush.bf16.msra.mxu0 %v4303
        %4957 = vmatpush.bf16.msra.mxu0 %v4299
        %4958 = vmatmul.bf16.gmra.mxu0 %v3397
        %v4959 = vpop.f32.mrf.mxu0
        %v4960 = vadd.f32 %v4947, %v4959
        %v4961 = vpop.f32.mrf.mxu0
        %4962 = vdwg.mxu0
        %4963 = vmatpush.bf16.msra.mxu0 %v4359
        %4964 = vmatpush.bf16.msra.mxu0 %v4355
        %4965 = vmatpush.bf16.msra.mxu0 %v4351
        %4966 = vmatpush.bf16.msra.mxu0 %v4347
        %4967 = vmatpush.bf16.msra.mxu0 %v4343
        %4968 = vmatpush.bf16.msra.mxu0 %v4339
        %4969 = vmatpush.bf16.msra.mxu0 %v4335
        %4970 = vmatpush.bf16.msra.mxu0 %v4331
        %4971 = vmatmul.bf16.gmra.mxu0 %v3398
        %v4972 = vpop.f32.mrf.mxu0
        %v4973 = vadd.f32 %v4960, %v4972
        %v4974 = vpop.f32.mrf.mxu0
        %4975 = vdwg.mxu0
        %4976 = vmatpush.bf16.msra.mxu0 %v4391
        %4977 = vmatpush.bf16.msra.mxu0 %v4387
        %4978 = vmatpush.bf16.msra.mxu0 %v4383
        %4979 = vmatpush.bf16.msra.mxu0 %v4379
        %4980 = vmatpush.bf16.msra.mxu0 %v4375
        %4981 = vmatpush.bf16.msra.mxu0 %v4371
        %4982 = vmatpush.bf16.msra.mxu0 %v4367
        %4983 = vmatpush.bf16.msra.mxu0 %v4363
        %4984 = vmatmul.bf16.gmra.mxu0 %v3399
        %v4985 = vpop.f32.mrf.mxu0
        %v4986 = vadd.f32 %v4973, %v4985
        %v4987 = vpop.f32.mrf.mxu0
        %4988 = vdwg.mxu0
        %4989 = vmatpush.bf16.msra.mxu0 %v4423
        %4990 = vmatpush.bf16.msra.mxu0 %v4419
        %4991 = vmatpush.bf16.msra.mxu0 %v4415
        %4992 = vmatpush.bf16.msra.mxu0 %v4411
        %4993 = vmatpush.bf16.msra.mxu0 %v4407
        %4994 = vmatpush.bf16.msra.mxu0 %v4403
        %4995 = vmatpush.bf16.msra.mxu0 %v4399
        %4996 = vmatpush.bf16.msra.mxu0 %v4395
        %4997 = vmatmul.bf16.gmra.mxu0 %v3400
        %v4998 = vpop.f32.mrf.mxu0
        %v4999 = vadd.f32 %v4986, %v4998
        %v5000 = vpop.f32.mrf.mxu0
        %5001 = vdwg.mxu0
        %5002 = vmatpush.bf16.msra.mxu0 %v4200
        %5003 = vmatpush.bf16.msra.mxu0 %v4196
        %5004 = vmatpush.bf16.msra.mxu0 %v4192
        %5005 = vmatpush.bf16.msra.mxu0 %v4188
        %5006 = vmatpush.bf16.msra.mxu0 %v4184
        %5007 = vmatpush.bf16.msra.mxu0 %v4180
        %5008 = vmatpush.bf16.msra.mxu0 %v4176
        %5009 = vmatpush.bf16.msra.mxu0 %v4172
        %5010 = vmatmul.bf16.gmra.mxu0 %v3393
        %v5011 = vpop.f32.mrf.mxu0
        %v5012 = vadd.f32 %v4685, %v5011
        %v5013 = vpop.f32.mrf.mxu0
        %5014 = vdwg.mxu0
        %5015 = vmatpush.bf16.msra.mxu0 %v4232
        %5016 = vmatpush.bf16.msra.mxu0 %v4228
        %5017 = vmatpush.bf16.msra.mxu0 %v4224
        %5018 = vmatpush.bf16.msra.mxu0 %v4220
        %5019 = vmatpush.bf16.msra.mxu0 %v4216
        %5020 = vmatpush.bf16.msra.mxu0 %v4212
        %5021 = vmatpush.bf16.msra.mxu0 %v4208
        %5022 = vmatpush.bf16.msra.mxu0 %v4204
        %5023 = vmatmul.bf16.gmra.mxu0 %v3394
        %v5024 = vpop.f32.mrf.mxu0
        %v5025 = vadd.f32 %v5012, %v5024
        %v5026 = vpop.f32.mrf.mxu0
        %5027 = vdwg.mxu0
        %5028 = vmatpush.bf16.msra.mxu0 %v4264
        %5029 = vmatpush.bf16.msra.mxu0 %v4260
        %5030 = vmatpush.bf16.msra.mxu0 %v4256
        %5031 = vmatpush.bf16.msra.mxu0 %v4252
        %5032 = vmatpush.bf16.msra.mxu0 %v4248
        %5033 = vmatpush.bf16.msra.mxu0 %v4244
        %5034 = vmatpush.bf16.msra.mxu0 %v4240
        %5035 = vmatpush.bf16.msra.mxu0 %v4236
        %5036 = vmatmul.bf16.gmra.mxu0 %v3395
        %v5037 = vpop.f32.mrf.mxu0
        %v5038 = vadd.f32 %v5025, %v5037
        %v5039 = vpop.f32.mrf.mxu0
        %5040 = vdwg.mxu0
        %5041 = vmatpush.bf16.msra.mxu0 %v4296
        %5042 = vmatpush.bf16.msra.mxu0 %v4292
        %5043 = vmatpush.bf16.msra.mxu0 %v4288
        %5044 = vmatpush.bf16.msra.mxu0 %v4284
        %5045 = vmatpush.bf16.msra.mxu0 %v4280
        %5046 = vmatpush.bf16.msra.mxu0 %v4276
        %5047 = vmatpush.bf16.msra.mxu0 %v4272
        %5048 = vmatpush.bf16.msra.mxu0 %v4268
        %5049 = vmatmul.bf16.gmra.mxu0 %v3396
        %v5050 = vpop.f32.mrf.mxu0
        %v5051 = vadd.f32 %v5038, %v5050
        %v5052 = vpop.f32.mrf.mxu0
        %5053 = vdwg.mxu0
        %5054 = vmatpush.bf16.msra.mxu0 %v4328
        %5055 = vmatpush.bf16.msra.mxu0 %v4324
        %5056 = vmatpush.bf16.msra.mxu0 %v4320
        %5057 = vmatpush.bf16.msra.mxu0 %v4316
        %5058 = vmatpush.bf16.msra.mxu0 %v4312
        %5059 = vmatpush.bf16.msra.mxu0 %v4308
        %5060 = vmatpush.bf16.msra.mxu0 %v4304
        %5061 = vmatpush.bf16.msra.mxu0 %v4300
        %5062 = vmatmul.bf16.gmra.mxu0 %v3397
        %v5063 = vpop.f32.mrf.mxu0
        %v5064 = vadd.f32 %v5051, %v5063
        %v5065 = vpop.f32.mrf.mxu0
        %5066 = vdwg.mxu0
        %5067 = vmatpush.bf16.msra.mxu0 %v4360
        %5068 = vmatpush.bf16.msra.mxu0 %v4356
        %5069 = vmatpush.bf16.msra.mxu0 %v4352
        %5070 = vmatpush.bf16.msra.mxu0 %v4348
        %5071 = vmatpush.bf16.msra.mxu0 %v4344
        %5072 = vmatpush.bf16.msra.mxu0 %v4340
        %5073 = vmatpush.bf16.msra.mxu0 %v4336
        %5074 = vmatpush.bf16.msra.mxu0 %v4332
        %5075 = vmatmul.bf16.gmra.mxu0 %v3398
        %v5076 = vpop.f32.mrf.mxu0
        %v5077 = vadd.f32 %v5064, %v5076
        %v5078 = vpop.f32.mrf.mxu0
        %5079 = vdwg.mxu0
        %5080 = vmatpush.bf16.msra.mxu0 %v4392
        %5081 = vmatpush.bf16.msra.mxu0 %v4388
        %5082 = vmatpush.bf16.msra.mxu0 %v4384
        %5083 = vmatpush.bf16.msra.mxu0 %v4380
        %5084 = vmatpush.bf16.msra.mxu0 %v4376
        %5085 = vmatpush.bf16.msra.mxu0 %v4372
        %5086 = vmatpush.bf16.msra.mxu0 %v4368
        %5087 = vmatpush.bf16.msra.mxu0 %v4364
        %5088 = vmatmul.bf16.gmra.mxu0 %v3399
        %v5089 = vpop.f32.mrf.mxu0
        %v5090 = vadd.f32 %v5077, %v5089
        %v5091 = vpop.f32.mrf.mxu0
        %5092 = vdwg.mxu0
        %5093 = vmatpush.bf16.msra.mxu0 %v4424
        %5094 = vmatpush.bf16.msra.mxu0 %v4420
        %5095 = vmatpush.bf16.msra.mxu0 %v4416
        %5096 = vmatpush.bf16.msra.mxu0 %v4412
        %5097 = vmatpush.bf16.msra.mxu0 %v4408
        %5098 = vmatpush.bf16.msra.mxu0 %v4404
        %5099 = vmatpush.bf16.msra.mxu0 %v4400
        %5100 = vmatpush.bf16.msra.mxu0 %v4396
        %5101 = vmatmul.bf16.gmra.mxu0 %v3400
        %v5102 = vpop.f32.mrf.mxu0
        %v5103 = vadd.f32 %v5090, %v5102
        %v5104 = vpop.f32.mrf.mxu0
        %5105 = vdwg.mxu0
        %vm5106 = vcmp.ge.f32.partialorder %v4791, 0.0
        %vm5107 = vcmp.ge.f32.partialorder %v4895, 0.0
        %vm5108 = vcmp.ge.f32.partialorder %v4999, 0.0
        %vm5109 = vcmp.ge.f32.partialorder %v5103, 0.0
        %v5110 = vmul.f32 %v4791, 0.1
        %v5111 = vmul.f32 %v4895, 0.1
        %v5112 = vmul.f32 %v4999, 0.1
        %v5113 = vmul.f32 %v5103, 0.1
        %v5114 = vsel %vm5106, %v4791, %v5110
        %v5115 = vsel %vm5107, %v4895, %v5111
        %v5116 = vsel %vm5108, %v4999, %v5112
        %v5117 = vsel %vm5109, %v5103, %v5113
        %v5118 = vld [vmem:[#allocation11] sm:$0xf]
        %v5119 = vld [vmem:[#allocation11 + $0x4] sm:$0xf]
        %v5120 = vld [vmem:[#allocation11 + $0x8] sm:$0xf]
        %v5121 = vld [vmem:[#allocation11 + $0xc] sm:$0xf]
        %v5122 = vld [vmem:[#allocation11 + $0x10] sm:$0xf]
        %v5123 = vld [vmem:[#allocation11 + $0x14] sm:$0xf]
        %v5124 = vld [vmem:[#allocation11 + $0x18] sm:$0xf]
        %v5125 = vld [vmem:[#allocation11 + $0x1c] sm:$0xf]
        %v5126 = vld [vmem:[#allocation11 + $0x20] sm:$0xf]
        %v5127 = vld [vmem:[#allocation11 + $0x24] sm:$0xf]
        %v5128 = vld [vmem:[#allocation11 + $0x28] sm:$0xf]
        %v5129 = vld [vmem:[#allocation11 + $0x2c] sm:$0xf]
        %v5130 = vld [vmem:[#allocation11 + $0x30] sm:$0xf]
        %v5131 = vld [vmem:[#allocation11 + $0x34] sm:$0xf]
        %v5132 = vld [vmem:[#allocation11 + $0x38] sm:$0xf]
        %v5133 = vld [vmem:[#allocation11 + $0x3c] sm:$0xf]
        %v5134 = vld [vmem:[#allocation11 + $0x40] sm:$0xf]
        %v5135 = vld [vmem:[#allocation11 + $0x44] sm:$0xf]
        %v5136 = vld [vmem:[#allocation11 + $0x48] sm:$0xf]
        %v5137 = vld [vmem:[#allocation11 + $0x4c] sm:$0xf]
        %v5138 = vld [vmem:[#allocation11 + $0x50] sm:$0xf]
        %v5139 = vld [vmem:[#allocation11 + $0x54] sm:$0xf]
        %v5140 = vld [vmem:[#allocation11 + $0x58] sm:$0xf]
        %v5141 = vld [vmem:[#allocation11 + $0x5c] sm:$0xf]
        %v5142 = vld [vmem:[#allocation11 + $0x60] sm:$0xf]
        %v5143 = vld [vmem:[#allocation11 + $0x64] sm:$0xf]
        %v5144 = vld [vmem:[#allocation11 + $0x68] sm:$0xf]
        %v5145 = vld [vmem:[#allocation11 + $0x6c] sm:$0xf]
        %v5146 = vld [vmem:[#allocation11 + $0x70] sm:$0xf]
        %v5147 = vld [vmem:[#allocation11 + $0x74] sm:$0xf]
        %v5148 = vld [vmem:[#allocation11 + $0x78] sm:$0xf]
        %v5149 = vld [vmem:[#allocation11 + $0x7c] sm:$0xf]
        %v5150 = vld [vmem:[#allocation11 + $0x80] sm:$0xf]
        %v5151 = vld [vmem:[#allocation11 + $0x84] sm:$0xf]
        %v5152 = vld [vmem:[#allocation11 + $0x88] sm:$0xf]
        %v5153 = vld [vmem:[#allocation11 + $0x8c] sm:$0xf]
        %v5154 = vld [vmem:[#allocation11 + $0x90] sm:$0xf]
        %v5155 = vld [vmem:[#allocation11 + $0x94] sm:$0xf]
        %v5156 = vld [vmem:[#allocation11 + $0x98] sm:$0xf]
        %v5157 = vld [vmem:[#allocation11 + $0x9c] sm:$0xf]
        %v5158 = vld [vmem:[#allocation11 + $0xa0] sm:$0xf]
        %v5159 = vld [vmem:[#allocation11 + $0xa4] sm:$0xf]
        %v5160 = vld [vmem:[#allocation11 + $0xa8] sm:$0xf]
        %v5161 = vld [vmem:[#allocation11 + $0xac] sm:$0xf]
        %v5162 = vld [vmem:[#allocation11 + $0xb0] sm:$0xf]
        %v5163 = vld [vmem:[#allocation11 + $0xb4] sm:$0xf]
        %v5164 = vld [vmem:[#allocation11 + $0xb8] sm:$0xf]
        %v5165 = vld [vmem:[#allocation11 + $0xbc] sm:$0xf]
        %v5166 = vld [vmem:[#allocation11 + $0xc0] sm:$0xf]
        %v5167 = vld [vmem:[#allocation11 + $0xc4] sm:$0xf]
        %v5168 = vld [vmem:[#allocation11 + $0xc8] sm:$0xf]
        %v5169 = vld [vmem:[#allocation11 + $0xcc] sm:$0xf]
        %v5170 = vld [vmem:[#allocation11 + $0xd0] sm:$0xf]
        %v5171 = vld [vmem:[#allocation11 + $0xd4] sm:$0xf]
        %v5172 = vld [vmem:[#allocation11 + $0xd8] sm:$0xf]
        %v5173 = vld [vmem:[#allocation11 + $0xdc] sm:$0xf]
        %v5174 = vld [vmem:[#allocation11 + $0xe0] sm:$0xf]
        %v5175 = vld [vmem:[#allocation11 + $0xe4] sm:$0xf]
        %v5176 = vld [vmem:[#allocation11 + $0xe8] sm:$0xf]
        %v5177 = vld [vmem:[#allocation11 + $0xec] sm:$0xf]
        %v5178 = vld [vmem:[#allocation11 + $0xf0] sm:$0xf]
        %v5179 = vld [vmem:[#allocation11 + $0xf4] sm:$0xf]
        %v5180 = vld [vmem:[#allocation11 + $0xf8] sm:$0xf]
        %v5181 = vld [vmem:[#allocation11 + $0xfc] sm:$0xf]
        %v5182 = vld [vmem:[%s23] sm:$0x1]
        %v5183 = vpack.c.bf16 %v5114, %v5114
        %v5184 = vpack.c.bf16 %v5115, %v5115
        %v5185 = vpack.c.bf16 %v5116, %v5116
        %v5186 = vpack.c.bf16 %v5117, %v5117
        %v5251 = vunpack.c.l.b16 %v5118
        %v5252 = vunpack.c.l.b16 %v5119
        %v5253 = vunpack.c.l.b16 %v5120
        %v5254 = vunpack.c.l.b16 %v5121
        %v5255 = vunpack.c.l.b16 %v5122
        %v5256 = vunpack.c.l.b16 %v5123
        %v5257 = vunpack.c.l.b16 %v5124
        %v5258 = vunpack.c.l.b16 %v5125
        %v5259 = vunpack.c.l.b16 %v5126
        %v5260 = vunpack.c.l.b16 %v5127
        %v5261 = vunpack.c.l.b16 %v5128
        %v5262 = vunpack.c.l.b16 %v5129
        %v5263 = vunpack.c.l.b16 %v5130
        %v5264 = vunpack.c.l.b16 %v5131
        %v5265 = vunpack.c.l.b16 %v5132
        %v5266 = vunpack.c.l.b16 %v5133
        %v5267 = vunpack.c.l.b16 %v5134
        %v5268 = vunpack.c.l.b16 %v5135
        %v5269 = vunpack.c.l.b16 %v5136
        %v5270 = vunpack.c.l.b16 %v5137
        %v5271 = vunpack.c.l.b16 %v5138
        %v5272 = vunpack.c.l.b16 %v5139
        %v5273 = vunpack.c.l.b16 %v5140
        %v5274 = vunpack.c.l.b16 %v5141
        %v5275 = vunpack.c.l.b16 %v5142
        %v5276 = vunpack.c.l.b16 %v5143
        %v5277 = vunpack.c.l.b16 %v5144
        %v5278 = vunpack.c.l.b16 %v5145
        %v5279 = vunpack.c.l.b16 %v5146
        %v5280 = vunpack.c.l.b16 %v5147
        %v5281 = vunpack.c.l.b16 %v5148
        %v5282 = vunpack.c.l.b16 %v5149
        %v5283 = vunpack.c.l.b16 %v5150
        %v5284 = vunpack.c.l.b16 %v5151
        %v5285 = vunpack.c.l.b16 %v5152
        %v5286 = vunpack.c.l.b16 %v5153
        %v5287 = vunpack.c.l.b16 %v5154
        %v5288 = vunpack.c.l.b16 %v5155
        %v5289 = vunpack.c.l.b16 %v5156
        %v5290 = vunpack.c.l.b16 %v5157
        %v5291 = vunpack.c.l.b16 %v5158
        %v5292 = vunpack.c.l.b16 %v5159
        %v5293 = vunpack.c.l.b16 %v5160
        %v5294 = vunpack.c.l.b16 %v5161
        %v5295 = vunpack.c.l.b16 %v5162
        %v5296 = vunpack.c.l.b16 %v5163
        %v5297 = vunpack.c.l.b16 %v5164
        %v5298 = vunpack.c.l.b16 %v5165
        %v5299 = vunpack.c.l.b16 %v5166
        %v5300 = vunpack.c.l.b16 %v5167
        %v5301 = vunpack.c.l.b16 %v5168
        %v5302 = vunpack.c.l.b16 %v5169
        %v5303 = vunpack.c.l.b16 %v5170
        %v5304 = vunpack.c.l.b16 %v5171
        %v5305 = vunpack.c.l.b16 %v5172
        %v5306 = vunpack.c.l.b16 %v5173
        %v5307 = vunpack.c.l.b16 %v5174
        %v5308 = vunpack.c.l.b16 %v5175
        %v5309 = vunpack.c.l.b16 %v5176
        %v5310 = vunpack.c.l.b16 %v5177
        %v5311 = vunpack.c.l.b16 %v5178
        %v5312 = vunpack.c.l.b16 %v5179
        %v5313 = vunpack.c.l.b16 %v5180
        %v5314 = vunpack.c.l.b16 %v5181
        %v5315 = vpack.c.b16 %v5252, %v5251
        %v5316 = vpack.c.b16 %v5254, %v5253
        %v5317 = vpack.c.b16 %v5256, %v5255
        %v5318 = vpack.c.b16 %v5258, %v5257
        %v5319 = vpack.c.b16 %v5260, %v5259
        %v5320 = vpack.c.b16 %v5262, %v5261
        %v5321 = vpack.c.b16 %v5264, %v5263
        %v5322 = vpack.c.b16 %v5266, %v5265
        %v5323 = vpack.c.b16 %v5268, %v5267
        %v5324 = vpack.c.b16 %v5270, %v5269
        %v5325 = vpack.c.b16 %v5272, %v5271
        %v5326 = vpack.c.b16 %v5274, %v5273
        %v5327 = vpack.c.b16 %v5276, %v5275
        %v5328 = vpack.c.b16 %v5278, %v5277
        %v5329 = vpack.c.b16 %v5280, %v5279
        %v5330 = vpack.c.b16 %v5282, %v5281
        %v5331 = vpack.c.b16 %v5284, %v5283
        %v5332 = vpack.c.b16 %v5286, %v5285
        %v5333 = vpack.c.b16 %v5288, %v5287
        %v5334 = vpack.c.b16 %v5290, %v5289
        %v5335 = vpack.c.b16 %v5292, %v5291
        %v5336 = vpack.c.b16 %v5294, %v5293
        %v5337 = vpack.c.b16 %v5296, %v5295
        %v5338 = vpack.c.b16 %v5298, %v5297
        %v5339 = vpack.c.b16 %v5300, %v5299
        %v5340 = vpack.c.b16 %v5302, %v5301
        %v5341 = vpack.c.b16 %v5304, %v5303
        %v5342 = vpack.c.b16 %v5306, %v5305
        %v5343 = vpack.c.b16 %v5308, %v5307
        %v5344 = vpack.c.b16 %v5310, %v5309
        %v5345 = vpack.c.b16 %v5312, %v5311
        %v5346 = vpack.c.b16 %v5314, %v5313
        %5379 = vmatpush.bf16.msra.mxu0 %v5322
        %5380 = vmatpush.bf16.msra.mxu0 %v5321
        %5381 = vmatpush.bf16.msra.mxu0 %v5320
        %5382 = vmatpush.bf16.msra.mxu0 %v5319
        %5383 = vmatpush.bf16.msra.mxu0 %v5318
        %5384 = vmatpush.bf16.msra.mxu0 %v5317
        %5385 = vmatpush.bf16.msra.mxu0 %v5316
        %5386 = vmatpush.bf16.msra.mxu0 %v5315
        %5387 = vmatmul.bf16.gmra.mxu0 %v5183
        %v5388 = vpop.f32.mrf.mxu0
        %v5389 = vadd.f32 %v5182, %v5388
        %v5390 = vpop.f32.mrf.mxu0
        %5391 = vdwg.mxu0
        %5392 = vmatpush.bf16.msra.mxu0 %v5330
        %5393 = vmatpush.bf16.msra.mxu0 %v5329
        %5394 = vmatpush.bf16.msra.mxu0 %v5328
        %5395 = vmatpush.bf16.msra.mxu0 %v5327
        %5396 = vmatpush.bf16.msra.mxu0 %v5326
        %5397 = vmatpush.bf16.msra.mxu0 %v5325
        %5398 = vmatpush.bf16.msra.mxu0 %v5324
        %5399 = vmatpush.bf16.msra.mxu0 %v5323
        %5400 = vmatmul.bf16.gmra.mxu0 %v5184
        %v5401 = vpop.f32.mrf.mxu0
        %v5402 = vadd.f32 %v5389, %v5401
        %v5403 = vpop.f32.mrf.mxu0
        %5404 = vdwg.mxu0
        %5405 = vmatpush.bf16.msra.mxu0 %v5338
        %5406 = vmatpush.bf16.msra.mxu0 %v5337
        %5407 = vmatpush.bf16.msra.mxu0 %v5336
        %5408 = vmatpush.bf16.msra.mxu0 %v5335
        %5409 = vmatpush.bf16.msra.mxu0 %v5334
        %5410 = vmatpush.bf16.msra.mxu0 %v5333
        %5411 = vmatpush.bf16.msra.mxu0 %v5332
        %5412 = vmatpush.bf16.msra.mxu0 %v5331
        %5413 = vmatmul.bf16.gmra.mxu0 %v5185
        %v5414 = vpop.f32.mrf.mxu0
        %v5415 = vadd.f32 %v5402, %v5414
        %v5416 = vpop.f32.mrf.mxu0
        %5417 = vdwg.mxu0
        %5418 = vmatpush.bf16.msra.mxu0 %v5346
        %5419 = vmatpush.bf16.msra.mxu0 %v5345
        %5420 = vmatpush.bf16.msra.mxu0 %v5344
        %5421 = vmatpush.bf16.msra.mxu0 %v5343
        %5422 = vmatpush.bf16.msra.mxu0 %v5342
        %5423 = vmatpush.bf16.msra.mxu0 %v5341
        %5424 = vmatpush.bf16.msra.mxu0 %v5340
        %5425 = vmatpush.bf16.msra.mxu0 %v5339
        %5426 = vmatmul.bf16.gmra.mxu0 %v5186
        %v5427 = vpop.f32.mrf.mxu0
        %v5428 = vadd.f32 %v5415, %v5427
        %v5429 = vpop.f32.mrf.mxu0
        %5430 = vdwg.mxu0
        %5431 = vst [vmem:[%s838] sm:$0x1] %v5428
        %s5432 = sand.u32 %s564, 1
        %s5433 = scalar_lea.sflag [#allocation4], %s5432
        %s5434 = sand.u32 %s564, 1
        %s5435 = scalar_lea.vmem [#allocation13], %s5434
        // Predicated region
        $region141: #{forward.1} parent=115 // pred_check
          %p5436 = pneg %p574
        $region142: #{forward.1} parent=115 // pred_check_branch
          %5438 = sbr.rel (%p5436) target = $region144
        $region143: #{forward.1} parent=115 // pred_region
          %5440 = vsyncadd %s5433, 0
          %s5441 = scalar_lea.hbm %s24, %s42
          %s5443 = sshll.u32 %s5435, 4
          %s5444 = int_to_ptr.vmem [resolvable:$true] %s5443
          %s5445 = sshll.u32 %s5441, 4
          %s5446 = int_to_ptr.hbm [resolvable:$true] %s5445
          %5448 = dma.vmem_to_hbm [thread:$0]  %s5444, 16, %s5446, %s5433
        $region144: #{forward.1} parent=115 // pred_fallthru
          _
      $region116: #{forward.1} parent=5 // pred_fallthru
        _
      %p5449 = scmp.le.s32.totalorder 2, %s37
      // Predicated region
      $region145: #{forward.1} parent=5 // pred_check
        %p5450 = pneg %p5449
      $region146: #{forward.1} parent=5 // pred_check_branch
        %5452 = sbr.rel (%p5450) target = $region148
      $region147: #{forward.1} parent=5 // pred_region
        %s5453 = ssub.s32 %s37, 2
        // Predicated region
        $region149: #{forward.1} parent=147 // pred_check
          %p5454 = pneg %p580
        $region150: #{forward.1} parent=147 // pred_check_branch
          %5456 = sbr.rel (%p5454) target = $region152
        $region151: #{forward.1} parent=147 // pred_region
          %s5457 = sand.u32 %s565, 1
          %s5458 = scalar_lea.sflag [#allocation4], %s5457
          %s5459 = sand.u32 %s565, 1
          %s5460 = scalar_lea.vmem [#allocation13], %s5459
          %5462 = dma.done %s5458, 16
        $region152: #{forward.1} parent=147 // pred_fallthru
          _
      $region148: #{forward.1} parent=5 // pred_fallthru
        _
    $region6: #{forward.1} parent=1 // loop_footer
      %s41 = sadd.s32 1, %s37
    $region7: #{forward.1} parent=1 // loop_footer_branch
      %36 = sbr.rel target = $region3
    $region8: #{forward.1} parent=1 // loop_exit
      _
    %5463 = vsyncpa [#allocation3], 1
    %s5464 = scalar_lea.sflag [#allocation3], 1
    %5465 = vsyncpa %s5464, 1
    %5466 = vsyncpa [#allocation6], 1
    %5467 = vsyncpa [#allocation9], 1
    %5468 = vsyncpa [#allocation12], 1
    %5469 = vsyncpa [#allocation4], 1
    %s5470 = scalar_lea.sflag [#allocation4], 1
    %5471 = vsyncpa %s5470, 1

</llo_original>
